<compile_context>
chip_gen: v7x
topology: tpu7x:2x2x1
jax: 0.10.0
libtpu: 0.0.40
codegen_flags: <defaults>
</compile_context>

<pallas_src>
import functools
import math

import jax
import jax.numpy as jnp
import numpy as np
from jax import lax
from jax.experimental import pallas as pl
from jax.experimental.pallas import tpu as pltpu


def _round_up(n, m):
    return ((n + m - 1) // m) * m


# ----------------------------- Pallas kernel --------------------------------

def bigru_kernel(x_ref,                               # [T*Bp, I]
                 wih_f_ref, whh_f_ref, bgi_f_ref, bhn_f_ref,
                 wih_b_ref, whh_b_ref, bgi_b_ref, bhn_b_ref,
                 wlf_ref, wlb_ref, blin_ref,
                 out_ref,                             # [T*Bp, O]
                 gi_f_ref, gi_b_ref,                  # scratch [T*Bp, 3Hp]
                 h_f_ref, h_b_ref,                    # scratch [T*Bp, Hp]
                 *, T, B, unroll):
    Hp = whh_f_ref.shape[0]
    cdt = whh_f_ref.dtype                             # MXU compute dtype (f32/bf16)

    # --- Phase 1: hoisted input-side gate matmuls (off the serial path) -----
    # One large, MXU-friendly matmul per direction; biases (b_ih + folded
    # b_hh_{r,z}) are already baked into bgi_*.
    x = x_ref[...]
    gi_f_ref[...] = (jnp.dot(x, wih_f_ref[...],
                             preferred_element_type=jnp.float32) + bgi_f_ref[...])
    gi_b_ref[...] = (jnp.dot(x, wih_b_ref[...],
                             preferred_element_type=jnp.float32) + bgi_b_ref[...])

    whh_f = whh_f_ref[...]
    whh_b = whh_b_ref[...]
    bhn_f = bhn_f_ref[...]
    bhn_b = bhn_b_ref[...]

    def cell(gi, h, whh, bhn):
        # PyTorch GRU cell (gate order r, z, n), gi already contains
        # W_ih x + b_ih (+ b_hh for r,z).
        gh = jnp.dot(h.astype(cdt), whh, preferred_element_type=jnp.float32)
        r = jax.nn.sigmoid(gi[:, 0:Hp] + gh[:, 0:Hp])
        z = jax.nn.sigmoid(gi[:, Hp:2 * Hp] + gh[:, Hp:2 * Hp])
        n = jnp.tanh(gi[:, 2 * Hp:3 * Hp] + r * (gh[:, 2 * Hp:3 * Hp] + bhn))
        return (1.0 - z) * n + z * h

    h0 = jnp.zeros((B, Hp), jnp.float32)

    # --- Phase 2: interleaved forward/backward recurrence --------------------
    def body(i, carry):
        hf, hb = carry
        tf0 = pl.multiple_of(i * B, 8)                # B is a multiple of 8
        tb0 = pl.multiple_of((T - 1 - i) * B, 8)
        hf_new = cell(gi_f_ref[pl.ds(tf0, B), :], hf, whh_f, bhn_f)
        hb_new = cell(gi_b_ref[pl.ds(tb0, B), :], hb, whh_b, bhn_b)
        h_f_ref[pl.ds(tf0, B), :] = hf_new
        h_b_ref[pl.ds(tb0, B), :] = hb_new
        return hf_new, hb_new

    lax.fori_loop(0, T, body, (h0, h0), unroll=unroll)

    # --- Phase 3: fused output projection, one big matmul --------------------
    out = (jnp.dot(h_f_ref[...].astype(cdt), wlf_ref[...],
                   preferred_element_type=jnp.float32)
           + jnp.dot(h_b_ref[...].astype(cdt), wlb_ref[...],
                     preferred_element_type=jnp.float32)
           + blin_ref[...])
    out_ref[...] = out.astype(out_ref.dtype)


# ----------------------------- parameter packing ----------------------------

def _pack_direction(wih, whh, bih, bhh, Hp, compute_dtype):
    # PyTorch layouts: wih [3H, I], whh [3H, H], biases [3H]; gate order r,z,n.
    H = whh.shape[1]
    pad_c = Hp - H

    def pad_gate_cols(w):            # [rows, 3H] -> [rows, 3Hp], zero-padded gates
        blocks = [w[:, g * H:(g + 1) * H] for g in range(3)]
        return jnp.concatenate(
            [jnp.pad(b, ((0, 0), (0, pad_c))) for b in blocks], axis=1)

    def pad_gate_vec(b):             # [3H] -> [3Hp]
        blocks = [b[g * H:(g + 1) * H] for g in range(3)]
        return jnp.concatenate([jnp.pad(v, (0, pad_c)) for v in blocks])

    wih_p = pad_gate_cols(wih.T.astype(jnp.float32))            # [I, 3Hp]
    whh_p = pad_gate_cols(whh.T.astype(jnp.float32))            # [H, 3Hp]
    whh_p = jnp.pad(whh_p, ((0, pad_c), (0, 0)))                # [Hp, 3Hp]
    bih_p = pad_gate_vec(bih.astype(jnp.float32))
    bhh_p = pad_gate_vec(bhh.astype(jnp.float32))

    # Fold hidden-side r/z biases into the hoisted input-gate bias; the n-gate
    # hidden bias must stay on the gh side (it is multiplied by r).
    bgi = bih_p + jnp.concatenate(
        [bhh_p[:Hp], bhh_p[Hp:2 * Hp], jnp.zeros((Hp,), jnp.float32)])
    bhn = bhh_p[2 * Hp:]
    return (wih_p.astype(compute_dtype), whh_p.astype(compute_dtype),
            bgi.reshape(1, -1), bhn.reshape(1, -1))


def _pack_linear(wlin, blin, H, Hp, compute_dtype):
    # wlin: [O, 2H] -> forward/backward halves padded to [Hp, O].
    wl = wlin.T.astype(jnp.float32)                   # [2H, O]
    wlf = jnp.pad(wl[:H], ((0, Hp - H), (0, 0)))
    wlb = jnp.pad(wl[H:], ((0, Hp - H), (0, 0)))
    return (wlf.astype(compute_dtype), wlb.astype(compute_dtype),
            blin.astype(jnp.float32).reshape(1, -1))


# ----------------------------- public wrapper --------------------------------

def bidirectional_gru_pallas(x, params, *, compute_dtype=jnp.float32):
    """x: [B, T, input_size]  ->  [B, T, output_size]  (matches the nn.Module)."""
    B, T, I = x.shape
    H = params["whh_f"].shape[1]
    O = params["wlin"].shape[0]
    Hp = _round_up(H, 128)          # lane-aligned gate blocks
    Bp = _round_up(B, 8)            # sublane-aligned batch rows

    wih_f, whh_f, bgi_f, bhn_f = _pack_direction(
        params["wih_f"], params["whh_f"], params["bih_f"], params["bhh_f"],
        Hp, compute_dtype)
    wih_b, whh_b, bgi_b, bhn_b = _pack_direction(
        params["wih_b"], params["whh_b"], params["bih_b"], params["bhh_b"],
        Hp, compute_dtype)
    wlf, wlb, bl = _pack_linear(params["wlin"], params["blin"], H, Hp, compute_dtype)

    # Time-major, 2-D input slab: rows ordered (t0,b0..bBp-1),(t1,...),...
    x_tm = jnp.transpose(x.astype(jnp.float32), (1, 0, 2))        # [T, B, I]
    x_tm = jnp.pad(x_tm, ((0, 0), (0, Bp - B), (0, 0)))           # [T, Bp, I]
    x2d = x_tm.reshape(T * Bp, I).astype(compute_dtype)           # [T*Bp, I]

    # Everything (inputs, weights, scratch, output) lives in VMEM for this kernel.
    isz = jnp.dtype(compute_dtype).itemsize
    vmem_est = (T * Bp * (I * isz + (2 * 3 * Hp + 2 * Hp) * 4 + O * 4)
                + (2 * (I + Hp) * 3 * Hp + 2 * Hp * O) * isz)
    assert vmem_est < 48 * 1024 * 1024, (
        "sequence too long for the fully-VMEM-resident kernel; needs T-tiling")

    args = (x2d,
            wih_f, whh_f, bgi_f, bhn_f,
            wih_b, whh_b, bgi_b, bhn_b,
            wlf, wlb, bl)

    unroll = True if T <= 16 else 4

    out2d = pl.pallas_call(
        functools.partial(bigru_kernel, T=T, B=Bp, unroll=unroll),
        out_shape=jax.ShapeDtypeStruct((T * Bp, O), jnp.float32),
        in_specs=[pl.BlockSpec(memory_space=pltpu.MemorySpace.VMEM)] * len(args),
        out_specs=pl.BlockSpec(memory_space=pltpu.MemorySpace.VMEM),
        scratch_shapes=[
            pltpu.VMEM((T * Bp, 3 * Hp), jnp.float32),   # gi_f
            pltpu.VMEM((T * Bp, 3 * Hp), jnp.float32),   # gi_b
            pltpu.VMEM((T * Bp, Hp), jnp.float32),       # h_f
            pltpu.VMEM((T * Bp, Hp), jnp.float32),       # h_b
        ],
    )(*args)

    out = out2d.reshape(T, Bp, O)[:, :B, :]            # drop padded batch rows
    return jnp.transpose(out, (1, 0, 2))               # [B, T, O]


# ----------------------------- pure-JAX reference ----------------------------

def _gru_direction_ref(x, wih, whh, bih, bhh, reverse):
    B = x.shape[0]
    H = whh.shape[1]

    def cell(h, x_t):
        gi = x_t @ wih.T + bih
        gh = h @ whh.T + bhh
        r = jax.nn.sigmoid(gi[:, :H] + gh[:, :H])
        z = jax.nn.sigmoid(gi[:, H:2 * H] + gh[:, H:2 * H])
        n = jnp.tanh(gi[:, 2 * H:] + r * gh[:, 2 * H:])
        h_new = (1.0 - z) * n + z * h
        return h_new, h_new

    xs = jnp.transpose(x, (1, 0, 2))
    if reverse:
        xs = xs[::-1]
    _, hs = lax.scan(cell, jnp.zeros((B, H), jnp.float32), xs)
    if reverse:
        hs = hs[::-1]
    return jnp.transpose(hs, (1, 0, 2))


def bidirectional_gru_ref(x, params):
    rec_f = _gru_direction_ref(x, params["wih_f"], params["whh_f"],
                               params["bih_f"], params["bhh_f"], reverse=False)
    rec_b = _gru_direction_ref(x, params["wih_b"], params["whh_b"],
                               params["bih_b"], params["bhh_b"], reverse=True)
    rec = jnp.concatenate([rec_f, rec_b], axis=-1)
    return rec @ params["wlin"].T + params["blin"]


# ----------------------------- param init ------------------------------------

def init_params(key, input_size, hidden_size, output_size):
    k = 1.0 / math.sqrt(hidden_size)
    keys = jax.random.split(key, 10)

    def u(kk, shape):
        return jax.random.uniform(kk, shape, jnp.float32, minval=-k, maxval=k)

    return dict(
        wih_f=u(keys[0], (3 * hidden_size, input_size)),
        whh_f=u(keys[1], (3 * hidden_size, hidden_size)),
        bih_f=u(keys[2], (3 * hidden_size,)),
        bhh_f=u(keys[3], (3 * hidden_size,)),
        wih_b=u(keys[4], (3 * hidden_size, input_size)),
        whh_b=u(keys[5], (3 * hidden_size, hidden_size)),
        bih_b=u(keys[6], (3 * hidden_size,)),
        bhh_b=u(keys[7], (3 * hidden_size,)),
        wlin=u(keys[8], (output_size, 2 * hidden_size)),
        blin=u(keys[9], (output_size,)),
    )


if __name__ == "__main__":
    B, T, INPUT, HIDDEN, OUTPUT = 2, 8, 16, 32, 16

    key = jax.random.PRNGKey(0)
    kx, kp = jax.random.split(key)
    x = jax.random.normal(kx, (B, T, INPUT), jnp.float32)
    params = init_params(kp, INPUT, HIDDEN, OUTPUT)

    ref = bidirectional_gru_ref(x, params)

    # f32 path: must match the PyTorch-semantics reference tightly.
    out = jax.block_until_ready(bidirectional_gru_pallas(x, params))
    assert out.shape == (B, T, OUTPUT)
    np.testing.assert_allclose(np.asarray(out), np.asarray(ref),
                               rtol=1e-3, atol=1e-3)

    # bf16 weights/activations on the MXU (f32 carry + f32 accumulation).
    out_bf16 = jax.block_until_ready(
        bidirectional_gru_pallas(x, params, compute_dtype=jnp.bfloat16))
    np.testing.assert_allclose(np.asarray(out_bf16), np.asarray(ref),
                               rtol=5e-2, atol=5e-2)

    print("KERNEL_OK")
</pallas_src>

<mosaic_0001>
module attributes {stable_mosaic.version = 11 : i64} {
  func.func @bigru_kernel(%arg0: memref<64x16xf32, #tpu.memory_space<vmem>>, %arg1: memref<16x384xf32, #tpu.memory_space<vmem>>, %arg2: memref<128x384xf32, #tpu.memory_space<vmem>>, %arg3: memref<1x384xf32, #tpu.memory_space<vmem>>, %arg4: memref<1x128xf32, #tpu.memory_space<vmem>>, %arg5: memref<16x384xf32, #tpu.memory_space<vmem>>, %arg6: memref<128x384xf32, #tpu.memory_space<vmem>>, %arg7: memref<1x384xf32, #tpu.memory_space<vmem>>, %arg8: memref<1x128xf32, #tpu.memory_space<vmem>>, %arg9: memref<128x16xf32, #tpu.memory_space<vmem>>, %arg10: memref<128x16xf32, #tpu.memory_space<vmem>>, %arg11: memref<1x16xf32, #tpu.memory_space<vmem>>, %arg12: memref<64x16xf32, #tpu.memory_space<vmem>>, %arg13: memref<64x384xf32, #tpu.memory_space<vmem>>, %arg14: memref<64x384xf32, #tpu.memory_space<vmem>>, %arg15: memref<64x128xf32, #tpu.memory_space<vmem>>, %arg16: memref<64x128xf32, #tpu.memory_space<vmem>>) attributes {dimension_semantics = [], scalar_prefetch = 0 : i64, scratch_operands = 4 : i64, tpu.core_type = #tpu.core_type<tc>} {
    %c0 = arith.constant 0 : index
    %c0_0 = arith.constant 0 : index
    %0 = vector.load %arg0[%c0, %c0_0] : memref<64x16xf32, #tpu.memory_space<vmem>>, vector<64x16xf32>
    %c0_1 = arith.constant 0 : index
    %c0_2 = arith.constant 0 : index
    %1 = vector.load %arg1[%c0_1, %c0_2] : memref<16x384xf32, #tpu.memory_space<vmem>>, vector<16x384xf32>
    %cst = arith.constant dense<0.000000e+00> : vector<64x384xf32>
    %2 = tpu.matmul %0, %1, %cst {dimension_numbers = #tpu.dot_dimension_numbers<[1], [0], [0], [1], [0, 0, 1, 1], [], []>} : vector<64x16xf32>, vector<16x384xf32>, vector<64x384xf32> -> vector<64x384xf32>
    %c0_3 = arith.constant 0 : index
    %c0_4 = arith.constant 0 : index
    %3 = vector.load %arg3[%c0_3, %c0_4] : memref<1x384xf32, #tpu.memory_space<vmem>>, vector<1x384xf32>
    %4 = vector.broadcast %3 : vector<1x384xf32> to vector<64x384xf32>
    %5 = arith.addf %2, %4 : vector<64x384xf32>
    %c0_5 = arith.constant 0 : index
    %c0_6 = arith.constant 0 : index
    %6 = vector.load %arg13[%c0_5, %c0_6] : memref<64x384xf32, #tpu.memory_space<vmem>>, vector<64x384xf32>
    tpu.vector_store %arg13[%c0_5, %c0_6], %5 {strides = array<i32>} : memref<64x384xf32, #tpu.memory_space<vmem>>, vector<64x384xf32>,
    %c0_7 = arith.constant 0 : index
    %c0_8 = arith.constant 0 : index
    %7 = vector.load %arg5[%c0_7, %c0_8] : memref<16x384xf32, #tpu.memory_space<vmem>>, vector<16x384xf32>
    %cst_9 = arith.constant dense<0.000000e+00> : vector<64x384xf32>
    %8 = tpu.matmul %0, %7, %cst_9 {dimension_numbers = #tpu.dot_dimension_numbers<[1], [0], [0], [1], [0, 0, 1, 1], [], []>} : vector<64x16xf32>, vector<16x384xf32>, vector<64x384xf32> -> vector<64x384xf32>
    %c0_10 = arith.constant 0 : index
    %c0_11 = arith.constant 0 : index
    %9 = vector.load %arg7[%c0_10, %c0_11] : memref<1x384xf32, #tpu.memory_space<vmem>>, vector<1x384xf32>
    %10 = vector.broadcast %9 : vector<1x384xf32> to vector<64x384xf32>
    %11 = arith.addf %8, %10 : vector<64x384xf32>
    %c0_12 = arith.constant 0 : index
    %c0_13 = arith.constant 0 : index
    %12 = vector.load %arg14[%c0_12, %c0_13] : memref<64x384xf32, #tpu.memory_space<vmem>>, vector<64x384xf32>
    tpu.vector_store %arg14[%c0_12, %c0_13], %11 {strides = array<i32>} : memref<64x384xf32, #tpu.memory_space<vmem>>, vector<64x384xf32>,
    %c0_14 = arith.constant 0 : index
    %c0_15 = arith.constant 0 : index
    %13 = vector.load %arg2[%c0_14, %c0_15] : memref<128x384xf32, #tpu.memory_space<vmem>>, vector<128x384xf32>
    %c0_16 = arith.constant 0 : index
    %c0_17 = arith.constant 0 : index
    %14 = vector.load %arg6[%c0_16, %c0_17] : memref<128x384xf32, #tpu.memory_space<vmem>>, vector<128x384xf32>
    %c0_18 = arith.constant 0 : index
    %c0_19 = arith.constant 0 : index
    %15 = vector.load %arg4[%c0_18, %c0_19] : memref<1x128xf32, #tpu.memory_space<vmem>>, vector<1x128xf32>
    %c0_20 = arith.constant 0 : index
    %c0_21 = arith.constant 0 : index
    %16 = vector.load %arg8[%c0_20, %c0_21] : memref<1x128xf32, #tpu.memory_space<vmem>>, vector<1x128xf32>
    %cst_22 = arith.constant 0.000000e+00 : f32
    %17 = vector.broadcast %cst_22 : f32 to vector<8x128xf32>
    %c0_i32 = arith.constant 0 : i32
    %c8_i32 = arith.constant 8 : i32
    %18 = arith.muli %c0_i32, %c8_i32 : i32
    %19 = tpu.assume_multiple %18, 8 : i32
    %c7_i32 = arith.constant 7 : i32
    %20 = arith.subi %c7_i32, %c0_i32 : i32
    %c8_i32_23 = arith.constant 8 : i32
    %21 = arith.muli %20, %c8_i32_23 : i32
    %22 = tpu.assume_multiple %21, 8 : i32
    %23 = arith.index_cast %19 : i32 to index
    %c0_24 = arith.constant 0 : index
    %24 = vector.load %arg13[%23, %c0_24] : memref<64x384xf32, #tpu.memory_space<vmem>>, vector<8x384xf32>
    %cst_25 = arith.constant dense<0.000000e+00> : vector<8x384xf32>
    %25 = tpu.matmul %17, %13, %cst_25 {dimension_numbers = #tpu.dot_dimension_numbers<[1], [0], [0], [1], [0, 0, 1, 1], [], []>} : vector<8x128xf32>, vector<128x384xf32>, vector<8x384xf32> -> vector<8x384xf32>
    %26 = vector.extract_strided_slice %24 {offsets = [0, 0], sizes = [8, 128], strides = [1, 1]} : vector<8x384xf32> to vector<8x128xf32>
    %27 = vector.extract_strided_slice %25 {offsets = [0, 0], sizes = [8, 128], strides = [1, 1]} : vector<8x384xf32> to vector<8x128xf32>
    %28 = arith.addf %26, %27 : vector<8x128xf32>
    %29 = arith.negf %28 : vector<8x128xf32>
    %30 = math.exp %29 : vector<8x128xf32>
    %cst_26 = arith.constant 1.000000e+00 : f32
    %31 = vector.broadcast %cst_26 : f32 to vector<8x128xf32>
    %32 = arith.addf %31, %30 : vector<8x128xf32>
    %33 = arith.divf %31, %32 : vector<8x128xf32>
    %34 = vector.extract_strided_slice %24 {offsets = [0, 128], sizes = [8, 128], strides = [1, 1]} : vector<8x384xf32> to vector<8x128xf32>
    %35 = vector.extract_strided_slice %25 {offsets = [0, 128], sizes = [8, 128], strides = [1, 1]} : vector<8x384xf32> to vector<8x128xf32>
    %36 = arith.addf %34, %35 : vector<8x128xf32>
    %37 = arith.negf %36 : vector<8x128xf32>
    %38 = math.exp %37 : vector<8x128xf32>
    %cst_27 = arith.constant 1.000000e+00 : f32
    %39 = vector.broadcast %cst_27 : f32 to vector<8x128xf32>
    %40 = arith.addf %39, %38 : vector<8x128xf32>
    %41 = arith.divf %39, %40 : vector<8x128xf32>
    %42 = vector.extract_strided_slice %24 {offsets = [0, 256], sizes = [8, 128], strides = [1, 1]} : vector<8x384xf32> to vector<8x128xf32>
    %43 = vector.extract_strided_slice %25 {offsets = [0, 256], sizes = [8, 128], strides = [1, 1]} : vector<8x384xf32> to vector<8x128xf32>
    %44 = vector.broadcast %15 : vector<1x128xf32> to vector<8x128xf32>
    %45 = arith.addf %43, %44 : vector<8x128xf32>
    %46 = arith.mulf %33, %45 : vector<8x128xf32>
    %47 = arith.addf %42, %46 : vector<8x128xf32>
    %48 = math.tanh %47 : vector<8x128xf32>
    %cst_28 = arith.constant 1.000000e+00 : f32
    %49 = vector.broadcast %cst_28 : f32 to vector<8x128xf32>
    %50 = arith.subf %49, %41 : vector<8x128xf32>
    %51 = arith.mulf %50, %48 : vector<8x128xf32>
    %52 = arith.mulf %41, %17 : vector<8x128xf32>
    %53 = arith.addf %51, %52 : vector<8x128xf32>
    %54 = arith.index_cast %22 : i32 to index
    %c0_29 = arith.constant 0 : index
    %55 = vector.load %arg14[%54, %c0_29] : memref<64x384xf32, #tpu.memory_space<vmem>>, vector<8x384xf32>
    %cst_30 = arith.constant dense<0.000000e+00> : vector<8x384xf32>
    %56 = tpu.matmul %17, %14, %cst_30 {dimension_numbers = #tpu.dot_dimension_numbers<[1], [0], [0], [1], [0, 0, 1, 1], [], []>} : vector<8x128xf32>, vector<128x384xf32>, vector<8x384xf32> -> vector<8x384xf32>
    %57 = vector.extract_strided_slice %55 {offsets = [0, 0], sizes = [8, 128], strides = [1, 1]} : vector<8x384xf32> to vector<8x128xf32>
    %58 = vector.extract_strided_slice %56 {offsets = [0, 0], sizes = [8, 128], strides = [1, 1]} : vector<8x384xf32> to vector<8x128xf32>
    %59 = arith.addf %57, %58 : vector<8x128xf32>
    %60 = arith.negf %59 : vector<8x128xf32>
    %61 = math.exp %60 : vector<8x128xf32>
    %cst_31 = arith.constant 1.000000e+00 : f32
    %62 = vector.broadcast %cst_31 : f32 to vector<8x128xf32>
    %63 = arith.addf %62, %61 : vector<8x128xf32>
    %64 = arith.divf %62, %63 : vector<8x128xf32>
    %65 = vector.extract_strided_slice %55 {offsets = [0, 128], sizes = [8, 128], strides = [1, 1]} : vector<8x384xf32> to vector<8x128xf32>
    %66 = vector.extract_strided_slice %56 {offsets = [0, 128], sizes = [8, 128], strides = [1, 1]} : vector<8x384xf32> to vector<8x128xf32>
    %67 = arith.addf %65, %66 : vector<8x128xf32>
    %68 = arith.negf %67 : vector<8x128xf32>
    %69 = math.exp %68 : vector<8x128xf32>
    %cst_32 = arith.constant 1.000000e+00 : f32
    %70 = vector.broadcast %cst_32 : f32 to vector<8x128xf32>
    %71 = arith.addf %70, %69 : vector<8x128xf32>
    %72 = arith.divf %70, %71 : vector<8x128xf32>
    %73 = vector.extract_strided_slice %55 {offsets = [0, 256], sizes = [8, 128], strides = [1, 1]} : vector<8x384xf32> to vector<8x128xf32>
    %74 = vector.extract_strided_slice %56 {offsets = [0, 256], sizes = [8, 128], strides = [1, 1]} : vector<8x384xf32> to vector<8x128xf32>
    %75 = vector.broadcast %16 : vector<1x128xf32> to vector<8x128xf32>
    %76 = arith.addf %74, %75 : vector<8x128xf32>
    %77 = arith.mulf %64, %76 : vector<8x128xf32>
    %78 = arith.addf %73, %77 : vector<8x128xf32>
    %79 = math.tanh %78 : vector<8x128xf32>
    %cst_33 = arith.constant 1.000000e+00 : f32
    %80 = vector.broadcast %cst_33 : f32 to vector<8x128xf32>
    %81 = arith.subf %80, %72 : vector<8x128xf32>
    %82 = arith.mulf %81, %79 : vector<8x128xf32>
    %83 = arith.mulf %72, %17 : vector<8x128xf32>
    %84 = arith.addf %82, %83 : vector<8x128xf32>
    %85 = arith.index_cast %19 : i32 to index
    %c0_34 = arith.constant 0 : index
    %86 = vector.load %arg15[%85, %c0_34] : memref<64x128xf32, #tpu.memory_space<vmem>>, vector<8x128xf32>
    tpu.vector_store %arg15[%85, %c0_34], %53 {strides = array<i32>} : memref<64x128xf32, #tpu.memory_space<vmem>>, vector<8x128xf32>,
    %87 = arith.index_cast %22 : i32 to index
    %c0_35 = arith.constant 0 : index
    %88 = vector.load %arg16[%87, %c0_35] : memref<64x128xf32, #tpu.memory_space<vmem>>, vector<8x128xf32>
    tpu.vector_store %arg16[%87, %c0_35], %84 {strides = array<i32>} : memref<64x128xf32, #tpu.memory_space<vmem>>, vector<8x128xf32>,
    %c1_i32 = arith.constant 1 : i32
    %c8_i32_36 = arith.constant 8 : i32
    %89 = arith.muli %c1_i32, %c8_i32_36 : i32
    %90 = tpu.assume_multiple %89, 8 : i32
    %c7_i32_37 = arith.constant 7 : i32
    %91 = arith.subi %c7_i32_37, %c1_i32 : i32
    %c8_i32_38 = arith.constant 8 : i32
    %92 = arith.muli %91, %c8_i32_38 : i32
    %93 = tpu.assume_multiple %92, 8 : i32
    %94 = arith.index_cast %90 : i32 to index
    %c0_39 = arith.constant 0 : index
    %95 = vector.load %arg13[%94, %c0_39] : memref<64x384xf32, #tpu.memory_space<vmem>>, vector<8x384xf32>
    %cst_40 = arith.constant dense<0.000000e+00> : vector<8x384xf32>
    %96 = tpu.matmul %53, %13, %cst_40 {dimension_numbers = #tpu.dot_dimension_numbers<[1], [0], [0], [1], [0, 0, 1, 1], [], []>} : vector<8x128xf32>, vector<128x384xf32>, vector<8x384xf32> -> vector<8x384xf32>
    %97 = vector.extract_strided_slice %95 {offsets = [0, 0], sizes = [8, 128], strides = [1, 1]} : vector<8x384xf32> to vector<8x128xf32>
    %98 = vector.extract_strided_slice %96 {offsets = [0, 0], sizes = [8, 128], strides = [1, 1]} : vector<8x384xf32> to vector<8x128xf32>
    %99 = arith.addf %97, %98 : vector<8x128xf32>
    %100 = arith.negf %99 : vector<8x128xf32>
    %101 = math.exp %100 : vector<8x128xf32>
    %cst_41 = arith.constant 1.000000e+00 : f32
    %102 = vector.broadcast %cst_41 : f32 to vector<8x128xf32>
    %103 = arith.addf %102, %101 : vector<8x128xf32>
    %104 = arith.divf %102, %103 : vector<8x128xf32>
    %105 = vector.extract_strided_slice %95 {offsets = [0, 128], sizes = [8, 128], strides = [1, 1]} : vector<8x384xf32> to vector<8x128xf32>
    %106 = vector.extract_strided_slice %96 {offsets = [0, 128], sizes = [8, 128], strides = [1, 1]} : vector<8x384xf32> to vector<8x128xf32>
    %107 = arith.addf %105, %106 : vector<8x128xf32>
    %108 = arith.negf %107 : vector<8x128xf32>
    %109 = math.exp %108 : vector<8x128xf32>
    %cst_42 = arith.constant 1.000000e+00 : f32
    %110 = vector.broadcast %cst_42 : f32 to vector<8x128xf32>
    %111 = arith.addf %110, %109 : vector<8x128xf32>
    %112 = arith.divf %110, %111 : vector<8x128xf32>
    %113 = vector.extract_strided_slice %95 {offsets = [0, 256], sizes = [8, 128], strides = [1, 1]} : vector<8x384xf32> to vector<8x128xf32>
    %114 = vector.extract_strided_slice %96 {offsets = [0, 256], sizes = [8, 128], strides = [1, 1]} : vector<8x384xf32> to vector<8x128xf32>
    %115 = vector.broadcast %15 : vector<1x128xf32> to vector<8x128xf32>
    %116 = arith.addf %114, %115 : vector<8x128xf32>
    %117 = arith.mulf %104, %116 : vector<8x128xf32>
    %118 = arith.addf %113, %117 : vector<8x128xf32>
    %119 = math.tanh %118 : vector<8x128xf32>
    %cst_43 = arith.constant 1.000000e+00 : f32
    %120 = vector.broadcast %cst_43 : f32 to vector<8x128xf32>
    %121 = arith.subf %120, %112 : vector<8x128xf32>
    %122 = arith.mulf %121, %119 : vector<8x128xf32>
    %123 = arith.mulf %112, %53 : vector<8x128xf32>
    %124 = arith.addf %122, %123 : vector<8x128xf32>
    %125 = arith.index_cast %93 : i32 to index
    %c0_44 = arith.constant 0 : index
    %126 = vector.load %arg14[%125, %c0_44] : memref<64x384xf32, #tpu.memory_space<vmem>>, vector<8x384xf32>
    %cst_45 = arith.constant dense<0.000000e+00> : vector<8x384xf32>
    %127 = tpu.matmul %84, %14, %cst_45 {dimension_numbers = #tpu.dot_dimension_numbers<[1], [0], [0], [1], [0, 0, 1, 1], [], []>} : vector<8x128xf32>, vector<128x384xf32>, vector<8x384xf32> -> vector<8x384xf32>
    %128 = vector.extract_strided_slice %126 {offsets = [0, 0], sizes = [8, 128], strides = [1, 1]} : vector<8x384xf32> to vector<8x128xf32>
    %129 = vector.extract_strided_slice %127 {offsets = [0, 0], sizes = [8, 128], strides = [1, 1]} : vector<8x384xf32> to vector<8x128xf32>
    %130 = arith.addf %128, %129 : vector<8x128xf32>
    %131 = arith.negf %130 : vector<8x128xf32>
    %132 = math.exp %131 : vector<8x128xf32>
    %cst_46 = arith.constant 1.000000e+00 : f32
    %133 = vector.broadcast %cst_46 : f32 to vector<8x128xf32>
    %134 = arith.addf %133, %132 : vector<8x128xf32>
    %135 = arith.divf %133, %134 : vector<8x128xf32>
    %136 = vector.extract_strided_slice %126 {offsets = [0, 128], sizes = [8, 128], strides = [1, 1]} : vector<8x384xf32> to vector<8x128xf32>
    %137 = vector.extract_strided_slice %127 {offsets = [0, 128], sizes = [8, 128], strides = [1, 1]} : vector<8x384xf32> to vector<8x128xf32>
    %138 = arith.addf %136, %137 : vector<8x128xf32>
    %139 = arith.negf %138 : vector<8x128xf32>
    %140 = math.exp %139 : vector<8x128xf32>
    %cst_47 = arith.constant 1.000000e+00 : f32
    %141 = vector.broadcast %cst_47 : f32 to vector<8x128xf32>
    %142 = arith.addf %141, %140 : vector<8x128xf32>
    %143 = arith.divf %141, %142 : vector<8x128xf32>
    %144 = vector.extract_strided_slice %126 {offsets = [0, 256], sizes = [8, 128], strides = [1, 1]} : vector<8x384xf32> to vector<8x128xf32>
    %145 = vector.extract_strided_slice %127 {offsets = [0, 256], sizes = [8, 128], strides = [1, 1]} : vector<8x384xf32> to vector<8x128xf32>
    %146 = vector.broadcast %16 : vector<1x128xf32> to vector<8x128xf32>
    %147 = arith.addf %145, %146 : vector<8x128xf32>
    %148 = arith.mulf %135, %147 : vector<8x128xf32>
    %149 = arith.addf %144, %148 : vector<8x128xf32>
    %150 = math.tanh %149 : vector<8x128xf32>
    %cst_48 = arith.constant 1.000000e+00 : f32
    %151 = vector.broadcast %cst_48 : f32 to vector<8x128xf32>
    %152 = arith.subf %151, %143 : vector<8x128xf32>
    %153 = arith.mulf %152, %150 : vector<8x128xf32>
    %154 = arith.mulf %143, %84 : vector<8x128xf32>
    %155 = arith.addf %153, %154 : vector<8x128xf32>
    %156 = arith.index_cast %90 : i32 to index
    %c0_49 = arith.constant 0 : index
    %157 = vector.load %arg15[%156, %c0_49] : memref<64x128xf32, #tpu.memory_space<vmem>>, vector<8x128xf32>
    tpu.vector_store %arg15[%156, %c0_49], %124 {strides = array<i32>} : memref<64x128xf32, #tpu.memory_space<vmem>>, vector<8x128xf32>,
    %158 = arith.index_cast %93 : i32 to index
    %c0_50 = arith.constant 0 : index
    %159 = vector.load %arg16[%158, %c0_50] : memref<64x128xf32, #tpu.memory_space<vmem>>, vector<8x128xf32>
    tpu.vector_store %arg16[%158, %c0_50], %155 {strides = array<i32>} : memref<64x128xf32, #tpu.memory_space<vmem>>, vector<8x128xf32>,
    %c2_i32 = arith.constant 2 : i32
    %c8_i32_51 = arith.constant 8 : i32
    %160 = arith.muli %c2_i32, %c8_i32_51 : i32
    %161 = tpu.assume_multiple %160, 8 : i32
    %c7_i32_52 = arith.constant 7 : i32
    %162 = arith.subi %c7_i32_52, %c2_i32 : i32
    %c8_i32_53 = arith.constant 8 : i32
    %163 = arith.muli %162, %c8_i32_53 : i32
    %164 = tpu.assume_multiple %163, 8 : i32
    %165 = arith.index_cast %161 : i32 to index
    %c0_54 = arith.constant 0 : index
    %166 = vector.load %arg13[%165, %c0_54] : memref<64x384xf32, #tpu.memory_space<vmem>>, vector<8x384xf32>
    %cst_55 = arith.constant dense<0.000000e+00> : vector<8x384xf32>
    %167 = tpu.matmul %124, %13, %cst_55 {dimension_numbers = #tpu.dot_dimension_numbers<[1], [0], [0], [1], [0, 0, 1, 1], [], []>} : vector<8x128xf32>, vector<128x384xf32>, vector<8x384xf32> -> vector<8x384xf32>
    %168 = vector.extract_strided_slice %166 {offsets = [0, 0], sizes = [8, 128], strides = [1, 1]} : vector<8x384xf32> to vector<8x128xf32>
    %169 = vector.extract_strided_slice %167 {offsets = [0, 0], sizes = [8, 128], strides = [1, 1]} : vector<8x384xf32> to vector<8x128xf32>
    %170 = arith.addf %168, %169 : vector<8x128xf32>
    %171 = arith.negf %170 : vector<8x128xf32>
    %172 = math.exp %171 : vector<8x128xf32>
    %cst_56 = arith.constant 1.000000e+00 : f32
    %173 = vector.broadcast %cst_56 : f32 to vector<8x128xf32>
    %174 = arith.addf %173, %172 : vector<8x128xf32>
    %175 = arith.divf %173, %174 : vector<8x128xf32>
    %176 = vector.extract_strided_slice %166 {offsets = [0, 128], sizes = [8, 128], strides = [1, 1]} : vector<8x384xf32> to vector<8x128xf32>
    %177 = vector.extract_strided_slice %167 {offsets = [0, 128], sizes = [8, 128], strides = [1, 1]} : vector<8x384xf32> to vector<8x128xf32>
    %178 = arith.addf %176, %177 : vector<8x128xf32>
    %179 = arith.negf %178 : vector<8x128xf32>
    %180 = math.exp %179 : vector<8x128xf32>
    %cst_57 = arith.constant 1.000000e+00 : f32
    %181 = vector.broadcast %cst_57 : f32 to vector<8x128xf32>
    %182 = arith.addf %181, %180 : vector<8x128xf32>
    %183 = arith.divf %181, %182 : vector<8x128xf32>
    %184 = vector.extract_strided_slice %166 {offsets = [0, 256], sizes = [8, 128], strides = [1, 1]} : vector<8x384xf32> to vector<8x128xf32>
    %185 = vector.extract_strided_slice %167 {offsets = [0, 256], sizes = [8, 128], strides = [1, 1]} : vector<8x384xf32> to vector<8x128xf32>
    %186 = vector.broadcast %15 : vector<1x128xf32> to vector<8x128xf32>
    %187 = arith.addf %185, %186 : vector<8x128xf32>
    %188 = arith.mulf %175, %187 : vector<8x128xf32>
    %189 = arith.addf %184, %188 : vector<8x128xf32>
    %190 = math.tanh %189 : vector<8x128xf32>
    %cst_58 = arith.constant 1.000000e+00 : f32
    %191 = vector.broadcast %cst_58 : f32 to vector<8x128xf32>
    %192 = arith.subf %191, %183 : vector<8x128xf32>
    %193 = arith.mulf %192, %190 : vector<8x128xf32>
    %194 = arith.mulf %183, %124 : vector<8x128xf32>
    %195 = arith.addf %193, %194 : vector<8x128xf32>
    %196 = arith.index_cast %164 : i32 to index
    %c0_59 = arith.constant 0 : index
    %197 = vector.load %arg14[%196, %c0_59] : memref<64x384xf32, #tpu.memory_space<vmem>>, vector<8x384xf32>
    %cst_60 = arith.constant dense<0.000000e+00> : vector<8x384xf32>
    %198 = tpu.matmul %155, %14, %cst_60 {dimension_numbers = #tpu.dot_dimension_numbers<[1], [0], [0], [1], [0, 0, 1, 1], [], []>} : vector<8x128xf32>, vector<128x384xf32>, vector<8x384xf32> -> vector<8x384xf32>
    %199 = vector.extract_strided_slice %197 {offsets = [0, 0], sizes = [8, 128], strides = [1, 1]} : vector<8x384xf32> to vector<8x128xf32>
    %200 = vector.extract_strided_slice %198 {offsets = [0, 0], sizes = [8, 128], strides = [1, 1]} : vector<8x384xf32> to vector<8x128xf32>
    %201 = arith.addf %199, %200 : vector<8x128xf32>
    %202 = arith.negf %201 : vector<8x128xf32>
    %203 = math.exp %202 : vector<8x128xf32>
    %cst_61 = arith.constant 1.000000e+00 : f32
    %204 = vector.broadcast %cst_61 : f32 to vector<8x128xf32>
    %205 = arith.addf %204, %203 : vector<8x128xf32>
    %206 = arith.divf %204, %205 : vector<8x128xf32>
    %207 = vector.extract_strided_slice %197 {offsets = [0, 128], sizes = [8, 128], strides = [1, 1]} : vector<8x384xf32> to vector<8x128xf32>
    %208 = vector.extract_strided_slice %198 {offsets = [0, 128], sizes = [8, 128], strides = [1, 1]} : vector<8x384xf32> to vector<8x128xf32>
    %209 = arith.addf %207, %208 : vector<8x128xf32>
    %210 = arith.negf %209 : vector<8x128xf32>
    %211 = math.exp %210 : vector<8x128xf32>
    %cst_62 = arith.constant 1.000000e+00 : f32
    %212 = vector.broadcast %cst_62 : f32 to vector<8x128xf32>
    %213 = arith.addf %212, %211 : vector<8x128xf32>
    %214 = arith.divf %212, %213 : vector<8x128xf32>
    %215 = vector.extract_strided_slice %197 {offsets = [0, 256], sizes = [8, 128], strides = [1, 1]} : vector<8x384xf32> to vector<8x128xf32>
    %216 = vector.extract_strided_slice %198 {offsets = [0, 256], sizes = [8, 128], strides = [1, 1]} : vector<8x384xf32> to vector<8x128xf32>
    %217 = vector.broadcast %16 : vector<1x128xf32> to vector<8x128xf32>
    %218 = arith.addf %216, %217 : vector<8x128xf32>
    %219 = arith.mulf %206, %218 : vector<8x128xf32>
    %220 = arith.addf %215, %219 : vector<8x128xf32>
    %221 = math.tanh %220 : vector<8x128xf32>
    %cst_63 = arith.constant 1.000000e+00 : f32
    %222 = vector.broadcast %cst_63 : f32 to vector<8x128xf32>
    %223 = arith.subf %222, %214 : vector<8x128xf32>
    %224 = arith.mulf %223, %221 : vector<8x128xf32>
    %225 = arith.mulf %214, %155 : vector<8x128xf32>
    %226 = arith.addf %224, %225 : vector<8x128xf32>
    %227 = arith.index_cast %161 : i32 to index
    %c0_64 = arith.constant 0 : index
    %228 = vector.load %arg15[%227, %c0_64] : memref<64x128xf32, #tpu.memory_space<vmem>>, vector<8x128xf32>
    tpu.vector_store %arg15[%227, %c0_64], %195 {strides = array<i32>} : memref<64x128xf32, #tpu.memory_space<vmem>>, vector<8x128xf32>,
    %229 = arith.index_cast %164 : i32 to index
    %c0_65 = arith.constant 0 : index
    %230 = vector.load %arg16[%229, %c0_65] : memref<64x128xf32, #tpu.memory_space<vmem>>, vector<8x128xf32>
    tpu.vector_store %arg16[%229, %c0_65], %226 {strides = array<i32>} : memref<64x128xf32, #tpu.memory_space<vmem>>, vector<8x128xf32>,
    %c3_i32 = arith.constant 3 : i32
    %c8_i32_66 = arith.constant 8 : i32
    %231 = arith.muli %c3_i32, %c8_i32_66 : i32
    %232 = tpu.assume_multiple %231, 8 : i32
    %c7_i32_67 = arith.constant 7 : i32
    %233 = arith.subi %c7_i32_67, %c3_i32 : i32
    %c8_i32_68 = arith.constant 8 : i32
    %234 = arith.muli %233, %c8_i32_68 : i32
    %235 = tpu.assume_multiple %234, 8 : i32
    %236 = arith.index_cast %232 : i32 to index
    %c0_69 = arith.constant 0 : index
    %237 = vector.load %arg13[%236, %c0_69] : memref<64x384xf32, #tpu.memory_space<vmem>>, vector<8x384xf32>
    %cst_70 = arith.constant dense<0.000000e+00> : vector<8x384xf32>
    %238 = tpu.matmul %195, %13, %cst_70 {dimension_numbers = #tpu.dot_dimension_numbers<[1], [0], [0], [1], [0, 0, 1, 1], [], []>} : vector<8x128xf32>, vector<128x384xf32>, vector<8x384xf32> -> vector<8x384xf32>
    %239 = vector.extract_strided_slice %237 {offsets = [0, 0], sizes = [8, 128], strides = [1, 1]} : vector<8x384xf32> to vector<8x128xf32>
    %240 = vector.extract_strided_slice %238 {offsets = [0, 0], sizes = [8, 128], strides = [1, 1]} : vector<8x384xf32> to vector<8x128xf32>
    %241 = arith.addf %239, %240 : vector<8x128xf32>
    %242 = arith.negf %241 : vector<8x128xf32>
    %243 = math.exp %242 : vector<8x128xf32>
    %cst_71 = arith.constant 1.000000e+00 : f32
    %244 = vector.broadcast %cst_71 : f32 to vector<8x128xf32>
    %245 = arith.addf %244, %243 : vector<8x128xf32>
    %246 = arith.divf %244, %245 : vector<8x128xf32>
    %247 = vector.extract_strided_slice %237 {offsets = [0, 128], sizes = [8, 128], strides = [1, 1]} : vector<8x384xf32> to vector<8x128xf32>
    %248 = vector.extract_strided_slice %238 {offsets = [0, 128], sizes = [8, 128], strides = [1, 1]} : vector<8x384xf32> to vector<8x128xf32>
    %249 = arith.addf %247, %248 : vector<8x128xf32>
    %250 = arith.negf %249 : vector<8x128xf32>
    %251 = math.exp %250 : vector<8x128xf32>
    %cst_72 = arith.constant 1.000000e+00 : f32
    %252 = vector.broadcast %cst_72 : f32 to vector<8x128xf32>
    %253 = arith.addf %252, %251 : vector<8x128xf32>
    %254 = arith.divf %252, %253 : vector<8x128xf32>
    %255 = vector.extract_strided_slice %237 {offsets = [0, 256], sizes = [8, 128], strides = [1, 1]} : vector<8x384xf32> to vector<8x128xf32>
    %256 = vector.extract_strided_slice %238 {offsets = [0, 256], sizes = [8, 128], strides = [1, 1]} : vector<8x384xf32> to vector<8x128xf32>
    %257 = vector.broadcast %15 : vector<1x128xf32> to vector<8x128xf32>
    %258 = arith.addf %256, %257 : vector<8x128xf32>
    %259 = arith.mulf %246, %258 : vector<8x128xf32>
    %260 = arith.addf %255, %259 : vector<8x128xf32>
    %261 = math.tanh %260 : vector<8x128xf32>
    %cst_73 = arith.constant 1.000000e+00 : f32
    %262 = vector.broadcast %cst_73 : f32 to vector<8x128xf32>
    %263 = arith.subf %262, %254 : vector<8x128xf32>
    %264 = arith.mulf %263, %261 : vector<8x128xf32>
    %265 = arith.mulf %254, %195 : vector<8x128xf32>
    %266 = arith.addf %264, %265 : vector<8x128xf32>
    %267 = arith.index_cast %235 : i32 to index
    %c0_74 = arith.constant 0 : index
    %268 = vector.load %arg14[%267, %c0_74] : memref<64x384xf32, #tpu.memory_space<vmem>>, vector<8x384xf32>
    %cst_75 = arith.constant dense<0.000000e+00> : vector<8x384xf32>
    %269 = tpu.matmul %226, %14, %cst_75 {dimension_numbers = #tpu.dot_dimension_numbers<[1], [0], [0], [1], [0, 0, 1, 1], [], []>} : vector<8x128xf32>, vector<128x384xf32>, vector<8x384xf32> -> vector<8x384xf32>
    %270 = vector.extract_strided_slice %268 {offsets = [0, 0], sizes = [8, 128], strides = [1, 1]} : vector<8x384xf32> to vector<8x128xf32>
    %271 = vector.extract_strided_slice %269 {offsets = [0, 0], sizes = [8, 128], strides = [1, 1]} : vector<8x384xf32> to vector<8x128xf32>
    %272 = arith.addf %270, %271 : vector<8x128xf32>
    %273 = arith.negf %272 : vector<8x128xf32>
    %274 = math.exp %273 : vector<8x128xf32>
    %cst_76 = arith.constant 1.000000e+00 : f32
    %275 = vector.broadcast %cst_76 : f32 to vector<8x128xf32>
    %276 = arith.addf %275, %274 : vector<8x128xf32>
    %277 = arith.divf %275, %276 : vector<8x128xf32>
    %278 = vector.extract_strided_slice %268 {offsets = [0, 128], sizes = [8, 128], strides = [1, 1]} : vector<8x384xf32> to vector<8x128xf32>
    %279 = vector.extract_strided_slice %269 {offsets = [0, 128], sizes = [8, 128], strides = [1, 1]} : vector<8x384xf32> to vector<8x128xf32>
    %280 = arith.addf %278, %279 : vector<8x128xf32>
    %281 = arith.negf %280 : vector<8x128xf32>
    %282 = math.exp %281 : vector<8x128xf32>
    %cst_77 = arith.constant 1.000000e+00 : f32
    %283 = vector.broadcast %cst_77 : f32 to vector<8x128xf32>
    %284 = arith.addf %283, %282 : vector<8x128xf32>
    %285 = arith.divf %283, %284 : vector<8x128xf32>
    %286 = vector.extract_strided_slice %268 {offsets = [0, 256], sizes = [8, 128], strides = [1, 1]} : vector<8x384xf32> to vector<8x128xf32>
    %287 = vector.extract_strided_slice %269 {offsets = [0, 256], sizes = [8, 128], strides = [1, 1]} : vector<8x384xf32> to vector<8x128xf32>
    %288 = vector.broadcast %16 : vector<1x128xf32> to vector<8x128xf32>
    %289 = arith.addf %287, %288 : vector<8x128xf32>
    %290 = arith.mulf %277, %289 : vector<8x128xf32>
    %291 = arith.addf %286, %290 : vector<8x128xf32>
    %292 = math.tanh %291 : vector<8x128xf32>
    %cst_78 = arith.constant 1.000000e+00 : f32
    %293 = vector.broadcast %cst_78 : f32 to vector<8x128xf32>
    %294 = arith.subf %293, %285 : vector<8x128xf32>
    %295 = arith.mulf %294, %292 : vector<8x128xf32>
    %296 = arith.mulf %285, %226 : vector<8x128xf32>
    %297 = arith.addf %295, %296 : vector<8x128xf32>
    %298 = arith.index_cast %232 : i32 to index
    %c0_79 = arith.constant 0 : index
    %299 = vector.load %arg15[%298, %c0_79] : memref<64x128xf32, #tpu.memory_space<vmem>>, vector<8x128xf32>
    tpu.vector_store %arg15[%298, %c0_79], %266 {strides = array<i32>} : memref<64x128xf32, #tpu.memory_space<vmem>>, vector<8x128xf32>,
    %300 = arith.index_cast %235 : i32 to index
    %c0_80 = arith.constant 0 : index
    %301 = vector.load %arg16[%300, %c0_80] : memref<64x128xf32, #tpu.memory_space<vmem>>, vector<8x128xf32>
    tpu.vector_store %arg16[%300, %c0_80], %297 {strides = array<i32>} : memref<64x128xf32, #tpu.memory_space<vmem>>, vector<8x128xf32>,
    %c4_i32 = arith.constant 4 : i32
    %c8_i32_81 = arith.constant 8 : i32
    %302 = arith.muli %c4_i32, %c8_i32_81 : i32
    %303 = tpu.assume_multiple %302, 8 : i32
    %c7_i32_82 = arith.constant 7 : i32
    %304 = arith.subi %c7_i32_82, %c4_i32 : i32
    %c8_i32_83 = arith.constant 8 : i32
    %305 = arith.muli %304, %c8_i32_83 : i32
    %306 = tpu.assume_multiple %305, 8 : i32
    %307 = arith.index_cast %303 : i32 to index
    %c0_84 = arith.constant 0 : index
    %308 = vector.load %arg13[%307, %c0_84] : memref<64x384xf32, #tpu.memory_space<vmem>>, vector<8x384xf32>
    %cst_85 = arith.constant dense<0.000000e+00> : vector<8x384xf32>
    %309 = tpu.matmul %266, %13, %cst_85 {dimension_numbers = #tpu.dot_dimension_numbers<[1], [0], [0], [1], [0, 0, 1, 1], [], []>} : vector<8x128xf32>, vector<128x384xf32>, vector<8x384xf32> -> vector<8x384xf32>
    %310 = vector.extract_strided_slice %308 {offsets = [0, 0], sizes = [8, 128], strides = [1, 1]} : vector<8x384xf32> to vector<8x128xf32>
    %311 = vector.extract_strided_slice %309 {offsets = [0, 0], sizes = [8, 128], strides = [1, 1]} : vector<8x384xf32> to vector<8x128xf32>
    %312 = arith.addf %310, %311 : vector<8x128xf32>
    %313 = arith.negf %312 : vector<8x128xf32>
    %314 = math.exp %313 : vector<8x128xf32>
    %cst_86 = arith.constant 1.000000e+00 : f32
    %315 = vector.broadcast %cst_86 : f32 to vector<8x128xf32>
    %316 = arith.addf %315, %314 : vector<8x128xf32>
    %317 = arith.divf %315, %316 : vector<8x128xf32>
    %318 = vector.extract_strided_slice %308 {offsets = [0, 128], sizes = [8, 128], strides = [1, 1]} : vector<8x384xf32> to vector<8x128xf32>
    %319 = vector.extract_strided_slice %309 {offsets = [0, 128], sizes = [8, 128], strides = [1, 1]} : vector<8x384xf32> to vector<8x128xf32>
    %320 = arith.addf %318, %319 : vector<8x128xf32>
    %321 = arith.negf %320 : vector<8x128xf32>
    %322 = math.exp %321 : vector<8x128xf32>
    %cst_87 = arith.constant 1.000000e+00 : f32
    %323 = vector.broadcast %cst_87 : f32 to vector<8x128xf32>
    %324 = arith.addf %323, %322 : vector<8x128xf32>
    %325 = arith.divf %323, %324 : vector<8x128xf32>
    %326 = vector.extract_strided_slice %308 {offsets = [0, 256], sizes = [8, 128], strides = [1, 1]} : vector<8x384xf32> to vector<8x128xf32>
    %327 = vector.extract_strided_slice %309 {offsets = [0, 256], sizes = [8, 128], strides = [1, 1]} : vector<8x384xf32> to vector<8x128xf32>
    %328 = vector.broadcast %15 : vector<1x128xf32> to vector<8x128xf32>
    %329 = arith.addf %327, %328 : vector<8x128xf32>
    %330 = arith.mulf %317, %329 : vector<8x128xf32>
    %331 = arith.addf %326, %330 : vector<8x128xf32>
    %332 = math.tanh %331 : vector<8x128xf32>
    %cst_88 = arith.constant 1.000000e+00 : f32
    %333 = vector.broadcast %cst_88 : f32 to vector<8x128xf32>
    %334 = arith.subf %333, %325 : vector<8x128xf32>
    %335 = arith.mulf %334, %332 : vector<8x128xf32>
    %336 = arith.mulf %325, %266 : vector<8x128xf32>
    %337 = arith.addf %335, %336 : vector<8x128xf32>
    %338 = arith.index_cast %306 : i32 to index
    %c0_89 = arith.constant 0 : index
    %339 = vector.load %arg14[%338, %c0_89] : memref<64x384xf32, #tpu.memory_space<vmem>>, vector<8x384xf32>
    %cst_90 = arith.constant dense<0.000000e+00> : vector<8x384xf32>
    %340 = tpu.matmul %297, %14, %cst_90 {dimension_numbers = #tpu.dot_dimension_numbers<[1], [0], [0], [1], [0, 0, 1, 1], [], []>} : vector<8x128xf32>, vector<128x384xf32>, vector<8x384xf32> -> vector<8x384xf32>
    %341 = vector.extract_strided_slice %339 {offsets = [0, 0], sizes = [8, 128], strides = [1, 1]} : vector<8x384xf32> to vector<8x128xf32>
    %342 = vector.extract_strided_slice %340 {offsets = [0, 0], sizes = [8, 128], strides = [1, 1]} : vector<8x384xf32> to vector<8x128xf32>
    %343 = arith.addf %341, %342 : vector<8x128xf32>
    %344 = arith.negf %343 : vector<8x128xf32>
    %345 = math.exp %344 : vector<8x128xf32>
    %cst_91 = arith.constant 1.000000e+00 : f32
    %346 = vector.broadcast %cst_91 : f32 to vector<8x128xf32>
    %347 = arith.addf %346, %345 : vector<8x128xf32>
    %348 = arith.divf %346, %347 : vector<8x128xf32>
    %349 = vector.extract_strided_slice %339 {offsets = [0, 128], sizes = [8, 128], strides = [1, 1]} : vector<8x384xf32> to vector<8x128xf32>
    %350 = vector.extract_strided_slice %340 {offsets = [0, 128], sizes = [8, 128], strides = [1, 1]} : vector<8x384xf32> to vector<8x128xf32>
    %351 = arith.addf %349, %350 : vector<8x128xf32>
    %352 = arith.negf %351 : vector<8x128xf32>
    %353 = math.exp %352 : vector<8x128xf32>
    %cst_92 = arith.constant 1.000000e+00 : f32
    %354 = vector.broadcast %cst_92 : f32 to vector<8x128xf32>
    %355 = arith.addf %354, %353 : vector<8x128xf32>
    %356 = arith.divf %354, %355 : vector<8x128xf32>
    %357 = vector.extract_strided_slice %339 {offsets = [0, 256], sizes = [8, 128], strides = [1, 1]} : vector<8x384xf32> to vector<8x128xf32>
    %358 = vector.extract_strided_slice %340 {offsets = [0, 256], sizes = [8, 128], strides = [1, 1]} : vector<8x384xf32> to vector<8x128xf32>
    %359 = vector.broadcast %16 : vector<1x128xf32> to vector<8x128xf32>
    %360 = arith.addf %358, %359 : vector<8x128xf32>
    %361 = arith.mulf %348, %360 : vector<8x128xf32>
    %362 = arith.addf %357, %361 : vector<8x128xf32>
    %363 = math.tanh %362 : vector<8x128xf32>
    %cst_93 = arith.constant 1.000000e+00 : f32
    %364 = vector.broadcast %cst_93 : f32 to vector<8x128xf32>
    %365 = arith.subf %364, %356 : vector<8x128xf32>
    %366 = arith.mulf %365, %363 : vector<8x128xf32>
    %367 = arith.mulf %356, %297 : vector<8x128xf32>
    %368 = arith.addf %366, %367 : vector<8x128xf32>
    %369 = arith.index_cast %303 : i32 to index
    %c0_94 = arith.constant 0 : index
    %370 = vector.load %arg15[%369, %c0_94] : memref<64x128xf32, #tpu.memory_space<vmem>>, vector<8x128xf32>
    tpu.vector_store %arg15[%369, %c0_94], %337 {strides = array<i32>} : memref<64x128xf32, #tpu.memory_space<vmem>>, vector<8x128xf32>,
    %371 = arith.index_cast %306 : i32 to index
    %c0_95 = arith.constant 0 : index
    %372 = vector.load %arg16[%371, %c0_95] : memref<64x128xf32, #tpu.memory_space<vmem>>, vector<8x128xf32>
    tpu.vector_store %arg16[%371, %c0_95], %368 {strides = array<i32>} : memref<64x128xf32, #tpu.memory_space<vmem>>, vector<8x128xf32>,
    %c5_i32 = arith.constant 5 : i32
    %c8_i32_96 = arith.constant 8 : i32
    %373 = arith.muli %c5_i32, %c8_i32_96 : i32
    %374 = tpu.assume_multiple %373, 8 : i32
    %c7_i32_97 = arith.constant 7 : i32
    %375 = arith.subi %c7_i32_97, %c5_i32 : i32
    %c8_i32_98 = arith.constant 8 : i32
    %376 = arith.muli %375, %c8_i32_98 : i32
    %377 = tpu.assume_multiple %376, 8 : i32
    %378 = arith.index_cast %374 : i32 to index
    %c0_99 = arith.constant 0 : index
    %379 = vector.load %arg13[%378, %c0_99] : memref<64x384xf32, #tpu.memory_space<vmem>>, vector<8x384xf32>
    %cst_100 = arith.constant dense<0.000000e+00> : vector<8x384xf32>
    %380 = tpu.matmul %337, %13, %cst_100 {dimension_numbers = #tpu.dot_dimension_numbers<[1], [0], [0], [1], [0, 0, 1, 1], [], []>} : vector<8x128xf32>, vector<128x384xf32>, vector<8x384xf32> -> vector<8x384xf32>
    %381 = vector.extract_strided_slice %379 {offsets = [0, 0], sizes = [8, 128], strides = [1, 1]} : vector<8x384xf32> to vector<8x128xf32>
    %382 = vector.extract_strided_slice %380 {offsets = [0, 0], sizes = [8, 128], strides = [1, 1]} : vector<8x384xf32> to vector<8x128xf32>
    %383 = arith.addf %381, %382 : vector<8x128xf32>
    %384 = arith.negf %383 : vector<8x128xf32>
    %385 = math.exp %384 : vector<8x128xf32>
    %cst_101 = arith.constant 1.000000e+00 : f32
    %386 = vector.broadcast %cst_101 : f32 to vector<8x128xf32>
    %387 = arith.addf %386, %385 : vector<8x128xf32>
    %388 = arith.divf %386, %387 : vector<8x128xf32>
    %389 = vector.extract_strided_slice %379 {offsets = [0, 128], sizes = [8, 128], strides = [1, 1]} : vector<8x384xf32> to vector<8x128xf32>
    %390 = vector.extract_strided_slice %380 {offsets = [0, 128], sizes = [8, 128], strides = [1, 1]} : vector<8x384xf32> to vector<8x128xf32>
    %391 = arith.addf %389, %390 : vector<8x128xf32>
    %392 = arith.negf %391 : vector<8x128xf32>
    %393 = math.exp %392 : vector<8x128xf32>
    %cst_102 = arith.constant 1.000000e+00 : f32
    %394 = vector.broadcast %cst_102 : f32 to vector<8x128xf32>
    %395 = arith.addf %394, %393 : vector<8x128xf32>
    %396 = arith.divf %394, %395 : vector<8x128xf32>
    %397 = vector.extract_strided_slice %379 {offsets = [0, 256], sizes = [8, 128], strides = [1, 1]} : vector<8x384xf32> to vector<8x128xf32>
    %398 = vector.extract_strided_slice %380 {offsets = [0, 256], sizes = [8, 128], strides = [1, 1]} : vector<8x384xf32> to vector<8x128xf32>
    %399 = vector.broadcast %15 : vector<1x128xf32> to vector<8x128xf32>
    %400 = arith.addf %398, %399 : vector<8x128xf32>
    %401 = arith.mulf %388, %400 : vector<8x128xf32>
    %402 = arith.addf %397, %401 : vector<8x128xf32>
    %403 = math.tanh %402 : vector<8x128xf32>
    %cst_103 = arith.constant 1.000000e+00 : f32
    %404 = vector.broadcast %cst_103 : f32 to vector<8x128xf32>
    %405 = arith.subf %404, %396 : vector<8x128xf32>
    %406 = arith.mulf %405, %403 : vector<8x128xf32>
    %407 = arith.mulf %396, %337 : vector<8x128xf32>
    %408 = arith.addf %406, %407 : vector<8x128xf32>
    %409 = arith.index_cast %377 : i32 to index
    %c0_104 = arith.constant 0 : index
    %410 = vector.load %arg14[%409, %c0_104] : memref<64x384xf32, #tpu.memory_space<vmem>>, vector<8x384xf32>
    %cst_105 = arith.constant dense<0.000000e+00> : vector<8x384xf32>
    %411 = tpu.matmul %368, %14, %cst_105 {dimension_numbers = #tpu.dot_dimension_numbers<[1], [0], [0], [1], [0, 0, 1, 1], [], []>} : vector<8x128xf32>, vector<128x384xf32>, vector<8x384xf32> -> vector<8x384xf32>
    %412 = vector.extract_strided_slice %410 {offsets = [0, 0], sizes = [8, 128], strides = [1, 1]} : vector<8x384xf32> to vector<8x128xf32>
    %413 = vector.extract_strided_slice %411 {offsets = [0, 0], sizes = [8, 128], strides = [1, 1]} : vector<8x384xf32> to vector<8x128xf32>
    %414 = arith.addf %412, %413 : vector<8x128xf32>
    %415 = arith.negf %414 : vector<8x128xf32>
    %416 = math.exp %415 : vector<8x128xf32>
    %cst_106 = arith.constant 1.000000e+00 : f32
    %417 = vector.broadcast %cst_106 : f32 to vector<8x128xf32>
    %418 = arith.addf %417, %416 : vector<8x128xf32>
    %419 = arith.divf %417, %418 : vector<8x128xf32>
    %420 = vector.extract_strided_slice %410 {offsets = [0, 128], sizes = [8, 128], strides = [1, 1]} : vector<8x384xf32> to vector<8x128xf32>
    %421 = vector.extract_strided_slice %411 {offsets = [0, 128], sizes = [8, 128], strides = [1, 1]} : vector<8x384xf32> to vector<8x128xf32>
    %422 = arith.addf %420, %421 : vector<8x128xf32>
    %423 = arith.negf %422 : vector<8x128xf32>
    %424 = math.exp %423 : vector<8x128xf32>
    %cst_107 = arith.constant 1.000000e+00 : f32
    %425 = vector.broadcast %cst_107 : f32 to vector<8x128xf32>
    %426 = arith.addf %425, %424 : vector<8x128xf32>
    %427 = arith.divf %425, %426 : vector<8x128xf32>
    %428 = vector.extract_strided_slice %410 {offsets = [0, 256], sizes = [8, 128], strides = [1, 1]} : vector<8x384xf32> to vector<8x128xf32>
    %429 = vector.extract_strided_slice %411 {offsets = [0, 256], sizes = [8, 128], strides = [1, 1]} : vector<8x384xf32> to vector<8x128xf32>
    %430 = vector.broadcast %16 : vector<1x128xf32> to vector<8x128xf32>
    %431 = arith.addf %429, %430 : vector<8x128xf32>
    %432 = arith.mulf %419, %431 : vector<8x128xf32>
    %433 = arith.addf %428, %432 : vector<8x128xf32>
    %434 = math.tanh %433 : vector<8x128xf32>
    %cst_108 = arith.constant 1.000000e+00 : f32
    %435 = vector.broadcast %cst_108 : f32 to vector<8x128xf32>
    %436 = arith.subf %435, %427 : vector<8x128xf32>
    %437 = arith.mulf %436, %434 : vector<8x128xf32>
    %438 = arith.mulf %427, %368 : vector<8x128xf32>
    %439 = arith.addf %437, %438 : vector<8x128xf32>
    %440 = arith.index_cast %374 : i32 to index
    %c0_109 = arith.constant 0 : index
    %441 = vector.load %arg15[%440, %c0_109] : memref<64x128xf32, #tpu.memory_space<vmem>>, vector<8x128xf32>
    tpu.vector_store %arg15[%440, %c0_109], %408 {strides = array<i32>} : memref<64x128xf32, #tpu.memory_space<vmem>>, vector<8x128xf32>,
    %442 = arith.index_cast %377 : i32 to index
    %c0_110 = arith.constant 0 : index
    %443 = vector.load %arg16[%442, %c0_110] : memref<64x128xf32, #tpu.memory_space<vmem>>, vector<8x128xf32>
    tpu.vector_store %arg16[%442, %c0_110], %439 {strides = array<i32>} : memref<64x128xf32, #tpu.memory_space<vmem>>, vector<8x128xf32>,
    %c6_i32 = arith.constant 6 : i32
    %c8_i32_111 = arith.constant 8 : i32
    %444 = arith.muli %c6_i32, %c8_i32_111 : i32
    %445 = tpu.assume_multiple %444, 8 : i32
    %c7_i32_112 = arith.constant 7 : i32
    %446 = arith.subi %c7_i32_112, %c6_i32 : i32
    %c8_i32_113 = arith.constant 8 : i32
    %447 = arith.muli %446, %c8_i32_113 : i32
    %448 = tpu.assume_multiple %447, 8 : i32
    %449 = arith.index_cast %445 : i32 to index
    %c0_114 = arith.constant 0 : index
    %450 = vector.load %arg13[%449, %c0_114] : memref<64x384xf32, #tpu.memory_space<vmem>>, vector<8x384xf32>
    %cst_115 = arith.constant dense<0.000000e+00> : vector<8x384xf32>
    %451 = tpu.matmul %408, %13, %cst_115 {dimension_numbers = #tpu.dot_dimension_numbers<[1], [0], [0], [1], [0, 0, 1, 1], [], []>} : vector<8x128xf32>, vector<128x384xf32>, vector<8x384xf32> -> vector<8x384xf32>
    %452 = vector.extract_strided_slice %450 {offsets = [0, 0], sizes = [8, 128], strides = [1, 1]} : vector<8x384xf32> to vector<8x128xf32>
    %453 = vector.extract_strided_slice %451 {offsets = [0, 0], sizes = [8, 128], strides = [1, 1]} : vector<8x384xf32> to vector<8x128xf32>
    %454 = arith.addf %452, %453 : vector<8x128xf32>
    %455 = arith.negf %454 : vector<8x128xf32>
    %456 = math.exp %455 : vector<8x128xf32>
    %cst_116 = arith.constant 1.000000e+00 : f32
    %457 = vector.broadcast %cst_116 : f32 to vector<8x128xf32>
    %458 = arith.addf %457, %456 : vector<8x128xf32>
    %459 = arith.divf %457, %458 : vector<8x128xf32>
    %460 = vector.extract_strided_slice %450 {offsets = [0, 128], sizes = [8, 128], strides = [1, 1]} : vector<8x384xf32> to vector<8x128xf32>
    %461 = vector.extract_strided_slice %451 {offsets = [0, 128], sizes = [8, 128], strides = [1, 1]} : vector<8x384xf32> to vector<8x128xf32>
    %462 = arith.addf %460, %461 : vector<8x128xf32>
    %463 = arith.negf %462 : vector<8x128xf32>
    %464 = math.exp %463 : vector<8x128xf32>
    %cst_117 = arith.constant 1.000000e+00 : f32
    %465 = vector.broadcast %cst_117 : f32 to vector<8x128xf32>
    %466 = arith.addf %465, %464 : vector<8x128xf32>
    %467 = arith.divf %465, %466 : vector<8x128xf32>
    %468 = vector.extract_strided_slice %450 {offsets = [0, 256], sizes = [8, 128], strides = [1, 1]} : vector<8x384xf32> to vector<8x128xf32>
    %469 = vector.extract_strided_slice %451 {offsets = [0, 256], sizes = [8, 128], strides = [1, 1]} : vector<8x384xf32> to vector<8x128xf32>
    %470 = vector.broadcast %15 : vector<1x128xf32> to vector<8x128xf32>
    %471 = arith.addf %469, %470 : vector<8x128xf32>
    %472 = arith.mulf %459, %471 : vector<8x128xf32>
    %473 = arith.addf %468, %472 : vector<8x128xf32>
    %474 = math.tanh %473 : vector<8x128xf32>
    %cst_118 = arith.constant 1.000000e+00 : f32
    %475 = vector.broadcast %cst_118 : f32 to vector<8x128xf32>
    %476 = arith.subf %475, %467 : vector<8x128xf32>
    %477 = arith.mulf %476, %474 : vector<8x128xf32>
    %478 = arith.mulf %467, %408 : vector<8x128xf32>
    %479 = arith.addf %477, %478 : vector<8x128xf32>
    %480 = arith.index_cast %448 : i32 to index
    %c0_119 = arith.constant 0 : index
    %481 = vector.load %arg14[%480, %c0_119] : memref<64x384xf32, #tpu.memory_space<vmem>>, vector<8x384xf32>
    %cst_120 = arith.constant dense<0.000000e+00> : vector<8x384xf32>
    %482 = tpu.matmul %439, %14, %cst_120 {dimension_numbers = #tpu.dot_dimension_numbers<[1], [0], [0], [1], [0, 0, 1, 1], [], []>} : vector<8x128xf32>, vector<128x384xf32>, vector<8x384xf32> -> vector<8x384xf32>
    %483 = vector.extract_strided_slice %481 {offsets = [0, 0], sizes = [8, 128], strides = [1, 1]} : vector<8x384xf32> to vector<8x128xf32>
    %484 = vector.extract_strided_slice %482 {offsets = [0, 0], sizes = [8, 128], strides = [1, 1]} : vector<8x384xf32> to vector<8x128xf32>
    %485 = arith.addf %483, %484 : vector<8x128xf32>
    %486 = arith.negf %485 : vector<8x128xf32>
    %487 = math.exp %486 : vector<8x128xf32>
    %cst_121 = arith.constant 1.000000e+00 : f32
    %488 = vector.broadcast %cst_121 : f32 to vector<8x128xf32>
    %489 = arith.addf %488, %487 : vector<8x128xf32>
    %490 = arith.divf %488, %489 : vector<8x128xf32>
    %491 = vector.extract_strided_slice %481 {offsets = [0, 128], sizes = [8, 128], strides = [1, 1]} : vector<8x384xf32> to vector<8x128xf32>
    %492 = vector.extract_strided_slice %482 {offsets = [0, 128], sizes = [8, 128], strides = [1, 1]} : vector<8x384xf32> to vector<8x128xf32>
    %493 = arith.addf %491, %492 : vector<8x128xf32>
    %494 = arith.negf %493 : vector<8x128xf32>
    %495 = math.exp %494 : vector<8x128xf32>
    %cst_122 = arith.constant 1.000000e+00 : f32
    %496 = vector.broadcast %cst_122 : f32 to vector<8x128xf32>
    %497 = arith.addf %496, %495 : vector<8x128xf32>
    %498 = arith.divf %496, %497 : vector<8x128xf32>
    %499 = vector.extract_strided_slice %481 {offsets = [0, 256], sizes = [8, 128], strides = [1, 1]} : vector<8x384xf32> to vector<8x128xf32>
    %500 = vector.extract_strided_slice %482 {offsets = [0, 256], sizes = [8, 128], strides = [1, 1]} : vector<8x384xf32> to vector<8x128xf32>
    %501 = vector.broadcast %16 : vector<1x128xf32> to vector<8x128xf32>
    %502 = arith.addf %500, %501 : vector<8x128xf32>
    %503 = arith.mulf %490, %502 : vector<8x128xf32>
    %504 = arith.addf %499, %503 : vector<8x128xf32>
    %505 = math.tanh %504 : vector<8x128xf32>
    %cst_123 = arith.constant 1.000000e+00 : f32
    %506 = vector.broadcast %cst_123 : f32 to vector<8x128xf32>
    %507 = arith.subf %506, %498 : vector<8x128xf32>
    %508 = arith.mulf %507, %505 : vector<8x128xf32>
    %509 = arith.mulf %498, %439 : vector<8x128xf32>
    %510 = arith.addf %508, %509 : vector<8x128xf32>
    %511 = arith.index_cast %445 : i32 to index
    %c0_124 = arith.constant 0 : index
    %512 = vector.load %arg15[%511, %c0_124] : memref<64x128xf32, #tpu.memory_space<vmem>>, vector<8x128xf32>
    tpu.vector_store %arg15[%511, %c0_124], %479 {strides = array<i32>} : memref<64x128xf32, #tpu.memory_space<vmem>>, vector<8x128xf32>,
    %513 = arith.index_cast %448 : i32 to index
    %c0_125 = arith.constant 0 : index
    %514 = vector.load %arg16[%513, %c0_125] : memref<64x128xf32, #tpu.memory_space<vmem>>, vector<8x128xf32>
    tpu.vector_store %arg16[%513, %c0_125], %510 {strides = array<i32>} : memref<64x128xf32, #tpu.memory_space<vmem>>, vector<8x128xf32>,
    %c7_i32_126 = arith.constant 7 : i32
    %c8_i32_127 = arith.constant 8 : i32
    %515 = arith.muli %c7_i32_126, %c8_i32_127 : i32
    %516 = tpu.assume_multiple %515, 8 : i32
    %c7_i32_128 = arith.constant 7 : i32
    %517 = arith.subi %c7_i32_128, %c7_i32_126 : i32
    %c8_i32_129 = arith.constant 8 : i32
    %518 = arith.muli %517, %c8_i32_129 : i32
    %519 = tpu.assume_multiple %518, 8 : i32
    %520 = arith.index_cast %516 : i32 to index
    %c0_130 = arith.constant 0 : index
    %521 = vector.load %arg13[%520, %c0_130] : memref<64x384xf32, #tpu.memory_space<vmem>>, vector<8x384xf32>
    %cst_131 = arith.constant dense<0.000000e+00> : vector<8x384xf32>
    %522 = tpu.matmul %479, %13, %cst_131 {dimension_numbers = #tpu.dot_dimension_numbers<[1], [0], [0], [1], [0, 0, 1, 1], [], []>} : vector<8x128xf32>, vector<128x384xf32>, vector<8x384xf32> -> vector<8x384xf32>
    %523 = vector.extract_strided_slice %521 {offsets = [0, 0], sizes = [8, 128], strides = [1, 1]} : vector<8x384xf32> to vector<8x128xf32>
    %524 = vector.extract_strided_slice %522 {offsets = [0, 0], sizes = [8, 128], strides = [1, 1]} : vector<8x384xf32> to vector<8x128xf32>
    %525 = arith.addf %523, %524 : vector<8x128xf32>
    %526 = arith.negf %525 : vector<8x128xf32>
    %527 = math.exp %526 : vector<8x128xf32>
    %cst_132 = arith.constant 1.000000e+00 : f32
    %528 = vector.broadcast %cst_132 : f32 to vector<8x128xf32>
    %529 = arith.addf %528, %527 : vector<8x128xf32>
    %530 = arith.divf %528, %529 : vector<8x128xf32>
    %531 = vector.extract_strided_slice %521 {offsets = [0, 128], sizes = [8, 128], strides = [1, 1]} : vector<8x384xf32> to vector<8x128xf32>
    %532 = vector.extract_strided_slice %522 {offsets = [0, 128], sizes = [8, 128], strides = [1, 1]} : vector<8x384xf32> to vector<8x128xf32>
    %533 = arith.addf %531, %532 : vector<8x128xf32>
    %534 = arith.negf %533 : vector<8x128xf32>
    %535 = math.exp %534 : vector<8x128xf32>
    %cst_133 = arith.constant 1.000000e+00 : f32
    %536 = vector.broadcast %cst_133 : f32 to vector<8x128xf32>
    %537 = arith.addf %536, %535 : vector<8x128xf32>
    %538 = arith.divf %536, %537 : vector<8x128xf32>
    %539 = vector.extract_strided_slice %521 {offsets = [0, 256], sizes = [8, 128], strides = [1, 1]} : vector<8x384xf32> to vector<8x128xf32>
    %540 = vector.extract_strided_slice %522 {offsets = [0, 256], sizes = [8, 128], strides = [1, 1]} : vector<8x384xf32> to vector<8x128xf32>
    %541 = vector.broadcast %15 : vector<1x128xf32> to vector<8x128xf32>
    %542 = arith.addf %540, %541 : vector<8x128xf32>
    %543 = arith.mulf %530, %542 : vector<8x128xf32>
    %544 = arith.addf %539, %543 : vector<8x128xf32>
    %545 = math.tanh %544 : vector<8x128xf32>
    %cst_134 = arith.constant 1.000000e+00 : f32
    %546 = vector.broadcast %cst_134 : f32 to vector<8x128xf32>
    %547 = arith.subf %546, %538 : vector<8x128xf32>
    %548 = arith.mulf %547, %545 : vector<8x128xf32>
    %549 = arith.mulf %538, %479 : vector<8x128xf32>
    %550 = arith.addf %548, %549 : vector<8x128xf32>
    %551 = arith.index_cast %519 : i32 to index
    %c0_135 = arith.constant 0 : index
    %552 = vector.load %arg14[%551, %c0_135] : memref<64x384xf32, #tpu.memory_space<vmem>>, vector<8x384xf32>
    %cst_136 = arith.constant dense<0.000000e+00> : vector<8x384xf32>
    %553 = tpu.matmul %510, %14, %cst_136 {dimension_numbers = #tpu.dot_dimension_numbers<[1], [0], [0], [1], [0, 0, 1, 1], [], []>} : vector<8x128xf32>, vector<128x384xf32>, vector<8x384xf32> -> vector<8x384xf32>
    %554 = vector.extract_strided_slice %552 {offsets = [0, 0], sizes = [8, 128], strides = [1, 1]} : vector<8x384xf32> to vector<8x128xf32>
    %555 = vector.extract_strided_slice %553 {offsets = [0, 0], sizes = [8, 128], strides = [1, 1]} : vector<8x384xf32> to vector<8x128xf32>
    %556 = arith.addf %554, %555 : vector<8x128xf32>
    %557 = arith.negf %556 : vector<8x128xf32>
    %558 = math.exp %557 : vector<8x128xf32>
    %cst_137 = arith.constant 1.000000e+00 : f32
    %559 = vector.broadcast %cst_137 : f32 to vector<8x128xf32>
    %560 = arith.addf %559, %558 : vector<8x128xf32>
    %561 = arith.divf %559, %560 : vector<8x128xf32>
    %562 = vector.extract_strided_slice %552 {offsets = [0, 128], sizes = [8, 128], strides = [1, 1]} : vector<8x384xf32> to vector<8x128xf32>
    %563 = vector.extract_strided_slice %553 {offsets = [0, 128], sizes = [8, 128], strides = [1, 1]} : vector<8x384xf32> to vector<8x128xf32>
    %564 = arith.addf %562, %563 : vector<8x128xf32>
    %565 = arith.negf %564 : vector<8x128xf32>
    %566 = math.exp %565 : vector<8x128xf32>
    %cst_138 = arith.constant 1.000000e+00 : f32
    %567 = vector.broadcast %cst_138 : f32 to vector<8x128xf32>
    %568 = arith.addf %567, %566 : vector<8x128xf32>
    %569 = arith.divf %567, %568 : vector<8x128xf32>
    %570 = vector.extract_strided_slice %552 {offsets = [0, 256], sizes = [8, 128], strides = [1, 1]} : vector<8x384xf32> to vector<8x128xf32>
    %571 = vector.extract_strided_slice %553 {offsets = [0, 256], sizes = [8, 128], strides = [1, 1]} : vector<8x384xf32> to vector<8x128xf32>
    %572 = vector.broadcast %16 : vector<1x128xf32> to vector<8x128xf32>
    %573 = arith.addf %571, %572 : vector<8x128xf32>
    %574 = arith.mulf %561, %573 : vector<8x128xf32>
    %575 = arith.addf %570, %574 : vector<8x128xf32>
    %576 = math.tanh %575 : vector<8x128xf32>
    %cst_139 = arith.constant 1.000000e+00 : f32
    %577 = vector.broadcast %cst_139 : f32 to vector<8x128xf32>
    %578 = arith.subf %577, %569 : vector<8x128xf32>
    %579 = arith.mulf %578, %576 : vector<8x128xf32>
    %580 = arith.mulf %569, %510 : vector<8x128xf32>
    %581 = arith.addf %579, %580 : vector<8x128xf32>
    %582 = arith.index_cast %516 : i32 to index
    %c0_140 = arith.constant 0 : index
    %583 = vector.load %arg15[%582, %c0_140] : memref<64x128xf32, #tpu.memory_space<vmem>>, vector<8x128xf32>
    tpu.vector_store %arg15[%582, %c0_140], %550 {strides = array<i32>} : memref<64x128xf32, #tpu.memory_space<vmem>>, vector<8x128xf32>,
    %584 = arith.index_cast %519 : i32 to index
    %c0_141 = arith.constant 0 : index
    %585 = vector.load %arg16[%584, %c0_141] : memref<64x128xf32, #tpu.memory_space<vmem>>, vector<8x128xf32>
    tpu.vector_store %arg16[%584, %c0_141], %581 {strides = array<i32>} : memref<64x128xf32, #tpu.memory_space<vmem>>, vector<8x128xf32>,
    %c8_i32_142 = arith.constant 8 : i32
    %c0_143 = arith.constant 0 : index
    %c0_144 = arith.constant 0 : index
    %586 = vector.load %arg15[%c0_143, %c0_144] : memref<64x128xf32, #tpu.memory_space<vmem>>, vector<64x128xf32>
    %c0_145 = arith.constant 0 : index
    %c0_146 = arith.constant 0 : index
    %587 = vector.load %arg9[%c0_145, %c0_146] : memref<128x16xf32, #tpu.memory_space<vmem>>, vector<128x16xf32>
    %cst_147 = arith.constant dense<0.000000e+00> : vector<64x16xf32>
    %588 = tpu.matmul %586, %587, %cst_147 {dimension_numbers = #tpu.dot_dimension_numbers<[1], [0], [0], [1], [0, 0, 1, 1], [], []>} : vector<64x128xf32>, vector<128x16xf32>, vector<64x16xf32> -> vector<64x16xf32>
    %c0_148 = arith.constant 0 : index
    %c0_149 = arith.constant 0 : index
    %589 = vector.load %arg16[%c0_148, %c0_149] : memref<64x128xf32, #tpu.memory_space<vmem>>, vector<64x128xf32>
    %c0_150 = arith.constant 0 : index
    %c0_151 = arith.constant 0 : index
    %590 = vector.load %arg10[%c0_150, %c0_151] : memref<128x16xf32, #tpu.memory_space<vmem>>, vector<128x16xf32>
    %cst_152 = arith.constant dense<0.000000e+00> : vector<64x16xf32>
    %591 = tpu.matmul %589, %590, %cst_152 {dimension_numbers = #tpu.dot_dimension_numbers<[1], [0], [0], [1], [0, 0, 1, 1], [], []>} : vector<64x128xf32>, vector<128x16xf32>, vector<64x16xf32> -> vector<64x16xf32>
    %592 = arith.addf %588, %591 : vector<64x16xf32>
    %c0_153 = arith.constant 0 : index
    %c0_154 = arith.constant 0 : index
    %593 = vector.load %arg11[%c0_153, %c0_154] : memref<1x16xf32, #tpu.memory_space<vmem>>, vector<1x16xf32>
    %594 = vector.broadcast %593 : vector<1x16xf32> to vector<64x16xf32>
    %595 = arith.addf %592, %594 : vector<64x16xf32>
    %c0_155 = arith.constant 0 : index
    %c0_156 = arith.constant 0 : index
    %596 = vector.load %arg12[%c0_155, %c0_156] : memref<64x16xf32, #tpu.memory_space<vmem>>, vector<64x16xf32>
    tpu.vector_store %arg12[%c0_155, %c0_156], %595 {strides = array<i32>} : memref<64x16xf32, #tpu.memory_space<vmem>>, vector<64x16xf32>,
    return
  }
}

</mosaic_0001>

<llo_original>
// kernel: tpu_custom_call.1
$region0: #{tpu_custom_call.1}
  #allocation0 [shape = 'u32[]', space=smem, size = 0x4, offset = 0x4, fixed_abs, tag = 'smem constant byte address 0x4 - core index']
  #allocation1 [shape = 'u32[144,128]{1,0:T(1,128)}', space=vmem, size = 0x12000, scoped, tag = 'internal scratch']
  #allocation2 [shape = 'f32[64,384]{1,0:T(8,128)}', space=vmem, size = 0x18000, scoped, tag = 'scratch operand']
  #allocation3 [shape = 'f32[64,384]{1,0:T(8,128)}', space=vmem, size = 0x18000, scoped, tag = 'scratch operand']
  #allocation4 [shape = 'f32[64,128]{1,0:T(8,128)}', space=vmem, size = 0x8000, scoped, tag = 'scratch operand']
  #allocation5 [shape = 'f32[64,128]{1,0:T(8,128)}', space=vmem, size = 0x8000, scoped, tag = 'scratch operand']
  %s0 = inlined_call_operand.vmem [shape: f32[64,16], index: 0, kind: input, shape index: {}]
  %s1 = inlined_call_operand.hbm [shape: f32[16,384], index: 1, kind: input, shape index: {}]
  %s2 = inlined_call_operand.hbm [shape: f32[128,384], index: 2, kind: input, shape index: {}]
  %s3 = inlined_call_operand.hbm [shape: f32[1,384], index: 3, kind: input, shape index: {}]
  %s4 = inlined_call_operand.vmem [shape: f32[1,128], index: 4, kind: input, shape index: {}]
  %s5 = inlined_call_operand.hbm [shape: f32[16,384], index: 5, kind: input, shape index: {}]
  %s6 = inlined_call_operand.vmem [shape: f32[128,384], index: 6, kind: input, shape index: {}]
  %s7 = inlined_call_operand.hbm [shape: f32[1,384], index: 7, kind: input, shape index: {}]
  %s8 = inlined_call_operand.vmem [shape: f32[1,128], index: 8, kind: input, shape index: {}]
  %s9 = inlined_call_operand.vmem [shape: f32[128,16], index: 9, kind: input, shape index: {}]
  %s10 = inlined_call_operand.vmem [shape: f32[128,16], index: 10, kind: input, shape index: {}]
  %s11 = inlined_call_operand.vmem [shape: f32[1,16], index: 11, kind: input, shape index: {}]
  %s12 = inlined_call_operand.vmem [shape: f32[64,16], index: 12, kind: output, shape index: {}]
  %s13 = sld [smem:[#allocation0]]
  $region78: #{tpu_custom_call.1} parent=0
    _
  %s15 = ssub.s32 1, %s13
  %s16 = scalar_select 0, %s15, %s13
  $region1: #{tpu_custom_call.1} parent=0
    #allocation6 [shape = 'u8[24576]{0}', space=vmem, size = 0x6000, scoped, tag = 'input window, operand 1, single buffered']
    #allocation7 [shape = 's32[1]{0}', space=sflag, size = 0x4, scoped, tag = 'scoped memory for tpu_custom_call.1']
    #allocation8 [shape = 'u8[196608]{0}', space=vmem, size = 0x30000, scoped, tag = 'input window, operand 2, single buffered']
    #allocation9 [shape = 's32[1]{0}', space=sflag, size = 0x4, scoped, tag = 'scoped memory for tpu_custom_call.1']
    #allocation10 [shape = 'u8[1536]{0}', space=vmem, size = 0x800, scoped, tag = 'input window, operand 3, single buffered']
    #allocation11 [shape = 'u8[24576]{0}', space=vmem, size = 0x6000, scoped, tag = 'input window, operand 5, single buffered']
    #allocation12 [shape = 's32[1]{0}', space=sflag, size = 0x4, scoped, tag = 'scoped memory for tpu_custom_call.1']
    #allocation13 [shape = 'u8[1536]{0}', space=vmem, size = 0x800, scoped, tag = 'input window, operand 7, single buffered']
    %17 = vsyncpa [#allocation7], 0
    %18 = vsyncpa [#allocation9], 0
    %19 = vsyncpa [#allocation12], 0
    // Predicated region
    $region2: #{tpu_custom_call.1} parent=1 // pred_check
      _
    $region3: #{tpu_custom_call.1} parent=1 // pred_check_branch
      %21 = sbr.rel (0) target = $region5
    $region4: #{tpu_custom_call.1} parent=1 // pred_region
      _
    $region5: #{tpu_custom_call.1} parent=1 // pred_fallthru
      _
    // Predicated region
    $region6: #{tpu_custom_call.1} parent=1 // pred_check
      _
    $region7: #{tpu_custom_call.1} parent=1 // pred_check_branch
      %23 = sbr.rel (0) target = $region9
    $region8: #{tpu_custom_call.1} parent=1 // pred_region
      %s25 = ssub.s32 768, 768
      %26 = vsyncadd [#allocation7], %s25
      %s27 = sshll.u32 [#allocation6], 4
      %s28 = int_to_ptr.vmem [resolvable:$true] %s27
      %33 = dma.hbm_to_vmem [thread:$0]  %s1, 768, %s28, [#allocation7], 384, 384, 24
    $region9: #{tpu_custom_call.1} parent=1 // pred_fallthru
      _
    // Predicated region
    $region10: #{tpu_custom_call.1} parent=1 // pred_check
      _
    $region11: #{tpu_custom_call.1} parent=1 // pred_check_branch
      %35 = sbr.rel (0) target = $region13
    $region12: #{tpu_custom_call.1} parent=1 // pred_region
      %s37 = ssub.s32 6144, 6144
      %38 = vsyncadd [#allocation9], %s37
      %s39 = sshll.u32 [#allocation8], 4
      %s40 = int_to_ptr.vmem [resolvable:$true] %s39
      %45 = dma.hbm_to_vmem [thread:$0]  %s2, 6144, %s40, [#allocation9], 384, 384, 24
    $region13: #{tpu_custom_call.1} parent=1 // pred_fallthru
      _
    // Predicated region
    $region14: #{tpu_custom_call.1} parent=1 // pred_check
      _
    $region15: #{tpu_custom_call.1} parent=1 // pred_check_branch
      %47 = sbr.rel (0) target = $region17
    $region16: #{tpu_custom_call.1} parent=1 // pred_region
      %s49 = ssub.s32 48, 48
      %50 = vsyncadd [#allocation9], %s49
      %s52 = sshll.u32 [#allocation10], 4
      %s53 = int_to_ptr.vmem [resolvable:$true] %s52
      %55 = dma.hbm_to_vmem [thread:$0]  %s3, 48, %s53, [#allocation9]
    $region17: #{tpu_custom_call.1} parent=1 // pred_fallthru
      _
    // Predicated region
    $region18: #{tpu_custom_call.1} parent=1 // pred_check
      _
    $region19: #{tpu_custom_call.1} parent=1 // pred_check_branch
      %57 = sbr.rel (0) target = $region21
    $region20: #{tpu_custom_call.1} parent=1 // pred_region
      _
    $region21: #{tpu_custom_call.1} parent=1 // pred_fallthru
      _
    // Predicated region
    $region22: #{tpu_custom_call.1} parent=1 // pred_check
      _
    $region23: #{tpu_custom_call.1} parent=1 // pred_check_branch
      %59 = sbr.rel (0) target = $region25
    $region24: #{tpu_custom_call.1} parent=1 // pred_region
      %s61 = ssub.s32 768, 768
      %62 = vsyncadd [#allocation12], %s61
      %s63 = sshll.u32 [#allocation11], 4
      %s64 = int_to_ptr.vmem [resolvable:$true] %s63
      %69 = dma.hbm_to_vmem [thread:$0]  %s5, 768, %s64, [#allocation12], 384, 384, 24
    $region25: #{tpu_custom_call.1} parent=1 // pred_fallthru
      _
    // Predicated region
    $region26: #{tpu_custom_call.1} parent=1 // pred_check
      _
    $region27: #{tpu_custom_call.1} parent=1 // pred_check_branch
      %71 = sbr.rel (0) target = $region29
    $region28: #{tpu_custom_call.1} parent=1 // pred_region
      _
    $region29: #{tpu_custom_call.1} parent=1 // pred_fallthru
      _
    // Predicated region
    $region30: #{tpu_custom_call.1} parent=1 // pred_check
      _
    $region31: #{tpu_custom_call.1} parent=1 // pred_check_branch
      %73 = sbr.rel (0) target = $region33
    $region32: #{tpu_custom_call.1} parent=1 // pred_region
      %s75 = ssub.s32 48, 48
      %76 = vsyncadd [#allocation12], %s75
      %s78 = sshll.u32 [#allocation13], 4
      %s79 = int_to_ptr.vmem [resolvable:$true] %s78
      %81 = dma.hbm_to_vmem [thread:$0]  %s7, 48, %s79, [#allocation12]
    $region33: #{tpu_custom_call.1} parent=1 // pred_fallthru
      _
    // Predicated region
    $region34: #{tpu_custom_call.1} parent=1 // pred_check
      _
    $region35: #{tpu_custom_call.1} parent=1 // pred_check_branch
      %83 = sbr.rel (0) target = $region37
    $region36: #{tpu_custom_call.1} parent=1 // pred_region
      _
    $region37: #{tpu_custom_call.1} parent=1 // pred_fallthru
      _
    // Predicated region
    $region38: #{tpu_custom_call.1} parent=1 // pred_check
      _
    $region39: #{tpu_custom_call.1} parent=1 // pred_check_branch
      %85 = sbr.rel (0) target = $region41
    $region40: #{tpu_custom_call.1} parent=1 // pred_region
      _
    $region41: #{tpu_custom_call.1} parent=1 // pred_fallthru
      _
    // Predicated region
    $region42: #{tpu_custom_call.1} parent=1 // pred_check
      _
    $region43: #{tpu_custom_call.1} parent=1 // pred_check_branch
      %87 = sbr.rel (0) target = $region45
    $region44: #{tpu_custom_call.1} parent=1 // pred_region
      _
    $region45: #{tpu_custom_call.1} parent=1 // pred_fallthru
      _
    // Predicated region
    $region46: #{tpu_custom_call.1} parent=1 // pred_check
      _
    $region47: #{tpu_custom_call.1} parent=1 // pred_check_branch
      %89 = sbr.rel (0) target = $region49
    $region48: #{tpu_custom_call.1} parent=1 // pred_region
      _
    $region49: #{tpu_custom_call.1} parent=1 // pred_fallthru
      _
    // Predicated region
    $region50: #{tpu_custom_call.1} parent=1 // pred_check
      _
    $region51: #{tpu_custom_call.1} parent=1 // pred_check_branch
      %91 = sbr.rel (0) target = $region53
    $region52: #{tpu_custom_call.1} parent=1 // pred_region
      %92 = dma.done [#allocation7], 768
    $region53: #{tpu_custom_call.1} parent=1 // pred_fallthru
      _
    // Predicated region
    $region54: #{tpu_custom_call.1} parent=1 // pred_check
      _
    $region55: #{tpu_custom_call.1} parent=1 // pred_check_branch
      %94 = sbr.rel (0) target = $region57
    $region56: #{tpu_custom_call.1} parent=1 // pred_region
      %95 = dma.done [#allocation9], 6144
    $region57: #{tpu_custom_call.1} parent=1 // pred_fallthru
      _
    // Predicated region
    $region58: #{tpu_custom_call.1} parent=1 // pred_check
      _
    $region59: #{tpu_custom_call.1} parent=1 // pred_check_branch
      %97 = sbr.rel (0) target = $region61
    $region60: #{tpu_custom_call.1} parent=1 // pred_region
      %98 = dma.done [#allocation9], 48
    $region61: #{tpu_custom_call.1} parent=1 // pred_fallthru
      _
    // Predicated region
    $region62: #{tpu_custom_call.1} parent=1 // pred_check
      _
    $region63: #{tpu_custom_call.1} parent=1 // pred_check_branch
      %100 = sbr.rel (0) target = $region65
    $region64: #{tpu_custom_call.1} parent=1 // pred_region
      %101 = dma.done [#allocation12], 768
    $region65: #{tpu_custom_call.1} parent=1 // pred_fallthru
      _
    // Predicated region
    $region66: #{tpu_custom_call.1} parent=1 // pred_check
      _
    $region67: #{tpu_custom_call.1} parent=1 // pred_check_branch
      %103 = sbr.rel (0) target = $region69
    $region68: #{tpu_custom_call.1} parent=1 // pred_region
      %104 = dma.done [#allocation12], 48
    $region69: #{tpu_custom_call.1} parent=1 // pred_fallthru
      _
    %v105 = vld [vmem:[%s0] sm:$0xff]
    %v106 = vld [vmem:[%s0 + $0x8] sm:$0xff]
    %v107 = vld [vmem:[%s0 + $0x10] sm:$0xff]
    %v108 = vld [vmem:[%s0 + $0x18] sm:$0xff]
    %v109 = vld [vmem:[%s0 + $0x20] sm:$0xff]
    %v110 = vld [vmem:[%s0 + $0x28] sm:$0xff]
    %v111 = vld [vmem:[%s0 + $0x30] sm:$0xff]
    %v112 = vld [vmem:[%s0 + $0x38] sm:$0xff]
    %v113 = vld [vmem:[#allocation6] sm:$0xff]
    %v114 = vld [vmem:[#allocation6 + $0x8] sm:$0xff]
    %v115 = vld [vmem:[#allocation6 + $0x10] sm:$0xff]
    %v116 = vld [vmem:[#allocation6 + $0x18] sm:$0xff]
    %v117 = vld [vmem:[#allocation6 + $0x20] sm:$0xff]
    %v118 = vld [vmem:[#allocation6 + $0x28] sm:$0xff]
    %v119 = vld [vmem:[#allocation10] sm:$0x7]
    %v121 = vlaneseq
    %v122 = vshrl.u32 %v121, 7
    %v123 = vsub.s32 0, %v122
    %v124 = vrot.slane %v119, %v123
    %v125 = vlaneseq
    %v126 = vshrl.u32 %v125, 7
    %v127 = vsub.s32 1, %v126
    %v128 = vrot.slane %v119, %v127
    %v129 = vlaneseq
    %v130 = vshrl.u32 %v129, 7
    %v131 = vsub.s32 2, %v130
    %v132 = vrot.slane %v119, %v131
    %vm136 = vcmask 130048
    %v138 = vsel %vm136, %v105, 0
    %v141 = vsel %vm136, %v106, 0
    %v144 = vsel %vm136, %v107, 0
    %v147 = vsel %vm136, %v108, 0
    %v150 = vsel %vm136, %v109, 0
    %v153 = vsel %vm136, %v110, 0
    %v156 = vsel %vm136, %v111, 0
    %v159 = vsel %vm136, %v112, 0
    %161 = vmatprep.subr.mxu0 %v114
    %162 = vmatpush1.msra.mxu0 %v113
    %163 = vmatprep.subr.mxu0 %v117
    %164 = vmatpush1.msra.mxu0 %v116
    %165 = vmatprep.subr.mxu0 0.0
    %166 = vmatpush1.msra.mxu0 0.0
    %167 = vmatprep.subr.mxu0 0.0
    %168 = vmatpush1.msra.mxu0 0.0
    %169 = vmatprep.subr.mxu0 0.0
    %170 = vmatpush1.msra.mxu0 0.0
    %171 = vmatprep.subr.mxu0 0.0
    %172 = vmatpush1.msra.mxu0 0.0
    %173 = vmatprep.subr.mxu0 0.0
    %174 = vmatpush1.msra.mxu0 0.0
    %175 = vmatprep.subr.mxu0 0.0
    %176 = vmatpush1.msra.mxu0 0.0
    %177 = vmatprep.subr.mxu0 0.0
    %178 = vmatpush1.msra.mxu0 0.0
    %179 = vmatprep.subr.mxu0 0.0
    %180 = vmatpush1.msra.mxu0 0.0
    %181 = vmatprep.subr.mxu0 0.0
    %182 = vmatpush1.msra.mxu0 0.0
    %183 = vmatprep.subr.mxu0 0.0
    %184 = vmatpush1.msra.mxu0 0.0
    %185 = vmatprep.subr.mxu0 0.0
    %186 = vmatpush1.msra.mxu0 0.0
    %187 = vmatprep.subr.mxu0 0.0
    %188 = vmatpush1.msra.mxu0 0.0
    %189 = vmatprep.subr.mxu0 0.0
    %190 = vmatpush1.msra.mxu0 0.0
    %191 = vmatprep.subr.mxu0 0.0
    %192 = vmatpush1.msra.mxu0 0.0
    %193 = vmatprep.subr.mxu0 0.0
    %194 = vmatpush1.msra.mxu0 0.0
    %195 = vmatprep.subr.mxu0 0.0
    %196 = vmatpush1.msra.mxu0 0.0
    %197 = vmatprep.subr.mxu0 0.0
    %198 = vmatpush1.msra.mxu0 0.0
    %199 = vmatprep.subr.mxu0 0.0
    %200 = vmatpush1.msra.mxu0 0.0
    %201 = vmatprep.subr.mxu0 0.0
    %202 = vmatpush1.msra.mxu0 0.0
    %203 = vmatprep.subr.mxu0 0.0
    %204 = vmatpush1.msra.mxu0 0.0
    %205 = vmatprep.subr.mxu0 0.0
    %206 = vmatpush1.msra.mxu0 0.0
    %207 = vmatprep.subr.mxu0 0.0
    %208 = vmatpush1.msra.mxu0 0.0
    %209 = vmatprep.subr.mxu0 0.0
    %210 = vmatpush1.msra.mxu0 0.0
    %211 = vmatprep.subr.mxu0 0.0
    %212 = vmatpush1.msra.mxu0 0.0
    %213 = vmatprep.subr.mxu0 0.0
    %214 = vmatpush1.msra.mxu0 0.0
    %215 = vmatprep.subr.mxu0 0.0
    %216 = vmatpush1.msra.mxu0 0.0
    %217 = vmatprep.subr.mxu0 0.0
    %218 = vmatpush1.msra.mxu0 0.0
    %219 = vmatprep.subr.mxu0 0.0
    %220 = vmatpush1.msra.mxu0 0.0
    %221 = vmatprep.subr.mxu0 0.0
    %222 = vmatpush1.msra.mxu0 0.0
    %223 = vmatprep.subr.mxu0 0.0
    %224 = vmatpush1.msra.mxu0 0.0
    %225 = vmatprep.mubr.f32.mxu0 0.0
    %226 = vmatmul.mubr.f32.gmra.mrb[0].mxu0 %v138
    %v227 = vpop.f32.mrb[0].mxu0
    %v228 = vadd.f32 %v124, %v227
    %v229 = vpop.f32.mrb[0].mxu0
    %v230 = vadd.f32 %v128, %v229
    %231 = vmatprep.mubr.f32.mxu0 0.0
    %232 = vmatmul.mubr.f32.gmra.mrb[0].mxu0 %v141
    %v233 = vpop.f32.mrb[0].mxu0
    %v234 = vadd.f32 %v124, %v233
    %v235 = vpop.f32.mrb[0].mxu0
    %v236 = vadd.f32 %v128, %v235
    %237 = vmatprep.mubr.f32.mxu0 0.0
    %238 = vmatmul.mubr.f32.gmra.mrb[0].mxu0 %v144
    %v239 = vpop.f32.mrb[0].mxu0
    %v240 = vadd.f32 %v124, %v239
    %v241 = vpop.f32.mrb[0].mxu0
    %v242 = vadd.f32 %v128, %v241
    %243 = vmatprep.mubr.f32.mxu0 0.0
    %244 = vmatmul.mubr.f32.gmra.mrb[0].mxu0 %v147
    %v245 = vpop.f32.mrb[0].mxu0
    %v246 = vadd.f32 %v124, %v245
    %v247 = vpop.f32.mrb[0].mxu0
    %v248 = vadd.f32 %v128, %v247
    %249 = vmatprep.mubr.f32.mxu0 0.0
    %250 = vmatmul.mubr.f32.gmra.mrb[0].mxu0 %v150
    %v251 = vpop.f32.mrb[0].mxu0
    %v252 = vadd.f32 %v124, %v251
    %v253 = vpop.f32.mrb[0].mxu0
    %v254 = vadd.f32 %v128, %v253
    %255 = vmatprep.mubr.f32.mxu0 0.0
    %256 = vmatmul.mubr.f32.gmra.mrb[0].mxu0 %v153
    %v257 = vpop.f32.mrb[0].mxu0
    %v258 = vadd.f32 %v124, %v257
    %v259 = vpop.f32.mrb[0].mxu0
    %v260 = vadd.f32 %v128, %v259
    %261 = vmatprep.mubr.f32.mxu0 0.0
    %262 = vmatmul.mubr.f32.gmra.mrb[0].mxu0 %v156
    %v263 = vpop.f32.mrb[0].mxu0
    %v264 = vadd.f32 %v124, %v263
    %v265 = vpop.f32.mrb[0].mxu0
    %v266 = vadd.f32 %v128, %v265
    %267 = vmatprep.mubr.f32.mxu0 0.0
    %268 = vmatmul.mubr.f32.gmra.mrb[0].mxu0 %v159
    %v269 = vpop.f32.mrb[0].mxu0
    %v270 = vadd.f32 %v124, %v269
    %v271 = vpop.f32.mrb[0].mxu0
    %v272 = vadd.f32 %v128, %v271
    %273 = vdwg.mxu0
    %274 = vmatprep.subr.mxu0 0.0
    %275 = vmatpush1.msra.mxu0 %v115
    %276 = vmatprep.subr.mxu0 0.0
    %277 = vmatpush1.msra.mxu0 %v118
    %278 = vmatprep.subr.mxu0 0.0
    %279 = vmatpush1.msra.mxu0 0.0
    %280 = vmatprep.subr.mxu0 0.0
    %281 = vmatpush1.msra.mxu0 0.0
    %282 = vmatprep.subr.mxu0 0.0
    %283 = vmatpush1.msra.mxu0 0.0
    %284 = vmatprep.subr.mxu0 0.0
    %285 = vmatpush1.msra.mxu0 0.0
    %286 = vmatprep.subr.mxu0 0.0
    %287 = vmatpush1.msra.mxu0 0.0
    %288 = vmatprep.subr.mxu0 0.0
    %289 = vmatpush1.msra.mxu0 0.0
    %290 = vmatprep.subr.mxu0 0.0
    %291 = vmatpush1.msra.mxu0 0.0
    %292 = vmatprep.subr.mxu0 0.0
    %293 = vmatpush1.msra.mxu0 0.0
    %294 = vmatprep.subr.mxu0 0.0
    %295 = vmatpush1.msra.mxu0 0.0
    %296 = vmatprep.subr.mxu0 0.0
    %297 = vmatpush1.msra.mxu0 0.0
    %298 = vmatprep.subr.mxu0 0.0
    %299 = vmatpush1.msra.mxu0 0.0
    %300 = vmatprep.subr.mxu0 0.0
    %301 = vmatpush1.msra.mxu0 0.0
    %302 = vmatprep.subr.mxu0 0.0
    %303 = vmatpush1.msra.mxu0 0.0
    %304 = vmatprep.subr.mxu0 0.0
    %305 = vmatpush1.msra.mxu0 0.0
    %306 = vmatprep.subr.mxu0 0.0
    %307 = vmatpush1.msra.mxu0 0.0
    %308 = vmatprep.subr.mxu0 0.0
    %309 = vmatpush1.msra.mxu0 0.0
    %310 = vmatprep.subr.mxu0 0.0
    %311 = vmatpush1.msra.mxu0 0.0
    %312 = vmatprep.subr.mxu0 0.0
    %313 = vmatpush1.msra.mxu0 0.0
    %314 = vmatprep.subr.mxu0 0.0
    %315 = vmatpush1.msra.mxu0 0.0
    %316 = vmatprep.subr.mxu0 0.0
    %317 = vmatpush1.msra.mxu0 0.0
    %318 = vmatprep.subr.mxu0 0.0
    %319 = vmatpush1.msra.mxu0 0.0
    %320 = vmatprep.subr.mxu0 0.0
    %321 = vmatpush1.msra.mxu0 0.0
    %322 = vmatprep.subr.mxu0 0.0
    %323 = vmatpush1.msra.mxu0 0.0
    %324 = vmatprep.subr.mxu0 0.0
    %325 = vmatpush1.msra.mxu0 0.0
    %326 = vmatprep.subr.mxu0 0.0
    %327 = vmatpush1.msra.mxu0 0.0
    %328 = vmatprep.subr.mxu0 0.0
    %329 = vmatpush1.msra.mxu0 0.0
    %330 = vmatprep.subr.mxu0 0.0
    %331 = vmatpush1.msra.mxu0 0.0
    %332 = vmatprep.subr.mxu0 0.0
    %333 = vmatpush1.msra.mxu0 0.0
    %334 = vmatprep.subr.mxu0 0.0
    %335 = vmatpush1.msra.mxu0 0.0
    %336 = vmatprep.subr.mxu0 0.0
    %337 = vmatpush1.msra.mxu0 0.0
    %338 = vmatprep.mubr.f32.mxu0 0.0
    %339 = vmatmul.mubr.f32.gmra.mrb[0].mxu0 %v138
    %v340 = vpop.f32.mrb[0].mxu0
    %v341 = vadd.f32 %v132, %v340
    %v342 = vpop.f32.mrb[0].mxu0
    %343 = vmatprep.mubr.f32.mxu0 0.0
    %344 = vmatmul.mubr.f32.gmra.mrb[0].mxu0 %v141
    %v345 = vpop.f32.mrb[0].mxu0
    %v346 = vadd.f32 %v132, %v345
    %v347 = vpop.f32.mrb[0].mxu0
    %348 = vmatprep.mubr.f32.mxu0 0.0
    %349 = vmatmul.mubr.f32.gmra.mrb[0].mxu0 %v144
    %v350 = vpop.f32.mrb[0].mxu0
    %v351 = vadd.f32 %v132, %v350
    %v352 = vpop.f32.mrb[0].mxu0
    %353 = vmatprep.mubr.f32.mxu0 0.0
    %354 = vmatmul.mubr.f32.gmra.mrb[0].mxu0 %v147
    %v355 = vpop.f32.mrb[0].mxu0
    %v356 = vadd.f32 %v132, %v355
    %v357 = vpop.f32.mrb[0].mxu0
    %358 = vmatprep.mubr.f32.mxu0 0.0
    %359 = vmatmul.mubr.f32.gmra.mrb[0].mxu0 %v150
    %v360 = vpop.f32.mrb[0].mxu0
    %v361 = vadd.f32 %v132, %v360
    %v362 = vpop.f32.mrb[0].mxu0
    %363 = vmatprep.mubr.f32.mxu0 0.0
    %364 = vmatmul.mubr.f32.gmra.mrb[0].mxu0 %v153
    %v365 = vpop.f32.mrb[0].mxu0
    %v366 = vadd.f32 %v132, %v365
    %v367 = vpop.f32.mrb[0].mxu0
    %368 = vmatprep.mubr.f32.mxu0 0.0
    %369 = vmatmul.mubr.f32.gmra.mrb[0].mxu0 %v156
    %v370 = vpop.f32.mrb[0].mxu0
    %v371 = vadd.f32 %v132, %v370
    %v372 = vpop.f32.mrb[0].mxu0
    %373 = vmatprep.mubr.f32.mxu0 0.0
    %374 = vmatmul.mubr.f32.gmra.mrb[0].mxu0 %v159
    %v375 = vpop.f32.mrb[0].mxu0
    %v376 = vadd.f32 %v132, %v375
    %v377 = vpop.f32.mrb[0].mxu0
    %378 = vdwg.mxu0
    %379 = vst [vmem:[#allocation2] sm:$0xff] %v228
    %380 = vst [vmem:[#allocation2 + $0x8] sm:$0xff] %v230
    %381 = vst [vmem:[#allocation2 + $0x10] sm:$0xff] %v341
    %382 = vst [vmem:[#allocation2 + $0x18] sm:$0xff] %v234
    %383 = vst [vmem:[#allocation2 + $0x20] sm:$0xff] %v236
    %384 = vst [vmem:[#allocation2 + $0x28] sm:$0xff] %v346
    %385 = vst [vmem:[#allocation2 + $0x30] sm:$0xff] %v240
    %386 = vst [vmem:[#allocation2 + $0x38] sm:$0xff] %v242
    %387 = vst [vmem:[#allocation2 + $0x40] sm:$0xff] %v351
    %388 = vst [vmem:[#allocation2 + $0x48] sm:$0xff] %v246
    %389 = vst [vmem:[#allocation2 + $0x50] sm:$0xff] %v248
    %390 = vst [vmem:[#allocation2 + $0x58] sm:$0xff] %v356
    %391 = vst [vmem:[#allocation2 + $0x60] sm:$0xff] %v252
    %392 = vst [vmem:[#allocation2 + $0x68] sm:$0xff] %v254
    %393 = vst [vmem:[#allocation2 + $0x70] sm:$0xff] %v361
    %394 = vst [vmem:[#allocation2 + $0x78] sm:$0xff] %v258
    %395 = vst [vmem:[#allocation2 + $0x80] sm:$0xff] %v260
    %396 = vst [vmem:[#allocation2 + $0x88] sm:$0xff] %v366
    %397 = vst [vmem:[#allocation2 + $0x90] sm:$0xff] %v264
    %398 = vst [vmem:[#allocation2 + $0x98] sm:$0xff] %v266
    %399 = vst [vmem:[#allocation2 + $0xa0] sm:$0xff] %v371
    %400 = vst [vmem:[#allocation2 + $0xa8] sm:$0xff] %v270
    %401 = vst [vmem:[#allocation2 + $0xb0] sm:$0xff] %v272
    %402 = vst [vmem:[#allocation2 + $0xb8] sm:$0xff] %v376
    %v403 = vld [vmem:[#allocation11] sm:$0xff]
    %v404 = vld [vmem:[#allocation11 + $0x8] sm:$0xff]
    %v405 = vld [vmem:[#allocation11 + $0x10] sm:$0xff]
    %v406 = vld [vmem:[#allocation11 + $0x18] sm:$0xff]
    %v407 = vld [vmem:[#allocation11 + $0x20] sm:$0xff]
    %v408 = vld [vmem:[#allocation11 + $0x28] sm:$0xff]
    %v409 = vld [vmem:[#allocation13] sm:$0x7]
    %v411 = vlaneseq
    %v412 = vshrl.u32 %v411, 7
    %v413 = vsub.s32 0, %v412
    %v414 = vrot.slane %v409, %v413
    %v415 = vlaneseq
    %v416 = vshrl.u32 %v415, 7
    %v417 = vsub.s32 1, %v416
    %v418 = vrot.slane %v409, %v417
    %v419 = vlaneseq
    %v420 = vshrl.u32 %v419, 7
    %v421 = vsub.s32 2, %v420
    %v422 = vrot.slane %v409, %v421
    %426 = vmatprep.subr.mxu0 %v404
    %427 = vmatpush1.msra.mxu0 %v403
    %428 = vmatprep.subr.mxu0 %v407
    %429 = vmatpush1.msra.mxu0 %v406
    %430 = vmatprep.subr.mxu0 0.0
    %431 = vmatpush1.msra.mxu0 0.0
    %432 = vmatprep.subr.mxu0 0.0
    %433 = vmatpush1.msra.mxu0 0.0
    %434 = vmatprep.subr.mxu0 0.0
    %435 = vmatpush1.msra.mxu0 0.0
    %436 = vmatprep.subr.mxu0 0.0
    %437 = vmatpush1.msra.mxu0 0.0
    %438 = vmatprep.subr.mxu0 0.0
    %439 = vmatpush1.msra.mxu0 0.0
    %440 = vmatprep.subr.mxu0 0.0
    %441 = vmatpush1.msra.mxu0 0.0
    %442 = vmatprep.subr.mxu0 0.0
    %443 = vmatpush1.msra.mxu0 0.0
    %444 = vmatprep.subr.mxu0 0.0
    %445 = vmatpush1.msra.mxu0 0.0
    %446 = vmatprep.subr.mxu0 0.0
    %447 = vmatpush1.msra.mxu0 0.0
    %448 = vmatprep.subr.mxu0 0.0
    %449 = vmatpush1.msra.mxu0 0.0
    %450 = vmatprep.subr.mxu0 0.0
    %451 = vmatpush1.msra.mxu0 0.0
    %452 = vmatprep.subr.mxu0 0.0
    %453 = vmatpush1.msra.mxu0 0.0
    %454 = vmatprep.subr.mxu0 0.0
    %455 = vmatpush1.msra.mxu0 0.0
    %456 = vmatprep.subr.mxu0 0.0
    %457 = vmatpush1.msra.mxu0 0.0
    %458 = vmatprep.subr.mxu0 0.0
    %459 = vmatpush1.msra.mxu0 0.0
    %460 = vmatprep.subr.mxu0 0.0
    %461 = vmatpush1.msra.mxu0 0.0
    %462 = vmatprep.subr.mxu0 0.0
    %463 = vmatpush1.msra.mxu0 0.0
    %464 = vmatprep.subr.mxu0 0.0
    %465 = vmatpush1.msra.mxu0 0.0
    %466 = vmatprep.subr.mxu0 0.0
    %467 = vmatpush1.msra.mxu0 0.0
    %468 = vmatprep.subr.mxu0 0.0
    %469 = vmatpush1.msra.mxu0 0.0
    %470 = vmatprep.subr.mxu0 0.0
    %471 = vmatpush1.msra.mxu0 0.0
    %472 = vmatprep.subr.mxu0 0.0
    %473 = vmatpush1.msra.mxu0 0.0
    %474 = vmatprep.subr.mxu0 0.0
    %475 = vmatpush1.msra.mxu0 0.0
    %476 = vmatprep.subr.mxu0 0.0
    %477 = vmatpush1.msra.mxu0 0.0
    %478 = vmatprep.subr.mxu0 0.0
    %479 = vmatpush1.msra.mxu0 0.0
    %480 = vmatprep.subr.mxu0 0.0
    %481 = vmatpush1.msra.mxu0 0.0
    %482 = vmatprep.subr.mxu0 0.0
    %483 = vmatpush1.msra.mxu0 0.0
    %484 = vmatprep.subr.mxu0 0.0
    %485 = vmatpush1.msra.mxu0 0.0
    %486 = vmatprep.subr.mxu0 0.0
    %487 = vmatpush1.msra.mxu0 0.0
    %488 = vmatprep.subr.mxu0 0.0
    %489 = vmatpush1.msra.mxu0 0.0
    %490 = vmatprep.mubr.f32.mxu0 0.0
    %491 = vmatmul.mubr.f32.gmra.mrb[0].mxu0 %v138
    %v492 = vpop.f32.mrb[0].mxu0
    %v493 = vadd.f32 %v414, %v492
    %v494 = vpop.f32.mrb[0].mxu0
    %v495 = vadd.f32 %v418, %v494
    %496 = vmatprep.mubr.f32.mxu0 0.0
    %497 = vmatmul.mubr.f32.gmra.mrb[0].mxu0 %v141
    %v498 = vpop.f32.mrb[0].mxu0
    %v499 = vadd.f32 %v414, %v498
    %v500 = vpop.f32.mrb[0].mxu0
    %v501 = vadd.f32 %v418, %v500
    %502 = vmatprep.mubr.f32.mxu0 0.0
    %503 = vmatmul.mubr.f32.gmra.mrb[0].mxu0 %v144
    %v504 = vpop.f32.mrb[0].mxu0
    %v505 = vadd.f32 %v414, %v504
    %v506 = vpop.f32.mrb[0].mxu0
    %v507 = vadd.f32 %v418, %v506
    %508 = vmatprep.mubr.f32.mxu0 0.0
    %509 = vmatmul.mubr.f32.gmra.mrb[0].mxu0 %v147
    %v510 = vpop.f32.mrb[0].mxu0
    %v511 = vadd.f32 %v414, %v510
    %v512 = vpop.f32.mrb[0].mxu0
    %v513 = vadd.f32 %v418, %v512
    %514 = vmatprep.mubr.f32.mxu0 0.0
    %515 = vmatmul.mubr.f32.gmra.mrb[0].mxu0 %v150
    %v516 = vpop.f32.mrb[0].mxu0
    %v517 = vadd.f32 %v414, %v516
    %v518 = vpop.f32.mrb[0].mxu0
    %v519 = vadd.f32 %v418, %v518
    %520 = vmatprep.mubr.f32.mxu0 0.0
    %521 = vmatmul.mubr.f32.gmra.mrb[0].mxu0 %v153
    %v522 = vpop.f32.mrb[0].mxu0
    %v523 = vadd.f32 %v414, %v522
    %v524 = vpop.f32.mrb[0].mxu0
    %v525 = vadd.f32 %v418, %v524
    %526 = vmatprep.mubr.f32.mxu0 0.0
    %527 = vmatmul.mubr.f32.gmra.mrb[0].mxu0 %v156
    %v528 = vpop.f32.mrb[0].mxu0
    %v529 = vadd.f32 %v414, %v528
    %v530 = vpop.f32.mrb[0].mxu0
    %v531 = vadd.f32 %v418, %v530
    %532 = vmatprep.mubr.f32.mxu0 0.0
    %533 = vmatmul.mubr.f32.gmra.mrb[0].mxu0 %v159
    %v534 = vpop.f32.mrb[0].mxu0
    %v535 = vadd.f32 %v414, %v534
    %v536 = vpop.f32.mrb[0].mxu0
    %v537 = vadd.f32 %v418, %v536
    %538 = vdwg.mxu0
    %539 = vmatprep.subr.mxu0 0.0
    %540 = vmatpush1.msra.mxu0 %v405
    %541 = vmatprep.subr.mxu0 0.0
    %542 = vmatpush1.msra.mxu0 %v408
    %543 = vmatprep.subr.mxu0 0.0
    %544 = vmatpush1.msra.mxu0 0.0
    %545 = vmatprep.subr.mxu0 0.0
    %546 = vmatpush1.msra.mxu0 0.0
    %547 = vmatprep.subr.mxu0 0.0
    %548 = vmatpush1.msra.mxu0 0.0
    %549 = vmatprep.subr.mxu0 0.0
    %550 = vmatpush1.msra.mxu0 0.0
    %551 = vmatprep.subr.mxu0 0.0
    %552 = vmatpush1.msra.mxu0 0.0
    %553 = vmatprep.subr.mxu0 0.0
    %554 = vmatpush1.msra.mxu0 0.0
    %555 = vmatprep.subr.mxu0 0.0
    %556 = vmatpush1.msra.mxu0 0.0
    %557 = vmatprep.subr.mxu0 0.0
    %558 = vmatpush1.msra.mxu0 0.0
    %559 = vmatprep.subr.mxu0 0.0
    %560 = vmatpush1.msra.mxu0 0.0
    %561 = vmatprep.subr.mxu0 0.0
    %562 = vmatpush1.msra.mxu0 0.0
    %563 = vmatprep.subr.mxu0 0.0
    %564 = vmatpush1.msra.mxu0 0.0
    %565 = vmatprep.subr.mxu0 0.0
    %566 = vmatpush1.msra.mxu0 0.0
    %567 = vmatprep.subr.mxu0 0.0
    %568 = vmatpush1.msra.mxu0 0.0
    %569 = vmatprep.subr.mxu0 0.0
    %570 = vmatpush1.msra.mxu0 0.0
    %571 = vmatprep.subr.mxu0 0.0
    %572 = vmatpush1.msra.mxu0 0.0
    %573 = vmatprep.subr.mxu0 0.0
    %574 = vmatpush1.msra.mxu0 0.0
    %575 = vmatprep.subr.mxu0 0.0
    %576 = vmatpush1.msra.mxu0 0.0
    %577 = vmatprep.subr.mxu0 0.0
    %578 = vmatpush1.msra.mxu0 0.0
    %579 = vmatprep.subr.mxu0 0.0
    %580 = vmatpush1.msra.mxu0 0.0
    %581 = vmatprep.subr.mxu0 0.0
    %582 = vmatpush1.msra.mxu0 0.0
    %583 = vmatprep.subr.mxu0 0.0
    %584 = vmatpush1.msra.mxu0 0.0
    %585 = vmatprep.subr.mxu0 0.0
    %586 = vmatpush1.msra.mxu0 0.0
    %587 = vmatprep.subr.mxu0 0.0
    %588 = vmatpush1.msra.mxu0 0.0
    %589 = vmatprep.subr.mxu0 0.0
    %590 = vmatpush1.msra.mxu0 0.0
    %591 = vmatprep.subr.mxu0 0.0
    %592 = vmatpush1.msra.mxu0 0.0
    %593 = vmatprep.subr.mxu0 0.0
    %594 = vmatpush1.msra.mxu0 0.0
    %595 = vmatprep.subr.mxu0 0.0
    %596 = vmatpush1.msra.mxu0 0.0
    %597 = vmatprep.subr.mxu0 0.0
    %598 = vmatpush1.msra.mxu0 0.0
    %599 = vmatprep.subr.mxu0 0.0
    %600 = vmatpush1.msra.mxu0 0.0
    %601 = vmatprep.subr.mxu0 0.0
    %602 = vmatpush1.msra.mxu0 0.0
    %603 = vmatprep.mubr.f32.mxu0 0.0
    %604 = vmatmul.mubr.f32.gmra.mrb[0].mxu0 %v138
    %v605 = vpop.f32.mrb[0].mxu0
    %v606 = vadd.f32 %v422, %v605
    %v607 = vpop.f32.mrb[0].mxu0
    %608 = vmatprep.mubr.f32.mxu0 0.0
    %609 = vmatmul.mubr.f32.gmra.mrb[0].mxu0 %v141
    %v610 = vpop.f32.mrb[0].mxu0
    %v611 = vadd.f32 %v422, %v610
    %v612 = vpop.f32.mrb[0].mxu0
    %613 = vmatprep.mubr.f32.mxu0 0.0
    %614 = vmatmul.mubr.f32.gmra.mrb[0].mxu0 %v144
    %v615 = vpop.f32.mrb[0].mxu0
    %v616 = vadd.f32 %v422, %v615
    %v617 = vpop.f32.mrb[0].mxu0
    %618 = vmatprep.mubr.f32.mxu0 0.0
    %619 = vmatmul.mubr.f32.gmra.mrb[0].mxu0 %v147
    %v620 = vpop.f32.mrb[0].mxu0
    %v621 = vadd.f32 %v422, %v620
    %v622 = vpop.f32.mrb[0].mxu0
    %623 = vmatprep.mubr.f32.mxu0 0.0
    %624 = vmatmul.mubr.f32.gmra.mrb[0].mxu0 %v150
    %v625 = vpop.f32.mrb[0].mxu0
    %v626 = vadd.f32 %v422, %v625
    %v627 = vpop.f32.mrb[0].mxu0
    %628 = vmatprep.mubr.f32.mxu0 0.0
    %629 = vmatmul.mubr.f32.gmra.mrb[0].mxu0 %v153
    %v630 = vpop.f32.mrb[0].mxu0
    %v631 = vadd.f32 %v422, %v630
    %v632 = vpop.f32.mrb[0].mxu0
    %633 = vmatprep.mubr.f32.mxu0 0.0
    %634 = vmatmul.mubr.f32.gmra.mrb[0].mxu0 %v156
    %v635 = vpop.f32.mrb[0].mxu0
    %v636 = vadd.f32 %v422, %v635
    %v637 = vpop.f32.mrb[0].mxu0
    %638 = vmatprep.mubr.f32.mxu0 0.0
    %639 = vmatmul.mubr.f32.gmra.mrb[0].mxu0 %v159
    %v640 = vpop.f32.mrb[0].mxu0
    %v641 = vadd.f32 %v422, %v640
    %v642 = vpop.f32.mrb[0].mxu0
    %643 = vdwg.mxu0
    %644 = vst [vmem:[#allocation3] sm:$0xff] %v493
    %645 = vst [vmem:[#allocation3 + $0x8] sm:$0xff] %v495
    %646 = vst [vmem:[#allocation3 + $0x10] sm:$0xff] %v606
    %647 = vst [vmem:[#allocation3 + $0x18] sm:$0xff] %v499
    %648 = vst [vmem:[#allocation3 + $0x20] sm:$0xff] %v501
    %649 = vst [vmem:[#allocation3 + $0x28] sm:$0xff] %v611
    %650 = vst [vmem:[#allocation3 + $0x30] sm:$0xff] %v505
    %651 = vst [vmem:[#allocation3 + $0x38] sm:$0xff] %v507
    %652 = vst [vmem:[#allocation3 + $0x40] sm:$0xff] %v616
    %653 = vst [vmem:[#allocation3 + $0x48] sm:$0xff] %v511
    %654 = vst [vmem:[#allocation3 + $0x50] sm:$0xff] %v513
    %655 = vst [vmem:[#allocation3 + $0x58] sm:$0xff] %v621
    %656 = vst [vmem:[#allocation3 + $0x60] sm:$0xff] %v517
    %657 = vst [vmem:[#allocation3 + $0x68] sm:$0xff] %v519
    %658 = vst [vmem:[#allocation3 + $0x70] sm:$0xff] %v626
    %659 = vst [vmem:[#allocation3 + $0x78] sm:$0xff] %v523
    %660 = vst [vmem:[#allocation3 + $0x80] sm:$0xff] %v525
    %661 = vst [vmem:[#allocation3 + $0x88] sm:$0xff] %v631
    %662 = vst [vmem:[#allocation3 + $0x90] sm:$0xff] %v529
    %663 = vst [vmem:[#allocation3 + $0x98] sm:$0xff] %v531
    %664 = vst [vmem:[#allocation3 + $0xa0] sm:$0xff] %v636
    %665 = vst [vmem:[#allocation3 + $0xa8] sm:$0xff] %v535
    %666 = vst [vmem:[#allocation3 + $0xb0] sm:$0xff] %v537
    %667 = vst [vmem:[#allocation3 + $0xb8] sm:$0xff] %v641
    %v668 = vld [vmem:[#allocation8] sm:$0xff]
    %v669 = vld [vmem:[#allocation8 + $0x8] sm:$0xff]
    %v670 = vld [vmem:[#allocation8 + $0x10] sm:$0xff]
    %v671 = vld [vmem:[#allocation8 + $0x18] sm:$0xff]
    %v672 = vld [vmem:[#allocation8 + $0x20] sm:$0xff]
    %v673 = vld [vmem:[#allocation8 + $0x28] sm:$0xff]
    %v674 = vld [vmem:[#allocation8 + $0x30] sm:$0xff]
    %v675 = vld [vmem:[#allocation8 + $0x38] sm:$0xff]
    %v676 = vld [vmem:[#allocation8 + $0x40] sm:$0xff]
    %v677 = vld [vmem:[#allocation8 + $0x48] sm:$0xff]
    %v678 = vld [vmem:[#allocation8 + $0x50] sm:$0xff]
    %v679 = vld [vmem:[#allocation8 + $0x58] sm:$0xff]
    %v680 = vld [vmem:[#allocation8 + $0x60] sm:$0xff]
    %v681 = vld [vmem:[#allocation8 + $0x68] sm:$0xff]
    %v682 = vld [vmem:[#allocation8 + $0x70] sm:$0xff]
    %v683 = vld [vmem:[#allocation8 + $0x78] sm:$0xff]
    %v684 = vld [vmem:[#allocation8 + $0x80] sm:$0xff]
    %v685 = vld [vmem:[#allocation8 + $0x88] sm:$0xff]
    %v686 = vld [vmem:[#allocation8 + $0x90] sm:$0xff]
    %v687 = vld [vmem:[#allocation8 + $0x98] sm:$0xff]
    %v688 = vld [vmem:[#allocation8 + $0xa0] sm:$0xff]
    %v689 = vld [vmem:[#allocation8 + $0xa8] sm:$0xff]
    %v690 = vld [vmem:[#allocation8 + $0xb0] sm:$0xff]
    %v691 = vld [vmem:[#allocation8 + $0xb8] sm:$0xff]
    %v692 = vld [vmem:[#allocation8 + $0xc0] sm:$0xff]
    %v693 = vld [vmem:[#allocation8 + $0xc8] sm:$0xff]
    %v694 = vld [vmem:[#allocation8 + $0xd0] sm:$0xff]
    %v695 = vld [vmem:[#allocation8 + $0xd8] sm:$0xff]
    %v696 = vld [vmem:[#allocation8 + $0xe0] sm:$0xff]
    %v697 = vld [vmem:[#allocation8 + $0xe8] sm:$0xff]
    %v698 = vld [vmem:[#allocation8 + $0xf0] sm:$0xff]
    %v699 = vld [vmem:[#allocation8 + $0xf8] sm:$0xff]
    %v700 = vld [vmem:[#allocation8 + $0x100] sm:$0xff]
    %v701 = vld [vmem:[#allocation8 + $0x108] sm:$0xff]
    %v702 = vld [vmem:[#allocation8 + $0x110] sm:$0xff]
    %v703 = vld [vmem:[#allocation8 + $0x118] sm:$0xff]
    %v704 = vld [vmem:[#allocation8 + $0x120] sm:$0xff]
    %v705 = vld [vmem:[#allocation8 + $0x128] sm:$0xff]
    %v706 = vld [vmem:[#allocation8 + $0x130] sm:$0xff]
    %v707 = vld [vmem:[#allocation8 + $0x138] sm:$0xff]
    %v708 = vld [vmem:[#allocation8 + $0x140] sm:$0xff]
    %v709 = vld [vmem:[#allocation8 + $0x148] sm:$0xff]
    %v710 = vld [vmem:[#allocation8 + $0x150] sm:$0xff]
    %v711 = vld [vmem:[#allocation8 + $0x158] sm:$0xff]
    %v712 = vld [vmem:[#allocation8 + $0x160] sm:$0xff]
    %v713 = vld [vmem:[#allocation8 + $0x168] sm:$0xff]
    %v714 = vld [vmem:[#allocation8 + $0x170] sm:$0xff]
    %v715 = vld [vmem:[#allocation8 + $0x178] sm:$0xff]
    %v716 = vld [vmem:[%s6] sm:$0xff]
    %v717 = vld [vmem:[%s6 + $0x8] sm:$0xff]
    %v718 = vld [vmem:[%s6 + $0x10] sm:$0xff]
    %v719 = vld [vmem:[%s6 + $0x18] sm:$0xff]
    %v720 = vld [vmem:[%s6 + $0x20] sm:$0xff]
    %v721 = vld [vmem:[%s6 + $0x28] sm:$0xff]
    %v722 = vld [vmem:[%s6 + $0x30] sm:$0xff]
    %v723 = vld [vmem:[%s6 + $0x38] sm:$0xff]
    %v724 = vld [vmem:[%s6 + $0x40] sm:$0xff]
    %v725 = vld [vmem:[%s6 + $0x48] sm:$0xff]
    %v726 = vld [vmem:[%s6 + $0x50] sm:$0xff]
    %v727 = vld [vmem:[%s6 + $0x58] sm:$0xff]
    %v728 = vld [vmem:[%s6 + $0x60] sm:$0xff]
    %v729 = vld [vmem:[%s6 + $0x68] sm:$0xff]
    %v730 = vld [vmem:[%s6 + $0x70] sm:$0xff]
    %v731 = vld [vmem:[%s6 + $0x78] sm:$0xff]
    %v732 = vld [vmem:[%s6 + $0x80] sm:$0xff]
    %v733 = vld [vmem:[%s6 + $0x88] sm:$0xff]
    %v734 = vld [vmem:[%s6 + $0x90] sm:$0xff]
    %v735 = vld [vmem:[%s6 + $0x98] sm:$0xff]
    %v736 = vld [vmem:[%s6 + $0xa0] sm:$0xff]
    %v737 = vld [vmem:[%s6 + $0xa8] sm:$0xff]
    %v738 = vld [vmem:[%s6 + $0xb0] sm:$0xff]
    %v739 = vld [vmem:[%s6 + $0xb8] sm:$0xff]
    %v740 = vld [vmem:[%s6 + $0xc0] sm:$0xff]
    %v741 = vld [vmem:[%s6 + $0xc8] sm:$0xff]
    %v742 = vld [vmem:[%s6 + $0xd0] sm:$0xff]
    %v743 = vld [vmem:[%s6 + $0xd8] sm:$0xff]
    %v744 = vld [vmem:[%s6 + $0xe0] sm:$0xff]
    %v745 = vld [vmem:[%s6 + $0xe8] sm:$0xff]
    %v746 = vld [vmem:[%s6 + $0xf0] sm:$0xff]
    %v747 = vld [vmem:[%s6 + $0xf8] sm:$0xff]
    %v748 = vld [vmem:[%s6 + $0x100] sm:$0xff]
    %v749 = vld [vmem:[%s6 + $0x108] sm:$0xff]
    %v750 = vld [vmem:[%s6 + $0x110] sm:$0xff]
    %v751 = vld [vmem:[%s6 + $0x118] sm:$0xff]
    %v752 = vld [vmem:[%s6 + $0x120] sm:$0xff]
    %v753 = vld [vmem:[%s6 + $0x128] sm:$0xff]
    %v754 = vld [vmem:[%s6 + $0x130] sm:$0xff]
    %v755 = vld [vmem:[%s6 + $0x138] sm:$0xff]
    %v756 = vld [vmem:[%s6 + $0x140] sm:$0xff]
    %v757 = vld [vmem:[%s6 + $0x148] sm:$0xff]
    %v758 = vld [vmem:[%s6 + $0x150] sm:$0xff]
    %v759 = vld [vmem:[%s6 + $0x158] sm:$0xff]
    %v760 = vld [vmem:[%s6 + $0x160] sm:$0xff]
    %v761 = vld [vmem:[%s6 + $0x168] sm:$0xff]
    %v762 = vld [vmem:[%s6 + $0x170] sm:$0xff]
    %v763 = vld [vmem:[%s6 + $0x178] sm:$0xff]
    %v764 = vld [vmem:[%s4] sm:$0x1]
    %v765 = vld [vmem:[%s8] sm:$0x1]
    %s766 = smul.u32 0, 3
    %s767 = smul.addr %s766, 8
    %s768 = scalar_lea.vmem [#allocation2], %s767
    %v769 = vld [vmem:[%s768] sm:$0xff]
    %v770 = vld [vmem:[%s768 + $0x8] sm:$0xff]
    %v771 = vld [vmem:[%s768 + $0x10] sm:$0xff]
    %772 = vmatprep.subr.mxu0 %v669
    %773 = vmatpush1.msra.mxu0 %v668
    %774 = vmatprep.subr.mxu0 %v672
    %775 = vmatpush1.msra.mxu0 %v671
    %776 = vmatprep.subr.mxu0 %v675
    %777 = vmatpush1.msra.mxu0 %v674
    %778 = vmatprep.subr.mxu0 %v678
    %779 = vmatpush1.msra.mxu0 %v677
    %780 = vmatprep.subr.mxu0 %v681
    %781 = vmatpush1.msra.mxu0 %v680
    %782 = vmatprep.subr.mxu0 %v684
    %783 = vmatpush1.msra.mxu0 %v683
    %784 = vmatprep.subr.mxu0 %v687
    %785 = vmatpush1.msra.mxu0 %v686
    %786 = vmatprep.subr.mxu0 %v690
    %787 = vmatpush1.msra.mxu0 %v689
    %788 = vmatprep.subr.mxu0 %v693
    %789 = vmatpush1.msra.mxu0 %v692
    %790 = vmatprep.subr.mxu0 %v696
    %791 = vmatpush1.msra.mxu0 %v695
    %792 = vmatprep.subr.mxu0 %v699
    %793 = vmatpush1.msra.mxu0 %v698
    %794 = vmatprep.subr.mxu0 %v702
    %795 = vmatpush1.msra.mxu0 %v701
    %796 = vmatprep.subr.mxu0 %v705
    %797 = vmatpush1.msra.mxu0 %v704
    %798 = vmatprep.subr.mxu0 %v708
    %799 = vmatpush1.msra.mxu0 %v707
    %800 = vmatprep.subr.mxu0 %v711
    %801 = vmatpush1.msra.mxu0 %v710
    %802 = vmatprep.subr.mxu0 %v714
    %803 = vmatpush1.msra.mxu0 %v713
    %804 = vmatprep.subr.mxu0 0.0
    %805 = vmatpush1.msra.mxu0 0.0
    %806 = vmatprep.subr.mxu0 0.0
    %807 = vmatpush1.msra.mxu0 0.0
    %808 = vmatprep.subr.mxu0 0.0
    %809 = vmatpush1.msra.mxu0 0.0
    %810 = vmatprep.subr.mxu0 0.0
    %811 = vmatpush1.msra.mxu0 0.0
    %812 = vmatprep.subr.mxu0 0.0
    %813 = vmatpush1.msra.mxu0 0.0
    %814 = vmatprep.subr.mxu0 0.0
    %815 = vmatpush1.msra.mxu0 0.0
    %816 = vmatprep.subr.mxu0 0.0
    %817 = vmatpush1.msra.mxu0 0.0
    %818 = vmatprep.subr.mxu0 0.0
    %819 = vmatpush1.msra.mxu0 0.0
    %820 = vmatprep.subr.mxu0 0.0
    %821 = vmatpush1.msra.mxu0 0.0
    %822 = vmatprep.subr.mxu0 0.0
    %823 = vmatpush1.msra.mxu0 0.0
    %824 = vmatprep.subr.mxu0 0.0
    %825 = vmatpush1.msra.mxu0 0.0
    %826 = vmatprep.subr.mxu0 0.0
    %827 = vmatpush1.msra.mxu0 0.0
    %828 = vmatprep.subr.mxu0 0.0
    %829 = vmatpush1.msra.mxu0 0.0
    %830 = vmatprep.subr.mxu0 0.0
    %831 = vmatpush1.msra.mxu0 0.0
    %832 = vmatprep.subr.mxu0 0.0
    %833 = vmatpush1.msra.mxu0 0.0
    %834 = vmatprep.subr.mxu0 0.0
    %835 = vmatpush1.msra.mxu0 0.0
    %836 = vmatprep.mubr.f32.mxu0 0.0
    %837 = vmatmul.mubr.f32.gmra.mrb[0].mxu0 0.0
    %v838 = vpop.f32.mrb[0].mxu0
    %v839 = vadd.f32 0.0, %v838
    %v840 = vpop.f32.mrb[0].mxu0
    %v841 = vadd.f32 0.0, %v840
    %842 = vdwg.mxu0
    %843 = vmatprep.subr.mxu0 0.0
    %844 = vmatpush1.msra.mxu0 %v670
    %845 = vmatprep.subr.mxu0 0.0
    %846 = vmatpush1.msra.mxu0 %v673
    %847 = vmatprep.subr.mxu0 0.0
    %848 = vmatpush1.msra.mxu0 %v676
    %849 = vmatprep.subr.mxu0 0.0
    %850 = vmatpush1.msra.mxu0 %v679
    %851 = vmatprep.subr.mxu0 0.0
    %852 = vmatpush1.msra.mxu0 %v682
    %853 = vmatprep.subr.mxu0 0.0
    %854 = vmatpush1.msra.mxu0 %v685
    %855 = vmatprep.subr.mxu0 0.0
    %856 = vmatpush1.msra.mxu0 %v688
    %857 = vmatprep.subr.mxu0 0.0
    %858 = vmatpush1.msra.mxu0 %v691
    %859 = vmatprep.subr.mxu0 0.0
    %860 = vmatpush1.msra.mxu0 %v694
    %861 = vmatprep.subr.mxu0 0.0
    %862 = vmatpush1.msra.mxu0 %v697
    %863 = vmatprep.subr.mxu0 0.0
    %864 = vmatpush1.msra.mxu0 %v700
    %865 = vmatprep.subr.mxu0 0.0
    %866 = vmatpush1.msra.mxu0 %v703
    %867 = vmatprep.subr.mxu0 0.0
    %868 = vmatpush1.msra.mxu0 %v706
    %869 = vmatprep.subr.mxu0 0.0
    %870 = vmatpush1.msra.mxu0 %v709
    %871 = vmatprep.subr.mxu0 0.0
    %872 = vmatpush1.msra.mxu0 %v712
    %873 = vmatprep.subr.mxu0 0.0
    %874 = vmatpush1.msra.mxu0 %v715
    %875 = vmatprep.subr.mxu0 0.0
    %876 = vmatpush1.msra.mxu0 0.0
    %877 = vmatprep.subr.mxu0 0.0
    %878 = vmatpush1.msra.mxu0 0.0
    %879 = vmatprep.subr.mxu0 0.0
    %880 = vmatpush1.msra.mxu0 0.0
    %881 = vmatprep.subr.mxu0 0.0
    %882 = vmatpush1.msra.mxu0 0.0
    %883 = vmatprep.subr.mxu0 0.0
    %884 = vmatpush1.msra.mxu0 0.0
    %885 = vmatprep.subr.mxu0 0.0
    %886 = vmatpush1.msra.mxu0 0.0
    %887 = vmatprep.subr.mxu0 0.0
    %888 = vmatpush1.msra.mxu0 0.0
    %889 = vmatprep.subr.mxu0 0.0
    %890 = vmatpush1.msra.mxu0 0.0
    %891 = vmatprep.subr.mxu0 0.0
    %892 = vmatpush1.msra.mxu0 0.0
    %893 = vmatprep.subr.mxu0 0.0
    %894 = vmatpush1.msra.mxu0 0.0
    %895 = vmatprep.subr.mxu0 0.0
    %896 = vmatpush1.msra.mxu0 0.0
    %897 = vmatprep.subr.mxu0 0.0
    %898 = vmatpush1.msra.mxu0 0.0
    %899 = vmatprep.subr.mxu0 0.0
    %900 = vmatpush1.msra.mxu0 0.0
    %901 = vmatprep.subr.mxu0 0.0
    %902 = vmatpush1.msra.mxu0 0.0
    %903 = vmatprep.subr.mxu0 0.0
    %904 = vmatpush1.msra.mxu0 0.0
    %905 = vmatprep.subr.mxu0 0.0
    %906 = vmatpush1.msra.mxu0 0.0
    %907 = vmatprep.mubr.f32.mxu0 0.0
    %908 = vmatmul.mubr.f32.gmra.mrb[0].mxu0 0.0
    %v909 = vpop.f32.mrb[0].mxu0
    %v910 = vadd.f32 0.0, %v909
    %v911 = vpop.f32.mrb[0].mxu0
    %912 = vdwg.mxu0
    %v913 = vadd.f32 %v769, %v839
    %v914 = vxor.u32 %v913, 2147483648
    %v915 = vmul.f32 %v914, 1.442695
    %v916 = vpow.pop %v915
    %v917 = vadd.f32 %v916, 1.0
    %v918 = vrcp.pop %v917
    %v919 = vmul.f32 1.0, %v918
    %v920 = vadd.f32 %v770, %v841
    %v921 = vxor.u32 %v920, 2147483648
    %v922 = vmul.f32 %v921, 1.442695
    %v923 = vpow.pop %v922
    %v924 = vadd.f32 %v923, 1.0
    %v925 = vrcp.pop %v924
    %v926 = vmul.f32 1.0, %v925
    %v928 = vlaneseq
    %v929 = vshrl.u32 %v928, 7
    %v930 = vsub.s32 0, %v929
    %v931 = vrot.slane %v764, %v930
    %v933 = vadd.f32 %v910, %v931
    %v934 = vmul.f32 %v919, %v933
    %v935 = vadd.f32 %v771, %v934
    %v936 = vtanh.pop %v935
    %v937 = vsub.f32 1.0, %v926
    %v938 = vmul.f32 %v937, %v936
    %v939 = vmul.f32 %v926, 0.0
    %v940 = vadd.f32 %v938, %v939
    %s941 = smul.u32 7, 3
    %s942 = smul.addr %s941, 8
    %s943 = scalar_lea.vmem [#allocation3], %s942
    %v944 = vld [vmem:[%s943] sm:$0xff]
    %v945 = vld [vmem:[%s943 + $0x8] sm:$0xff]
    %v946 = vld [vmem:[%s943 + $0x10] sm:$0xff]
    %947 = vmatprep.subr.mxu0 %v717
    %948 = vmatpush1.msra.mxu0 %v716
    %949 = vmatprep.subr.mxu0 %v720
    %950 = vmatpush1.msra.mxu0 %v719
    %951 = vmatprep.subr.mxu0 %v723
    %952 = vmatpush1.msra.mxu0 %v722
    %953 = vmatprep.subr.mxu0 %v726
    %954 = vmatpush1.msra.mxu0 %v725
    %955 = vmatprep.subr.mxu0 %v729
    %956 = vmatpush1.msra.mxu0 %v728
    %957 = vmatprep.subr.mxu0 %v732
    %958 = vmatpush1.msra.mxu0 %v731
    %959 = vmatprep.subr.mxu0 %v735
    %960 = vmatpush1.msra.mxu0 %v734
    %961 = vmatprep.subr.mxu0 %v738
    %962 = vmatpush1.msra.mxu0 %v737
    %963 = vmatprep.subr.mxu0 %v741
    %964 = vmatpush1.msra.mxu0 %v740
    %965 = vmatprep.subr.mxu0 %v744
    %966 = vmatpush1.msra.mxu0 %v743
    %967 = vmatprep.subr.mxu0 %v747
    %968 = vmatpush1.msra.mxu0 %v746
    %969 = vmatprep.subr.mxu0 %v750
    %970 = vmatpush1.msra.mxu0 %v749
    %971 = vmatprep.subr.mxu0 %v753
    %972 = vmatpush1.msra.mxu0 %v752
    %973 = vmatprep.subr.mxu0 %v756
    %974 = vmatpush1.msra.mxu0 %v755
    %975 = vmatprep.subr.mxu0 %v759
    %976 = vmatpush1.msra.mxu0 %v758
    %977 = vmatprep.subr.mxu0 %v762
    %978 = vmatpush1.msra.mxu0 %v761
    %979 = vmatprep.subr.mxu0 0.0
    %980 = vmatpush1.msra.mxu0 0.0
    %981 = vmatprep.subr.mxu0 0.0
    %982 = vmatpush1.msra.mxu0 0.0
    %983 = vmatprep.subr.mxu0 0.0
    %984 = vmatpush1.msra.mxu0 0.0
    %985 = vmatprep.subr.mxu0 0.0
    %986 = vmatpush1.msra.mxu0 0.0
    %987 = vmatprep.subr.mxu0 0.0
    %988 = vmatpush1.msra.mxu0 0.0
    %989 = vmatprep.subr.mxu0 0.0
    %990 = vmatpush1.msra.mxu0 0.0
    %991 = vmatprep.subr.mxu0 0.0
    %992 = vmatpush1.msra.mxu0 0.0
    %993 = vmatprep.subr.mxu0 0.0
    %994 = vmatpush1.msra.mxu0 0.0
    %995 = vmatprep.subr.mxu0 0.0
    %996 = vmatpush1.msra.mxu0 0.0
    %997 = vmatprep.subr.mxu0 0.0
    %998 = vmatpush1.msra.mxu0 0.0
    %999 = vmatprep.subr.mxu0 0.0
    %1000 = vmatpush1.msra.mxu0 0.0
    %1001 = vmatprep.subr.mxu0 0.0
    %1002 = vmatpush1.msra.mxu0 0.0
    %1003 = vmatprep.subr.mxu0 0.0
    %1004 = vmatpush1.msra.mxu0 0.0
    %1005 = vmatprep.subr.mxu0 0.0
    %1006 = vmatpush1.msra.mxu0 0.0
    %1007 = vmatprep.subr.mxu0 0.0
    %1008 = vmatpush1.msra.mxu0 0.0
    %1009 = vmatprep.subr.mxu0 0.0
    %1010 = vmatpush1.msra.mxu0 0.0
    %1011 = vmatprep.mubr.f32.mxu0 0.0
    %1012 = vmatmul.mubr.f32.gmra.mrb[0].mxu0 0.0
    %v1013 = vpop.f32.mrb[0].mxu0
    %v1014 = vadd.f32 0.0, %v1013
    %v1015 = vpop.f32.mrb[0].mxu0
    %v1016 = vadd.f32 0.0, %v1015
    %1017 = vdwg.mxu0
    %1018 = vmatprep.subr.mxu0 0.0
    %1019 = vmatpush1.msra.mxu0 %v718
    %1020 = vmatprep.subr.mxu0 0.0
    %1021 = vmatpush1.msra.mxu0 %v721
    %1022 = vmatprep.subr.mxu0 0.0
    %1023 = vmatpush1.msra.mxu0 %v724
    %1024 = vmatprep.subr.mxu0 0.0
    %1025 = vmatpush1.msra.mxu0 %v727
    %1026 = vmatprep.subr.mxu0 0.0
    %1027 = vmatpush1.msra.mxu0 %v730
    %1028 = vmatprep.subr.mxu0 0.0
    %1029 = vmatpush1.msra.mxu0 %v733
    %1030 = vmatprep.subr.mxu0 0.0
    %1031 = vmatpush1.msra.mxu0 %v736
    %1032 = vmatprep.subr.mxu0 0.0
    %1033 = vmatpush1.msra.mxu0 %v739
    %1034 = vmatprep.subr.mxu0 0.0
    %1035 = vmatpush1.msra.mxu0 %v742
    %1036 = vmatprep.subr.mxu0 0.0
    %1037 = vmatpush1.msra.mxu0 %v745
    %1038 = vmatprep.subr.mxu0 0.0
    %1039 = vmatpush1.msra.mxu0 %v748
    %1040 = vmatprep.subr.mxu0 0.0
    %1041 = vmatpush1.msra.mxu0 %v751
    %1042 = vmatprep.subr.mxu0 0.0
    %1043 = vmatpush1.msra.mxu0 %v754
    %1044 = vmatprep.subr.mxu0 0.0
    %1045 = vmatpush1.msra.mxu0 %v757
    %1046 = vmatprep.subr.mxu0 0.0
    %1047 = vmatpush1.msra.mxu0 %v760
    %1048 = vmatprep.subr.mxu0 0.0
    %1049 = vmatpush1.msra.mxu0 %v763
    %1050 = vmatprep.subr.mxu0 0.0
    %1051 = vmatpush1.msra.mxu0 0.0
    %1052 = vmatprep.subr.mxu0 0.0
    %1053 = vmatpush1.msra.mxu0 0.0
    %1054 = vmatprep.subr.mxu0 0.0
    %1055 = vmatpush1.msra.mxu0 0.0
    %1056 = vmatprep.subr.mxu0 0.0
    %1057 = vmatpush1.msra.mxu0 0.0
    %1058 = vmatprep.subr.mxu0 0.0
    %1059 = vmatpush1.msra.mxu0 0.0
    %1060 = vmatprep.subr.mxu0 0.0
    %1061 = vmatpush1.msra.mxu0 0.0
    %1062 = vmatprep.subr.mxu0 0.0
    %1063 = vmatpush1.msra.mxu0 0.0
    %1064 = vmatprep.subr.mxu0 0.0
    %1065 = vmatpush1.msra.mxu0 0.0
    %1066 = vmatprep.subr.mxu0 0.0
    %1067 = vmatpush1.msra.mxu0 0.0
    %1068 = vmatprep.subr.mxu0 0.0
    %1069 = vmatpush1.msra.mxu0 0.0
    %1070 = vmatprep.subr.mxu0 0.0
    %1071 = vmatpush1.msra.mxu0 0.0
    %1072 = vmatprep.subr.mxu0 0.0
    %1073 = vmatpush1.msra.mxu0 0.0
    %1074 = vmatprep.subr.mxu0 0.0
    %1075 = vmatpush1.msra.mxu0 0.0
    %1076 = vmatprep.subr.mxu0 0.0
    %1077 = vmatpush1.msra.mxu0 0.0
    %1078 = vmatprep.subr.mxu0 0.0
    %1079 = vmatpush1.msra.mxu0 0.0
    %1080 = vmatprep.subr.mxu0 0.0
    %1081 = vmatpush1.msra.mxu0 0.0
    %1082 = vmatprep.mubr.f32.mxu0 0.0
    %1083 = vmatmul.mubr.f32.gmra.mrb[0].mxu0 0.0
    %v1084 = vpop.f32.mrb[0].mxu0
    %v1085 = vadd.f32 0.0, %v1084
    %v1086 = vpop.f32.mrb[0].mxu0
    %1087 = vdwg.mxu0
    %v1088 = vadd.f32 %v944, %v1014
    %v1089 = vxor.u32 %v1088, 2147483648
    %v1090 = vmul.f32 %v1089, 1.442695
    %v1091 = vpow.pop %v1090
    %v1092 = vadd.f32 %v1091, 1.0
    %v1093 = vrcp.pop %v1092
    %v1094 = vmul.f32 1.0, %v1093
    %v1095 = vadd.f32 %v945, %v1016
    %v1096 = vxor.u32 %v1095, 2147483648
    %v1097 = vmul.f32 %v1096, 1.442695
    %v1098 = vpow.pop %v1097
    %v1099 = vadd.f32 %v1098, 1.0
    %v1100 = vrcp.pop %v1099
    %v1101 = vmul.f32 1.0, %v1100
    %v1103 = vlaneseq
    %v1104 = vshrl.u32 %v1103, 7
    %v1105 = vsub.s32 0, %v1104
    %v1106 = vrot.slane %v765, %v1105
    %v1108 = vadd.f32 %v1085, %v1106
    %v1109 = vmul.f32 %v1094, %v1108
    %v1110 = vadd.f32 %v946, %v1109
    %v1111 = vtanh.pop %v1110
    %v1112 = vsub.f32 1.0, %v1101
    %v1113 = vmul.f32 %v1112, %v1111
    %v1114 = vmul.f32 %v1101, 0.0
    %v1115 = vadd.f32 %v1113, %v1114
    %1116 = vst [vmem:[#allocation4] sm:$0xff] %v940
    %s1117 = scalar_lea.vmem [#allocation5], 56
    %1118 = vst [vmem:[%s1117] sm:$0xff] %v1115
    %s1119 = smul.u32 1, 3
    %s1120 = smul.addr %s1119, 8
    %s1121 = scalar_lea.vmem [#allocation2], %s1120
    %v1122 = vld [vmem:[%s1121] sm:$0xff]
    %v1123 = vld [vmem:[%s1121 + $0x8] sm:$0xff]
    %v1124 = vld [vmem:[%s1121 + $0x10] sm:$0xff]
    %1125 = vmatprep.subr.mxu0 %v669
    %1126 = vmatpush1.msra.mxu0 %v668
    %1127 = vmatprep.subr.mxu0 %v672
    %1128 = vmatpush1.msra.mxu0 %v671
    %1129 = vmatprep.subr.mxu0 %v675
    %1130 = vmatpush1.msra.mxu0 %v674
    %1131 = vmatprep.subr.mxu0 %v678
    %1132 = vmatpush1.msra.mxu0 %v677
    %1133 = vmatprep.subr.mxu0 %v681
    %1134 = vmatpush1.msra.mxu0 %v680
    %1135 = vmatprep.subr.mxu0 %v684
    %1136 = vmatpush1.msra.mxu0 %v683
    %1137 = vmatprep.subr.mxu0 %v687
    %1138 = vmatpush1.msra.mxu0 %v686
    %1139 = vmatprep.subr.mxu0 %v690
    %1140 = vmatpush1.msra.mxu0 %v689
    %1141 = vmatprep.subr.mxu0 %v693
    %1142 = vmatpush1.msra.mxu0 %v692
    %1143 = vmatprep.subr.mxu0 %v696
    %1144 = vmatpush1.msra.mxu0 %v695
    %1145 = vmatprep.subr.mxu0 %v699
    %1146 = vmatpush1.msra.mxu0 %v698
    %1147 = vmatprep.subr.mxu0 %v702
    %1148 = vmatpush1.msra.mxu0 %v701
    %1149 = vmatprep.subr.mxu0 %v705
    %1150 = vmatpush1.msra.mxu0 %v704
    %1151 = vmatprep.subr.mxu0 %v708
    %1152 = vmatpush1.msra.mxu0 %v707
    %1153 = vmatprep.subr.mxu0 %v711
    %1154 = vmatpush1.msra.mxu0 %v710
    %1155 = vmatprep.subr.mxu0 %v714
    %1156 = vmatpush1.msra.mxu0 %v713
    %1157 = vmatprep.subr.mxu0 0.0
    %1158 = vmatpush1.msra.mxu0 0.0
    %1159 = vmatprep.subr.mxu0 0.0
    %1160 = vmatpush1.msra.mxu0 0.0
    %1161 = vmatprep.subr.mxu0 0.0
    %1162 = vmatpush1.msra.mxu0 0.0
    %1163 = vmatprep.subr.mxu0 0.0
    %1164 = vmatpush1.msra.mxu0 0.0
    %1165 = vmatprep.subr.mxu0 0.0
    %1166 = vmatpush1.msra.mxu0 0.0
    %1167 = vmatprep.subr.mxu0 0.0
    %1168 = vmatpush1.msra.mxu0 0.0
    %1169 = vmatprep.subr.mxu0 0.0
    %1170 = vmatpush1.msra.mxu0 0.0
    %1171 = vmatprep.subr.mxu0 0.0
    %1172 = vmatpush1.msra.mxu0 0.0
    %1173 = vmatprep.subr.mxu0 0.0
    %1174 = vmatpush1.msra.mxu0 0.0
    %1175 = vmatprep.subr.mxu0 0.0
    %1176 = vmatpush1.msra.mxu0 0.0
    %1177 = vmatprep.subr.mxu0 0.0
    %1178 = vmatpush1.msra.mxu0 0.0
    %1179 = vmatprep.subr.mxu0 0.0
    %1180 = vmatpush1.msra.mxu0 0.0
    %1181 = vmatprep.subr.mxu0 0.0
    %1182 = vmatpush1.msra.mxu0 0.0
    %1183 = vmatprep.subr.mxu0 0.0
    %1184 = vmatpush1.msra.mxu0 0.0
    %1185 = vmatprep.subr.mxu0 0.0
    %1186 = vmatpush1.msra.mxu0 0.0
    %1187 = vmatprep.subr.mxu0 0.0
    %1188 = vmatpush1.msra.mxu0 0.0
    %1189 = vmatprep.mubr.f32.mxu0 0.0
    %1190 = vmatmul.mubr.f32.gmra.mrb[0].mxu0 %v940
    %v1191 = vpop.f32.mrb[0].mxu0
    %v1192 = vadd.f32 0.0, %v1191
    %v1193 = vpop.f32.mrb[0].mxu0
    %v1194 = vadd.f32 0.0, %v1193
    %1195 = vdwg.mxu0
    %1196 = vmatprep.subr.mxu0 0.0
    %1197 = vmatpush1.msra.mxu0 %v670
    %1198 = vmatprep.subr.mxu0 0.0
    %1199 = vmatpush1.msra.mxu0 %v673
    %1200 = vmatprep.subr.mxu0 0.0
    %1201 = vmatpush1.msra.mxu0 %v676
    %1202 = vmatprep.subr.mxu0 0.0
    %1203 = vmatpush1.msra.mxu0 %v679
    %1204 = vmatprep.subr.mxu0 0.0
    %1205 = vmatpush1.msra.mxu0 %v682
    %1206 = vmatprep.subr.mxu0 0.0
    %1207 = vmatpush1.msra.mxu0 %v685
    %1208 = vmatprep.subr.mxu0 0.0
    %1209 = vmatpush1.msra.mxu0 %v688
    %1210 = vmatprep.subr.mxu0 0.0
    %1211 = vmatpush1.msra.mxu0 %v691
    %1212 = vmatprep.subr.mxu0 0.0
    %1213 = vmatpush1.msra.mxu0 %v694
    %1214 = vmatprep.subr.mxu0 0.0
    %1215 = vmatpush1.msra.mxu0 %v697
    %1216 = vmatprep.subr.mxu0 0.0
    %1217 = vmatpush1.msra.mxu0 %v700
    %1218 = vmatprep.subr.mxu0 0.0
    %1219 = vmatpush1.msra.mxu0 %v703
    %1220 = vmatprep.subr.mxu0 0.0
    %1221 = vmatpush1.msra.mxu0 %v706
    %1222 = vmatprep.subr.mxu0 0.0
    %1223 = vmatpush1.msra.mxu0 %v709
    %1224 = vmatprep.subr.mxu0 0.0
    %1225 = vmatpush1.msra.mxu0 %v712
    %1226 = vmatprep.subr.mxu0 0.0
    %1227 = vmatpush1.msra.mxu0 %v715
    %1228 = vmatprep.subr.mxu0 0.0
    %1229 = vmatpush1.msra.mxu0 0.0
    %1230 = vmatprep.subr.mxu0 0.0
    %1231 = vmatpush1.msra.mxu0 0.0
    %1232 = vmatprep.subr.mxu0 0.0
    %1233 = vmatpush1.msra.mxu0 0.0
    %1234 = vmatprep.subr.mxu0 0.0
    %1235 = vmatpush1.msra.mxu0 0.0
    %1236 = vmatprep.subr.mxu0 0.0
    %1237 = vmatpush1.msra.mxu0 0.0
    %1238 = vmatprep.subr.mxu0 0.0
    %1239 = vmatpush1.msra.mxu0 0.0
    %1240 = vmatprep.subr.mxu0 0.0
    %1241 = vmatpush1.msra.mxu0 0.0
    %1242 = vmatprep.subr.mxu0 0.0
    %1243 = vmatpush1.msra.mxu0 0.0
    %1244 = vmatprep.subr.mxu0 0.0
    %1245 = vmatpush1.msra.mxu0 0.0
    %1246 = vmatprep.subr.mxu0 0.0
    %1247 = vmatpush1.msra.mxu0 0.0
    %1248 = vmatprep.subr.mxu0 0.0
    %1249 = vmatpush1.msra.mxu0 0.0
    %1250 = vmatprep.subr.mxu0 0.0
    %1251 = vmatpush1.msra.mxu0 0.0
    %1252 = vmatprep.subr.mxu0 0.0
    %1253 = vmatpush1.msra.mxu0 0.0
    %1254 = vmatprep.subr.mxu0 0.0
    %1255 = vmatpush1.msra.mxu0 0.0
    %1256 = vmatprep.subr.mxu0 0.0
    %1257 = vmatpush1.msra.mxu0 0.0
    %1258 = vmatprep.subr.mxu0 0.0
    %1259 = vmatpush1.msra.mxu0 0.0
    %1260 = vmatprep.mubr.f32.mxu0 0.0
    %1261 = vmatmul.mubr.f32.gmra.mrb[0].mxu0 %v940
    %v1262 = vpop.f32.mrb[0].mxu0
    %v1263 = vadd.f32 0.0, %v1262
    %v1264 = vpop.f32.mrb[0].mxu0
    %1265 = vdwg.mxu0
    %v1266 = vadd.f32 %v1122, %v1192
    %v1267 = vxor.u32 %v1266, 2147483648
    %v1268 = vmul.f32 %v1267, 1.442695
    %v1269 = vpow.pop %v1268
    %v1270 = vadd.f32 %v1269, 1.0
    %v1271 = vrcp.pop %v1270
    %v1272 = vmul.f32 1.0, %v1271
    %v1273 = vadd.f32 %v1123, %v1194
    %v1274 = vxor.u32 %v1273, 2147483648
    %v1275 = vmul.f32 %v1274, 1.442695
    %v1276 = vpow.pop %v1275
    %v1277 = vadd.f32 %v1276, 1.0
    %v1278 = vrcp.pop %v1277
    %v1279 = vmul.f32 1.0, %v1278
    %v1280 = vadd.f32 %v1263, %v931
    %v1281 = vmul.f32 %v1272, %v1280
    %v1282 = vadd.f32 %v1124, %v1281
    %v1283 = vtanh.pop %v1282
    %v1284 = vsub.f32 1.0, %v1279
    %v1285 = vmul.f32 %v1284, %v1283
    %v1286 = vmul.f32 %v1279, %v940
    %v1287 = vadd.f32 %v1285, %v1286
    %s1288 = smul.u32 6, 3
    %s1289 = smul.addr %s1288, 8
    %s1290 = scalar_lea.vmem [#allocation3], %s1289
    %v1291 = vld [vmem:[%s1290] sm:$0xff]
    %v1292 = vld [vmem:[%s1290 + $0x8] sm:$0xff]
    %v1293 = vld [vmem:[%s1290 + $0x10] sm:$0xff]
    %1294 = vmatprep.subr.mxu0 %v717
    %1295 = vmatpush1.msra.mxu0 %v716
    %1296 = vmatprep.subr.mxu0 %v720
    %1297 = vmatpush1.msra.mxu0 %v719
    %1298 = vmatprep.subr.mxu0 %v723
    %1299 = vmatpush1.msra.mxu0 %v722
    %1300 = vmatprep.subr.mxu0 %v726
    %1301 = vmatpush1.msra.mxu0 %v725
    %1302 = vmatprep.subr.mxu0 %v729
    %1303 = vmatpush1.msra.mxu0 %v728
    %1304 = vmatprep.subr.mxu0 %v732
    %1305 = vmatpush1.msra.mxu0 %v731
    %1306 = vmatprep.subr.mxu0 %v735
    %1307 = vmatpush1.msra.mxu0 %v734
    %1308 = vmatprep.subr.mxu0 %v738
    %1309 = vmatpush1.msra.mxu0 %v737
    %1310 = vmatprep.subr.mxu0 %v741
    %1311 = vmatpush1.msra.mxu0 %v740
    %1312 = vmatprep.subr.mxu0 %v744
    %1313 = vmatpush1.msra.mxu0 %v743
    %1314 = vmatprep.subr.mxu0 %v747
    %1315 = vmatpush1.msra.mxu0 %v746
    %1316 = vmatprep.subr.mxu0 %v750
    %1317 = vmatpush1.msra.mxu0 %v749
    %1318 = vmatprep.subr.mxu0 %v753
    %1319 = vmatpush1.msra.mxu0 %v752
    %1320 = vmatprep.subr.mxu0 %v756
    %1321 = vmatpush1.msra.mxu0 %v755
    %1322 = vmatprep.subr.mxu0 %v759
    %1323 = vmatpush1.msra.mxu0 %v758
    %1324 = vmatprep.subr.mxu0 %v762
    %1325 = vmatpush1.msra.mxu0 %v761
    %1326 = vmatprep.subr.mxu0 0.0
    %1327 = vmatpush1.msra.mxu0 0.0
    %1328 = vmatprep.subr.mxu0 0.0
    %1329 = vmatpush1.msra.mxu0 0.0
    %1330 = vmatprep.subr.mxu0 0.0
    %1331 = vmatpush1.msra.mxu0 0.0
    %1332 = vmatprep.subr.mxu0 0.0
    %1333 = vmatpush1.msra.mxu0 0.0
    %1334 = vmatprep.subr.mxu0 0.0
    %1335 = vmatpush1.msra.mxu0 0.0
    %1336 = vmatprep.subr.mxu0 0.0
    %1337 = vmatpush1.msra.mxu0 0.0
    %1338 = vmatprep.subr.mxu0 0.0
    %1339 = vmatpush1.msra.mxu0 0.0
    %1340 = vmatprep.subr.mxu0 0.0
    %1341 = vmatpush1.msra.mxu0 0.0
    %1342 = vmatprep.subr.mxu0 0.0
    %1343 = vmatpush1.msra.mxu0 0.0
    %1344 = vmatprep.subr.mxu0 0.0
    %1345 = vmatpush1.msra.mxu0 0.0
    %1346 = vmatprep.subr.mxu0 0.0
    %1347 = vmatpush1.msra.mxu0 0.0
    %1348 = vmatprep.subr.mxu0 0.0
    %1349 = vmatpush1.msra.mxu0 0.0
    %1350 = vmatprep.subr.mxu0 0.0
    %1351 = vmatpush1.msra.mxu0 0.0
    %1352 = vmatprep.subr.mxu0 0.0
    %1353 = vmatpush1.msra.mxu0 0.0
    %1354 = vmatprep.subr.mxu0 0.0
    %1355 = vmatpush1.msra.mxu0 0.0
    %1356 = vmatprep.subr.mxu0 0.0
    %1357 = vmatpush1.msra.mxu0 0.0
    %1358 = vmatprep.mubr.f32.mxu0 0.0
    %1359 = vmatmul.mubr.f32.gmra.mrb[0].mxu0 %v1115
    %v1360 = vpop.f32.mrb[0].mxu0
    %v1361 = vadd.f32 0.0, %v1360
    %v1362 = vpop.f32.mrb[0].mxu0
    %v1363 = vadd.f32 0.0, %v1362
    %1364 = vdwg.mxu0
    %1365 = vmatprep.subr.mxu0 0.0
    %1366 = vmatpush1.msra.mxu0 %v718
    %1367 = vmatprep.subr.mxu0 0.0
    %1368 = vmatpush1.msra.mxu0 %v721
    %1369 = vmatprep.subr.mxu0 0.0
    %1370 = vmatpush1.msra.mxu0 %v724
    %1371 = vmatprep.subr.mxu0 0.0
    %1372 = vmatpush1.msra.mxu0 %v727
    %1373 = vmatprep.subr.mxu0 0.0
    %1374 = vmatpush1.msra.mxu0 %v730
    %1375 = vmatprep.subr.mxu0 0.0
    %1376 = vmatpush1.msra.mxu0 %v733
    %1377 = vmatprep.subr.mxu0 0.0
    %1378 = vmatpush1.msra.mxu0 %v736
    %1379 = vmatprep.subr.mxu0 0.0
    %1380 = vmatpush1.msra.mxu0 %v739
    %1381 = vmatprep.subr.mxu0 0.0
    %1382 = vmatpush1.msra.mxu0 %v742
    %1383 = vmatprep.subr.mxu0 0.0
    %1384 = vmatpush1.msra.mxu0 %v745
    %1385 = vmatprep.subr.mxu0 0.0
    %1386 = vmatpush1.msra.mxu0 %v748
    %1387 = vmatprep.subr.mxu0 0.0
    %1388 = vmatpush1.msra.mxu0 %v751
    %1389 = vmatprep.subr.mxu0 0.0
    %1390 = vmatpush1.msra.mxu0 %v754
    %1391 = vmatprep.subr.mxu0 0.0
    %1392 = vmatpush1.msra.mxu0 %v757
    %1393 = vmatprep.subr.mxu0 0.0
    %1394 = vmatpush1.msra.mxu0 %v760
    %1395 = vmatprep.subr.mxu0 0.0
    %1396 = vmatpush1.msra.mxu0 %v763
    %1397 = vmatprep.subr.mxu0 0.0
    %1398 = vmatpush1.msra.mxu0 0.0
    %1399 = vmatprep.subr.mxu0 0.0
    %1400 = vmatpush1.msra.mxu0 0.0
    %1401 = vmatprep.subr.mxu0 0.0
    %1402 = vmatpush1.msra.mxu0 0.0
    %1403 = vmatprep.subr.mxu0 0.0
    %1404 = vmatpush1.msra.mxu0 0.0
    %1405 = vmatprep.subr.mxu0 0.0
    %1406 = vmatpush1.msra.mxu0 0.0
    %1407 = vmatprep.subr.mxu0 0.0
    %1408 = vmatpush1.msra.mxu0 0.0
    %1409 = vmatprep.subr.mxu0 0.0
    %1410 = vmatpush1.msra.mxu0 0.0
    %1411 = vmatprep.subr.mxu0 0.0
    %1412 = vmatpush1.msra.mxu0 0.0
    %1413 = vmatprep.subr.mxu0 0.0
    %1414 = vmatpush1.msra.mxu0 0.0
    %1415 = vmatprep.subr.mxu0 0.0
    %1416 = vmatpush1.msra.mxu0 0.0
    %1417 = vmatprep.subr.mxu0 0.0
    %1418 = vmatpush1.msra.mxu0 0.0
    %1419 = vmatprep.subr.mxu0 0.0
    %1420 = vmatpush1.msra.mxu0 0.0
    %1421 = vmatprep.subr.mxu0 0.0
    %1422 = vmatpush1.msra.mxu0 0.0
    %1423 = vmatprep.subr.mxu0 0.0
    %1424 = vmatpush1.msra.mxu0 0.0
    %1425 = vmatprep.subr.mxu0 0.0
    %1426 = vmatpush1.msra.mxu0 0.0
    %1427 = vmatprep.subr.mxu0 0.0
    %1428 = vmatpush1.msra.mxu0 0.0
    %1429 = vmatprep.mubr.f32.mxu0 0.0
    %1430 = vmatmul.mubr.f32.gmra.mrb[0].mxu0 %v1115
    %v1431 = vpop.f32.mrb[0].mxu0
    %v1432 = vadd.f32 0.0, %v1431
    %v1433 = vpop.f32.mrb[0].mxu0
    %1434 = vdwg.mxu0
    %v1435 = vadd.f32 %v1291, %v1361
    %v1436 = vxor.u32 %v1435, 2147483648
    %v1437 = vmul.f32 %v1436, 1.442695
    %v1438 = vpow.pop %v1437
    %v1439 = vadd.f32 %v1438, 1.0
    %v1440 = vrcp.pop %v1439
    %v1441 = vmul.f32 1.0, %v1440
    %v1442 = vadd.f32 %v1292, %v1363
    %v1443 = vxor.u32 %v1442, 2147483648
    %v1444 = vmul.f32 %v1443, 1.442695
    %v1445 = vpow.pop %v1444
    %v1446 = vadd.f32 %v1445, 1.0
    %v1447 = vrcp.pop %v1446
    %v1448 = vmul.f32 1.0, %v1447
    %v1449 = vadd.f32 %v1432, %v1106
    %v1450 = vmul.f32 %v1441, %v1449
    %v1451 = vadd.f32 %v1293, %v1450
    %v1452 = vtanh.pop %v1451
    %v1453 = vsub.f32 1.0, %v1448
    %v1454 = vmul.f32 %v1453, %v1452
    %v1455 = vmul.f32 %v1448, %v1115
    %v1456 = vadd.f32 %v1454, %v1455
    %s1457 = scalar_lea.vmem [#allocation4], 8
    %1458 = vst [vmem:[%s1457] sm:$0xff] %v1287
    %s1459 = scalar_lea.vmem [#allocation5], 48
    %1460 = vst [vmem:[%s1459] sm:$0xff] %v1456
    %s1461 = smul.u32 2, 3
    %s1462 = smul.addr %s1461, 8
    %s1463 = scalar_lea.vmem [#allocation2], %s1462
    %v1464 = vld [vmem:[%s1463] sm:$0xff]
    %v1465 = vld [vmem:[%s1463 + $0x8] sm:$0xff]
    %v1466 = vld [vmem:[%s1463 + $0x10] sm:$0xff]
    %1467 = vmatprep.subr.mxu0 %v669
    %1468 = vmatpush1.msra.mxu0 %v668
    %1469 = vmatprep.subr.mxu0 %v672
    %1470 = vmatpush1.msra.mxu0 %v671
    %1471 = vmatprep.subr.mxu0 %v675
    %1472 = vmatpush1.msra.mxu0 %v674
    %1473 = vmatprep.subr.mxu0 %v678
    %1474 = vmatpush1.msra.mxu0 %v677
    %1475 = vmatprep.subr.mxu0 %v681
    %1476 = vmatpush1.msra.mxu0 %v680
    %1477 = vmatprep.subr.mxu0 %v684
    %1478 = vmatpush1.msra.mxu0 %v683
    %1479 = vmatprep.subr.mxu0 %v687
    %1480 = vmatpush1.msra.mxu0 %v686
    %1481 = vmatprep.subr.mxu0 %v690
    %1482 = vmatpush1.msra.mxu0 %v689
    %1483 = vmatprep.subr.mxu0 %v693
    %1484 = vmatpush1.msra.mxu0 %v692
    %1485 = vmatprep.subr.mxu0 %v696
    %1486 = vmatpush1.msra.mxu0 %v695
    %1487 = vmatprep.subr.mxu0 %v699
    %1488 = vmatpush1.msra.mxu0 %v698
    %1489 = vmatprep.subr.mxu0 %v702
    %1490 = vmatpush1.msra.mxu0 %v701
    %1491 = vmatprep.subr.mxu0 %v705
    %1492 = vmatpush1.msra.mxu0 %v704
    %1493 = vmatprep.subr.mxu0 %v708
    %1494 = vmatpush1.msra.mxu0 %v707
    %1495 = vmatprep.subr.mxu0 %v711
    %1496 = vmatpush1.msra.mxu0 %v710
    %1497 = vmatprep.subr.mxu0 %v714
    %1498 = vmatpush1.msra.mxu0 %v713
    %1499 = vmatprep.subr.mxu0 0.0
    %1500 = vmatpush1.msra.mxu0 0.0
    %1501 = vmatprep.subr.mxu0 0.0
    %1502 = vmatpush1.msra.mxu0 0.0
    %1503 = vmatprep.subr.mxu0 0.0
    %1504 = vmatpush1.msra.mxu0 0.0
    %1505 = vmatprep.subr.mxu0 0.0
    %1506 = vmatpush1.msra.mxu0 0.0
    %1507 = vmatprep.subr.mxu0 0.0
    %1508 = vmatpush1.msra.mxu0 0.0
    %1509 = vmatprep.subr.mxu0 0.0
    %1510 = vmatpush1.msra.mxu0 0.0
    %1511 = vmatprep.subr.mxu0 0.0
    %1512 = vmatpush1.msra.mxu0 0.0
    %1513 = vmatprep.subr.mxu0 0.0
    %1514 = vmatpush1.msra.mxu0 0.0
    %1515 = vmatprep.subr.mxu0 0.0
    %1516 = vmatpush1.msra.mxu0 0.0
    %1517 = vmatprep.subr.mxu0 0.0
    %1518 = vmatpush1.msra.mxu0 0.0
    %1519 = vmatprep.subr.mxu0 0.0
    %1520 = vmatpush1.msra.mxu0 0.0
    %1521 = vmatprep.subr.mxu0 0.0
    %1522 = vmatpush1.msra.mxu0 0.0
    %1523 = vmatprep.subr.mxu0 0.0
    %1524 = vmatpush1.msra.mxu0 0.0
    %1525 = vmatprep.subr.mxu0 0.0
    %1526 = vmatpush1.msra.mxu0 0.0
    %1527 = vmatprep.subr.mxu0 0.0
    %1528 = vmatpush1.msra.mxu0 0.0
    %1529 = vmatprep.subr.mxu0 0.0
    %1530 = vmatpush1.msra.mxu0 0.0
    %1531 = vmatprep.mubr.f32.mxu0 0.0
    %1532 = vmatmul.mubr.f32.gmra.mrb[0].mxu0 %v1287
    %v1533 = vpop.f32.mrb[0].mxu0
    %v1534 = vadd.f32 0.0, %v1533
    %v1535 = vpop.f32.mrb[0].mxu0
    %v1536 = vadd.f32 0.0, %v1535
    %1537 = vdwg.mxu0
    %1538 = vmatprep.subr.mxu0 0.0
    %1539 = vmatpush1.msra.mxu0 %v670
    %1540 = vmatprep.subr.mxu0 0.0
    %1541 = vmatpush1.msra.mxu0 %v673
    %1542 = vmatprep.subr.mxu0 0.0
    %1543 = vmatpush1.msra.mxu0 %v676
    %1544 = vmatprep.subr.mxu0 0.0
    %1545 = vmatpush1.msra.mxu0 %v679
    %1546 = vmatprep.subr.mxu0 0.0
    %1547 = vmatpush1.msra.mxu0 %v682
    %1548 = vmatprep.subr.mxu0 0.0
    %1549 = vmatpush1.msra.mxu0 %v685
    %1550 = vmatprep.subr.mxu0 0.0
    %1551 = vmatpush1.msra.mxu0 %v688
    %1552 = vmatprep.subr.mxu0 0.0
    %1553 = vmatpush1.msra.mxu0 %v691
    %1554 = vmatprep.subr.mxu0 0.0
    %1555 = vmatpush1.msra.mxu0 %v694
    %1556 = vmatprep.subr.mxu0 0.0
    %1557 = vmatpush1.msra.mxu0 %v697
    %1558 = vmatprep.subr.mxu0 0.0
    %1559 = vmatpush1.msra.mxu0 %v700
    %1560 = vmatprep.subr.mxu0 0.0
    %1561 = vmatpush1.msra.mxu0 %v703
    %1562 = vmatprep.subr.mxu0 0.0
    %1563 = vmatpush1.msra.mxu0 %v706
    %1564 = vmatprep.subr.mxu0 0.0
    %1565 = vmatpush1.msra.mxu0 %v709
    %1566 = vmatprep.subr.mxu0 0.0
    %1567 = vmatpush1.msra.mxu0 %v712
    %1568 = vmatprep.subr.mxu0 0.0
    %1569 = vmatpush1.msra.mxu0 %v715
    %1570 = vmatprep.subr.mxu0 0.0
    %1571 = vmatpush1.msra.mxu0 0.0
    %1572 = vmatprep.subr.mxu0 0.0
    %1573 = vmatpush1.msra.mxu0 0.0
    %1574 = vmatprep.subr.mxu0 0.0
    %1575 = vmatpush1.msra.mxu0 0.0
    %1576 = vmatprep.subr.mxu0 0.0
    %1577 = vmatpush1.msra.mxu0 0.0
    %1578 = vmatprep.subr.mxu0 0.0
    %1579 = vmatpush1.msra.mxu0 0.0
    %1580 = vmatprep.subr.mxu0 0.0
    %1581 = vmatpush1.msra.mxu0 0.0
    %1582 = vmatprep.subr.mxu0 0.0
    %1583 = vmatpush1.msra.mxu0 0.0
    %1584 = vmatprep.subr.mxu0 0.0
    %1585 = vmatpush1.msra.mxu0 0.0
    %1586 = vmatprep.subr.mxu0 0.0
    %1587 = vmatpush1.msra.mxu0 0.0
    %1588 = vmatprep.subr.mxu0 0.0
    %1589 = vmatpush1.msra.mxu0 0.0
    %1590 = vmatprep.subr.mxu0 0.0
    %1591 = vmatpush1.msra.mxu0 0.0
    %1592 = vmatprep.subr.mxu0 0.0
    %1593 = vmatpush1.msra.mxu0 0.0
    %1594 = vmatprep.subr.mxu0 0.0
    %1595 = vmatpush1.msra.mxu0 0.0
    %1596 = vmatprep.subr.mxu0 0.0
    %1597 = vmatpush1.msra.mxu0 0.0
    %1598 = vmatprep.subr.mxu0 0.0
    %1599 = vmatpush1.msra.mxu0 0.0
    %1600 = vmatprep.subr.mxu0 0.0
    %1601 = vmatpush1.msra.mxu0 0.0
    %1602 = vmatprep.mubr.f32.mxu0 0.0
    %1603 = vmatmul.mubr.f32.gmra.mrb[0].mxu0 %v1287
    %v1604 = vpop.f32.mrb[0].mxu0
    %v1605 = vadd.f32 0.0, %v1604
    %v1606 = vpop.f32.mrb[0].mxu0
    %1607 = vdwg.mxu0
    %v1608 = vadd.f32 %v1464, %v1534
    %v1609 = vxor.u32 %v1608, 2147483648
    %v1610 = vmul.f32 %v1609, 1.442695
    %v1611 = vpow.pop %v1610
    %v1612 = vadd.f32 %v1611, 1.0
    %v1613 = vrcp.pop %v1612
    %v1614 = vmul.f32 1.0, %v1613
    %v1615 = vadd.f32 %v1465, %v1536
    %v1616 = vxor.u32 %v1615, 2147483648
    %v1617 = vmul.f32 %v1616, 1.442695
    %v1618 = vpow.pop %v1617
    %v1619 = vadd.f32 %v1618, 1.0
    %v1620 = vrcp.pop %v1619
    %v1621 = vmul.f32 1.0, %v1620
    %v1622 = vadd.f32 %v1605, %v931
    %v1623 = vmul.f32 %v1614, %v1622
    %v1624 = vadd.f32 %v1466, %v1623
    %v1625 = vtanh.pop %v1624
    %v1626 = vsub.f32 1.0, %v1621
    %v1627 = vmul.f32 %v1626, %v1625
    %v1628 = vmul.f32 %v1621, %v1287
    %v1629 = vadd.f32 %v1627, %v1628
    %s1630 = smul.u32 5, 3
    %s1631 = smul.addr %s1630, 8
    %s1632 = scalar_lea.vmem [#allocation3], %s1631
    %v1633 = vld [vmem:[%s1632] sm:$0xff]
    %v1634 = vld [vmem:[%s1632 + $0x8] sm:$0xff]
    %v1635 = vld [vmem:[%s1632 + $0x10] sm:$0xff]
    %1636 = vmatprep.subr.mxu0 %v717
    %1637 = vmatpush1.msra.mxu0 %v716
    %1638 = vmatprep.subr.mxu0 %v720
    %1639 = vmatpush1.msra.mxu0 %v719
    %1640 = vmatprep.subr.mxu0 %v723
    %1641 = vmatpush1.msra.mxu0 %v722
    %1642 = vmatprep.subr.mxu0 %v726
    %1643 = vmatpush1.msra.mxu0 %v725
    %1644 = vmatprep.subr.mxu0 %v729
    %1645 = vmatpush1.msra.mxu0 %v728
    %1646 = vmatprep.subr.mxu0 %v732
    %1647 = vmatpush1.msra.mxu0 %v731
    %1648 = vmatprep.subr.mxu0 %v735
    %1649 = vmatpush1.msra.mxu0 %v734
    %1650 = vmatprep.subr.mxu0 %v738
    %1651 = vmatpush1.msra.mxu0 %v737
    %1652 = vmatprep.subr.mxu0 %v741
    %1653 = vmatpush1.msra.mxu0 %v740
    %1654 = vmatprep.subr.mxu0 %v744
    %1655 = vmatpush1.msra.mxu0 %v743
    %1656 = vmatprep.subr.mxu0 %v747
    %1657 = vmatpush1.msra.mxu0 %v746
    %1658 = vmatprep.subr.mxu0 %v750
    %1659 = vmatpush1.msra.mxu0 %v749
    %1660 = vmatprep.subr.mxu0 %v753
    %1661 = vmatpush1.msra.mxu0 %v752
    %1662 = vmatprep.subr.mxu0 %v756
    %1663 = vmatpush1.msra.mxu0 %v755
    %1664 = vmatprep.subr.mxu0 %v759
    %1665 = vmatpush1.msra.mxu0 %v758
    %1666 = vmatprep.subr.mxu0 %v762
    %1667 = vmatpush1.msra.mxu0 %v761
    %1668 = vmatprep.subr.mxu0 0.0
    %1669 = vmatpush1.msra.mxu0 0.0
    %1670 = vmatprep.subr.mxu0 0.0
    %1671 = vmatpush1.msra.mxu0 0.0
    %1672 = vmatprep.subr.mxu0 0.0
    %1673 = vmatpush1.msra.mxu0 0.0
    %1674 = vmatprep.subr.mxu0 0.0
    %1675 = vmatpush1.msra.mxu0 0.0
    %1676 = vmatprep.subr.mxu0 0.0
    %1677 = vmatpush1.msra.mxu0 0.0
    %1678 = vmatprep.subr.mxu0 0.0
    %1679 = vmatpush1.msra.mxu0 0.0
    %1680 = vmatprep.subr.mxu0 0.0
    %1681 = vmatpush1.msra.mxu0 0.0
    %1682 = vmatprep.subr.mxu0 0.0
    %1683 = vmatpush1.msra.mxu0 0.0
    %1684 = vmatprep.subr.mxu0 0.0
    %1685 = vmatpush1.msra.mxu0 0.0
    %1686 = vmatprep.subr.mxu0 0.0
    %1687 = vmatpush1.msra.mxu0 0.0
    %1688 = vmatprep.subr.mxu0 0.0
    %1689 = vmatpush1.msra.mxu0 0.0
    %1690 = vmatprep.subr.mxu0 0.0
    %1691 = vmatpush1.msra.mxu0 0.0
    %1692 = vmatprep.subr.mxu0 0.0
    %1693 = vmatpush1.msra.mxu0 0.0
    %1694 = vmatprep.subr.mxu0 0.0
    %1695 = vmatpush1.msra.mxu0 0.0
    %1696 = vmatprep.subr.mxu0 0.0
    %1697 = vmatpush1.msra.mxu0 0.0
    %1698 = vmatprep.subr.mxu0 0.0
    %1699 = vmatpush1.msra.mxu0 0.0
    %1700 = vmatprep.mubr.f32.mxu0 0.0
    %1701 = vmatmul.mubr.f32.gmra.mrb[0].mxu0 %v1456
    %v1702 = vpop.f32.mrb[0].mxu0
    %v1703 = vadd.f32 0.0, %v1702
    %v1704 = vpop.f32.mrb[0].mxu0
    %v1705 = vadd.f32 0.0, %v1704
    %1706 = vdwg.mxu0
    %1707 = vmatprep.subr.mxu0 0.0
    %1708 = vmatpush1.msra.mxu0 %v718
    %1709 = vmatprep.subr.mxu0 0.0
    %1710 = vmatpush1.msra.mxu0 %v721
    %1711 = vmatprep.subr.mxu0 0.0
    %1712 = vmatpush1.msra.mxu0 %v724
    %1713 = vmatprep.subr.mxu0 0.0
    %1714 = vmatpush1.msra.mxu0 %v727
    %1715 = vmatprep.subr.mxu0 0.0
    %1716 = vmatpush1.msra.mxu0 %v730
    %1717 = vmatprep.subr.mxu0 0.0
    %1718 = vmatpush1.msra.mxu0 %v733
    %1719 = vmatprep.subr.mxu0 0.0
    %1720 = vmatpush1.msra.mxu0 %v736
    %1721 = vmatprep.subr.mxu0 0.0
    %1722 = vmatpush1.msra.mxu0 %v739
    %1723 = vmatprep.subr.mxu0 0.0
    %1724 = vmatpush1.msra.mxu0 %v742
    %1725 = vmatprep.subr.mxu0 0.0
    %1726 = vmatpush1.msra.mxu0 %v745
    %1727 = vmatprep.subr.mxu0 0.0
    %1728 = vmatpush1.msra.mxu0 %v748
    %1729 = vmatprep.subr.mxu0 0.0
    %1730 = vmatpush1.msra.mxu0 %v751
    %1731 = vmatprep.subr.mxu0 0.0
    %1732 = vmatpush1.msra.mxu0 %v754
    %1733 = vmatprep.subr.mxu0 0.0
    %1734 = vmatpush1.msra.mxu0 %v757
    %1735 = vmatprep.subr.mxu0 0.0
    %1736 = vmatpush1.msra.mxu0 %v760
    %1737 = vmatprep.subr.mxu0 0.0
    %1738 = vmatpush1.msra.mxu0 %v763
    %1739 = vmatprep.subr.mxu0 0.0
    %1740 = vmatpush1.msra.mxu0 0.0
    %1741 = vmatprep.subr.mxu0 0.0
    %1742 = vmatpush1.msra.mxu0 0.0
    %1743 = vmatprep.subr.mxu0 0.0
    %1744 = vmatpush1.msra.mxu0 0.0
    %1745 = vmatprep.subr.mxu0 0.0
    %1746 = vmatpush1.msra.mxu0 0.0
    %1747 = vmatprep.subr.mxu0 0.0
    %1748 = vmatpush1.msra.mxu0 0.0
    %1749 = vmatprep.subr.mxu0 0.0
    %1750 = vmatpush1.msra.mxu0 0.0
    %1751 = vmatprep.subr.mxu0 0.0
    %1752 = vmatpush1.msra.mxu0 0.0
    %1753 = vmatprep.subr.mxu0 0.0
    %1754 = vmatpush1.msra.mxu0 0.0
    %1755 = vmatprep.subr.mxu0 0.0
    %1756 = vmatpush1.msra.mxu0 0.0
    %1757 = vmatprep.subr.mxu0 0.0
    %1758 = vmatpush1.msra.mxu0 0.0
    %1759 = vmatprep.subr.mxu0 0.0
    %1760 = vmatpush1.msra.mxu0 0.0
    %1761 = vmatprep.subr.mxu0 0.0
    %1762 = vmatpush1.msra.mxu0 0.0
    %1763 = vmatprep.subr.mxu0 0.0
    %1764 = vmatpush1.msra.mxu0 0.0
    %1765 = vmatprep.subr.mxu0 0.0
    %1766 = vmatpush1.msra.mxu0 0.0
    %1767 = vmatprep.subr.mxu0 0.0
    %1768 = vmatpush1.msra.mxu0 0.0
    %1769 = vmatprep.subr.mxu0 0.0
    %1770 = vmatpush1.msra.mxu0 0.0
    %1771 = vmatprep.mubr.f32.mxu0 0.0
    %1772 = vmatmul.mubr.f32.gmra.mrb[0].mxu0 %v1456
    %v1773 = vpop.f32.mrb[0].mxu0
    %v1774 = vadd.f32 0.0, %v1773
    %v1775 = vpop.f32.mrb[0].mxu0
    %1776 = vdwg.mxu0
    %v1777 = vadd.f32 %v1633, %v1703
    %v1778 = vxor.u32 %v1777, 2147483648
    %v1779 = vmul.f32 %v1778, 1.442695
    %v1780 = vpow.pop %v1779
    %v1781 = vadd.f32 %v1780, 1.0
    %v1782 = vrcp.pop %v1781
    %v1783 = vmul.f32 1.0, %v1782
    %v1784 = vadd.f32 %v1634, %v1705
    %v1785 = vxor.u32 %v1784, 2147483648
    %v1786 = vmul.f32 %v1785, 1.442695
    %v1787 = vpow.pop %v1786
    %v1788 = vadd.f32 %v1787, 1.0
    %v1789 = vrcp.pop %v1788
    %v1790 = vmul.f32 1.0, %v1789
    %v1791 = vadd.f32 %v1774, %v1106
    %v1792 = vmul.f32 %v1783, %v1791
    %v1793 = vadd.f32 %v1635, %v1792
    %v1794 = vtanh.pop %v1793
    %v1795 = vsub.f32 1.0, %v1790
    %v1796 = vmul.f32 %v1795, %v1794
    %v1797 = vmul.f32 %v1790, %v1456
    %v1798 = vadd.f32 %v1796, %v1797
    %s1799 = scalar_lea.vmem [#allocation4], 16
    %1800 = vst [vmem:[%s1799] sm:$0xff] %v1629
    %s1801 = scalar_lea.vmem [#allocation5], 40
    %1802 = vst [vmem:[%s1801] sm:$0xff] %v1798
    %s1803 = smul.u32 3, 3
    %s1804 = smul.addr %s1803, 8
    %s1805 = scalar_lea.vmem [#allocation2], %s1804
    %v1806 = vld [vmem:[%s1805] sm:$0xff]
    %v1807 = vld [vmem:[%s1805 + $0x8] sm:$0xff]
    %v1808 = vld [vmem:[%s1805 + $0x10] sm:$0xff]
    %1809 = vmatprep.subr.mxu0 %v669
    %1810 = vmatpush1.msra.mxu0 %v668
    %1811 = vmatprep.subr.mxu0 %v672
    %1812 = vmatpush1.msra.mxu0 %v671
    %1813 = vmatprep.subr.mxu0 %v675
    %1814 = vmatpush1.msra.mxu0 %v674
    %1815 = vmatprep.subr.mxu0 %v678
    %1816 = vmatpush1.msra.mxu0 %v677
    %1817 = vmatprep.subr.mxu0 %v681
    %1818 = vmatpush1.msra.mxu0 %v680
    %1819 = vmatprep.subr.mxu0 %v684
    %1820 = vmatpush1.msra.mxu0 %v683
    %1821 = vmatprep.subr.mxu0 %v687
    %1822 = vmatpush1.msra.mxu0 %v686
    %1823 = vmatprep.subr.mxu0 %v690
    %1824 = vmatpush1.msra.mxu0 %v689
    %1825 = vmatprep.subr.mxu0 %v693
    %1826 = vmatpush1.msra.mxu0 %v692
    %1827 = vmatprep.subr.mxu0 %v696
    %1828 = vmatpush1.msra.mxu0 %v695
    %1829 = vmatprep.subr.mxu0 %v699
    %1830 = vmatpush1.msra.mxu0 %v698
    %1831 = vmatprep.subr.mxu0 %v702
    %1832 = vmatpush1.msra.mxu0 %v701
    %1833 = vmatprep.subr.mxu0 %v705
    %1834 = vmatpush1.msra.mxu0 %v704
    %1835 = vmatprep.subr.mxu0 %v708
    %1836 = vmatpush1.msra.mxu0 %v707
    %1837 = vmatprep.subr.mxu0 %v711
    %1838 = vmatpush1.msra.mxu0 %v710
    %1839 = vmatprep.subr.mxu0 %v714
    %1840 = vmatpush1.msra.mxu0 %v713
    %1841 = vmatprep.subr.mxu0 0.0
    %1842 = vmatpush1.msra.mxu0 0.0
    %1843 = vmatprep.subr.mxu0 0.0
    %1844 = vmatpush1.msra.mxu0 0.0
    %1845 = vmatprep.subr.mxu0 0.0
    %1846 = vmatpush1.msra.mxu0 0.0
    %1847 = vmatprep.subr.mxu0 0.0
    %1848 = vmatpush1.msra.mxu0 0.0
    %1849 = vmatprep.subr.mxu0 0.0
    %1850 = vmatpush1.msra.mxu0 0.0
    %1851 = vmatprep.subr.mxu0 0.0
    %1852 = vmatpush1.msra.mxu0 0.0
    %1853 = vmatprep.subr.mxu0 0.0
    %1854 = vmatpush1.msra.mxu0 0.0
    %1855 = vmatprep.subr.mxu0 0.0
    %1856 = vmatpush1.msra.mxu0 0.0
    %1857 = vmatprep.subr.mxu0 0.0
    %1858 = vmatpush1.msra.mxu0 0.0
    %1859 = vmatprep.subr.mxu0 0.0
    %1860 = vmatpush1.msra.mxu0 0.0
    %1861 = vmatprep.subr.mxu0 0.0
    %1862 = vmatpush1.msra.mxu0 0.0
    %1863 = vmatprep.subr.mxu0 0.0
    %1864 = vmatpush1.msra.mxu0 0.0
    %1865 = vmatprep.subr.mxu0 0.0
    %1866 = vmatpush1.msra.mxu0 0.0
    %1867 = vmatprep.subr.mxu0 0.0
    %1868 = vmatpush1.msra.mxu0 0.0
    %1869 = vmatprep.subr.mxu0 0.0
    %1870 = vmatpush1.msra.mxu0 0.0
    %1871 = vmatprep.subr.mxu0 0.0
    %1872 = vmatpush1.msra.mxu0 0.0
    %1873 = vmatprep.mubr.f32.mxu0 0.0
    %1874 = vmatmul.mubr.f32.gmra.mrb[0].mxu0 %v1629
    %v1875 = vpop.f32.mrb[0].mxu0
    %v1876 = vadd.f32 0.0, %v1875
    %v1877 = vpop.f32.mrb[0].mxu0
    %v1878 = vadd.f32 0.0, %v1877
    %1879 = vdwg.mxu0
    %1880 = vmatprep.subr.mxu0 0.0
    %1881 = vmatpush1.msra.mxu0 %v670
    %1882 = vmatprep.subr.mxu0 0.0
    %1883 = vmatpush1.msra.mxu0 %v673
    %1884 = vmatprep.subr.mxu0 0.0
    %1885 = vmatpush1.msra.mxu0 %v676
    %1886 = vmatprep.subr.mxu0 0.0
    %1887 = vmatpush1.msra.mxu0 %v679
    %1888 = vmatprep.subr.mxu0 0.0
    %1889 = vmatpush1.msra.mxu0 %v682
    %1890 = vmatprep.subr.mxu0 0.0
    %1891 = vmatpush1.msra.mxu0 %v685
    %1892 = vmatprep.subr.mxu0 0.0
    %1893 = vmatpush1.msra.mxu0 %v688
    %1894 = vmatprep.subr.mxu0 0.0
    %1895 = vmatpush1.msra.mxu0 %v691
    %1896 = vmatprep.subr.mxu0 0.0
    %1897 = vmatpush1.msra.mxu0 %v694
    %1898 = vmatprep.subr.mxu0 0.0
    %1899 = vmatpush1.msra.mxu0 %v697
    %1900 = vmatprep.subr.mxu0 0.0
    %1901 = vmatpush1.msra.mxu0 %v700
    %1902 = vmatprep.subr.mxu0 0.0
    %1903 = vmatpush1.msra.mxu0 %v703
    %1904 = vmatprep.subr.mxu0 0.0
    %1905 = vmatpush1.msra.mxu0 %v706
    %1906 = vmatprep.subr.mxu0 0.0
    %1907 = vmatpush1.msra.mxu0 %v709
    %1908 = vmatprep.subr.mxu0 0.0
    %1909 = vmatpush1.msra.mxu0 %v712
    %1910 = vmatprep.subr.mxu0 0.0
    %1911 = vmatpush1.msra.mxu0 %v715
    %1912 = vmatprep.subr.mxu0 0.0
    %1913 = vmatpush1.msra.mxu0 0.0
    %1914 = vmatprep.subr.mxu0 0.0
    %1915 = vmatpush1.msra.mxu0 0.0
    %1916 = vmatprep.subr.mxu0 0.0
    %1917 = vmatpush1.msra.mxu0 0.0
    %1918 = vmatprep.subr.mxu0 0.0
    %1919 = vmatpush1.msra.mxu0 0.0
    %1920 = vmatprep.subr.mxu0 0.0
    %1921 = vmatpush1.msra.mxu0 0.0
    %1922 = vmatprep.subr.mxu0 0.0
    %1923 = vmatpush1.msra.mxu0 0.0
    %1924 = vmatprep.subr.mxu0 0.0
    %1925 = vmatpush1.msra.mxu0 0.0
    %1926 = vmatprep.subr.mxu0 0.0
    %1927 = vmatpush1.msra.mxu0 0.0
    %1928 = vmatprep.subr.mxu0 0.0
    %1929 = vmatpush1.msra.mxu0 0.0
    %1930 = vmatprep.subr.mxu0 0.0
    %1931 = vmatpush1.msra.mxu0 0.0
    %1932 = vmatprep.subr.mxu0 0.0
    %1933 = vmatpush1.msra.mxu0 0.0
    %1934 = vmatprep.subr.mxu0 0.0
    %1935 = vmatpush1.msra.mxu0 0.0
    %1936 = vmatprep.subr.mxu0 0.0
    %1937 = vmatpush1.msra.mxu0 0.0
    %1938 = vmatprep.subr.mxu0 0.0
    %1939 = vmatpush1.msra.mxu0 0.0
    %1940 = vmatprep.subr.mxu0 0.0
    %1941 = vmatpush1.msra.mxu0 0.0
    %1942 = vmatprep.subr.mxu0 0.0
    %1943 = vmatpush1.msra.mxu0 0.0
    %1944 = vmatprep.mubr.f32.mxu0 0.0
    %1945 = vmatmul.mubr.f32.gmra.mrb[0].mxu0 %v1629
    %v1946 = vpop.f32.mrb[0].mxu0
    %v1947 = vadd.f32 0.0, %v1946
    %v1948 = vpop.f32.mrb[0].mxu0
    %1949 = vdwg.mxu0
    %v1950 = vadd.f32 %v1806, %v1876
    %v1951 = vxor.u32 %v1950, 2147483648
    %v1952 = vmul.f32 %v1951, 1.442695
    %v1953 = vpow.pop %v1952
    %v1954 = vadd.f32 %v1953, 1.0
    %v1955 = vrcp.pop %v1954
    %v1956 = vmul.f32 1.0, %v1955
    %v1957 = vadd.f32 %v1807, %v1878
    %v1958 = vxor.u32 %v1957, 2147483648
    %v1959 = vmul.f32 %v1958, 1.442695
    %v1960 = vpow.pop %v1959
    %v1961 = vadd.f32 %v1960, 1.0
    %v1962 = vrcp.pop %v1961
    %v1963 = vmul.f32 1.0, %v1962
    %v1964 = vadd.f32 %v1947, %v931
    %v1965 = vmul.f32 %v1956, %v1964
    %v1966 = vadd.f32 %v1808, %v1965
    %v1967 = vtanh.pop %v1966
    %v1968 = vsub.f32 1.0, %v1963
    %v1969 = vmul.f32 %v1968, %v1967
    %v1970 = vmul.f32 %v1963, %v1629
    %v1971 = vadd.f32 %v1969, %v1970
    %s1972 = smul.u32 4, 3
    %s1973 = smul.addr %s1972, 8
    %s1974 = scalar_lea.vmem [#allocation3], %s1973
    %v1975 = vld [vmem:[%s1974] sm:$0xff]
    %v1976 = vld [vmem:[%s1974 + $0x8] sm:$0xff]
    %v1977 = vld [vmem:[%s1974 + $0x10] sm:$0xff]
    %1978 = vmatprep.subr.mxu0 %v717
    %1979 = vmatpush1.msra.mxu0 %v716
    %1980 = vmatprep.subr.mxu0 %v720
    %1981 = vmatpush1.msra.mxu0 %v719
    %1982 = vmatprep.subr.mxu0 %v723
    %1983 = vmatpush1.msra.mxu0 %v722
    %1984 = vmatprep.subr.mxu0 %v726
    %1985 = vmatpush1.msra.mxu0 %v725
    %1986 = vmatprep.subr.mxu0 %v729
    %1987 = vmatpush1.msra.mxu0 %v728
    %1988 = vmatprep.subr.mxu0 %v732
    %1989 = vmatpush1.msra.mxu0 %v731
    %1990 = vmatprep.subr.mxu0 %v735
    %1991 = vmatpush1.msra.mxu0 %v734
    %1992 = vmatprep.subr.mxu0 %v738
    %1993 = vmatpush1.msra.mxu0 %v737
    %1994 = vmatprep.subr.mxu0 %v741
    %1995 = vmatpush1.msra.mxu0 %v740
    %1996 = vmatprep.subr.mxu0 %v744
    %1997 = vmatpush1.msra.mxu0 %v743
    %1998 = vmatprep.subr.mxu0 %v747
    %1999 = vmatpush1.msra.mxu0 %v746
    %2000 = vmatprep.subr.mxu0 %v750
    %2001 = vmatpush1.msra.mxu0 %v749
    %2002 = vmatprep.subr.mxu0 %v753
    %2003 = vmatpush1.msra.mxu0 %v752
    %2004 = vmatprep.subr.mxu0 %v756
    %2005 = vmatpush1.msra.mxu0 %v755
    %2006 = vmatprep.subr.mxu0 %v759
    %2007 = vmatpush1.msra.mxu0 %v758
    %2008 = vmatprep.subr.mxu0 %v762
    %2009 = vmatpush1.msra.mxu0 %v761
    %2010 = vmatprep.subr.mxu0 0.0
    %2011 = vmatpush1.msra.mxu0 0.0
    %2012 = vmatprep.subr.mxu0 0.0
    %2013 = vmatpush1.msra.mxu0 0.0
    %2014 = vmatprep.subr.mxu0 0.0
    %2015 = vmatpush1.msra.mxu0 0.0
    %2016 = vmatprep.subr.mxu0 0.0
    %2017 = vmatpush1.msra.mxu0 0.0
    %2018 = vmatprep.subr.mxu0 0.0
    %2019 = vmatpush1.msra.mxu0 0.0
    %2020 = vmatprep.subr.mxu0 0.0
    %2021 = vmatpush1.msra.mxu0 0.0
    %2022 = vmatprep.subr.mxu0 0.0
    %2023 = vmatpush1.msra.mxu0 0.0
    %2024 = vmatprep.subr.mxu0 0.0
    %2025 = vmatpush1.msra.mxu0 0.0
    %2026 = vmatprep.subr.mxu0 0.0
    %2027 = vmatpush1.msra.mxu0 0.0
    %2028 = vmatprep.subr.mxu0 0.0
    %2029 = vmatpush1.msra.mxu0 0.0
    %2030 = vmatprep.subr.mxu0 0.0
    %2031 = vmatpush1.msra.mxu0 0.0
    %2032 = vmatprep.subr.mxu0 0.0
    %2033 = vmatpush1.msra.mxu0 0.0
    %2034 = vmatprep.subr.mxu0 0.0
    %2035 = vmatpush1.msra.mxu0 0.0
    %2036 = vmatprep.subr.mxu0 0.0
    %2037 = vmatpush1.msra.mxu0 0.0
    %2038 = vmatprep.subr.mxu0 0.0
    %2039 = vmatpush1.msra.mxu0 0.0
    %2040 = vmatprep.subr.mxu0 0.0
    %2041 = vmatpush1.msra.mxu0 0.0
    %2042 = vmatprep.mubr.f32.mxu0 0.0
    %2043 = vmatmul.mubr.f32.gmra.mrb[0].mxu0 %v1798
    %v2044 = vpop.f32.mrb[0].mxu0
    %v2045 = vadd.f32 0.0, %v2044
    %v2046 = vpop.f32.mrb[0].mxu0
    %v2047 = vadd.f32 0.0, %v2046
    %2048 = vdwg.mxu0
    %2049 = vmatprep.subr.mxu0 0.0
    %2050 = vmatpush1.msra.mxu0 %v718
    %2051 = vmatprep.subr.mxu0 0.0
    %2052 = vmatpush1.msra.mxu0 %v721
    %2053 = vmatprep.subr.mxu0 0.0
    %2054 = vmatpush1.msra.mxu0 %v724
    %2055 = vmatprep.subr.mxu0 0.0
    %2056 = vmatpush1.msra.mxu0 %v727
    %2057 = vmatprep.subr.mxu0 0.0
    %2058 = vmatpush1.msra.mxu0 %v730
    %2059 = vmatprep.subr.mxu0 0.0
    %2060 = vmatpush1.msra.mxu0 %v733
    %2061 = vmatprep.subr.mxu0 0.0
    %2062 = vmatpush1.msra.mxu0 %v736
    %2063 = vmatprep.subr.mxu0 0.0
    %2064 = vmatpush1.msra.mxu0 %v739
    %2065 = vmatprep.subr.mxu0 0.0
    %2066 = vmatpush1.msra.mxu0 %v742
    %2067 = vmatprep.subr.mxu0 0.0
    %2068 = vmatpush1.msra.mxu0 %v745
    %2069 = vmatprep.subr.mxu0 0.0
    %2070 = vmatpush1.msra.mxu0 %v748
    %2071 = vmatprep.subr.mxu0 0.0
    %2072 = vmatpush1.msra.mxu0 %v751
    %2073 = vmatprep.subr.mxu0 0.0
    %2074 = vmatpush1.msra.mxu0 %v754
    %2075 = vmatprep.subr.mxu0 0.0
    %2076 = vmatpush1.msra.mxu0 %v757
    %2077 = vmatprep.subr.mxu0 0.0
    %2078 = vmatpush1.msra.mxu0 %v760
    %2079 = vmatprep.subr.mxu0 0.0
    %2080 = vmatpush1.msra.mxu0 %v763
    %2081 = vmatprep.subr.mxu0 0.0
    %2082 = vmatpush1.msra.mxu0 0.0
    %2083 = vmatprep.subr.mxu0 0.0
    %2084 = vmatpush1.msra.mxu0 0.0
    %2085 = vmatprep.subr.mxu0 0.0
    %2086 = vmatpush1.msra.mxu0 0.0
    %2087 = vmatprep.subr.mxu0 0.0
    %2088 = vmatpush1.msra.mxu0 0.0
    %2089 = vmatprep.subr.mxu0 0.0
    %2090 = vmatpush1.msra.mxu0 0.0
    %2091 = vmatprep.subr.mxu0 0.0
    %2092 = vmatpush1.msra.mxu0 0.0
    %2093 = vmatprep.subr.mxu0 0.0
    %2094 = vmatpush1.msra.mxu0 0.0
    %2095 = vmatprep.subr.mxu0 0.0
    %2096 = vmatpush1.msra.mxu0 0.0
    %2097 = vmatprep.subr.mxu0 0.0
    %2098 = vmatpush1.msra.mxu0 0.0
    %2099 = vmatprep.subr.mxu0 0.0
    %2100 = vmatpush1.msra.mxu0 0.0
    %2101 = vmatprep.subr.mxu0 0.0
    %2102 = vmatpush1.msra.mxu0 0.0
    %2103 = vmatprep.subr.mxu0 0.0
    %2104 = vmatpush1.msra.mxu0 0.0
    %2105 = vmatprep.subr.mxu0 0.0
    %2106 = vmatpush1.msra.mxu0 0.0
    %2107 = vmatprep.subr.mxu0 0.0
    %2108 = vmatpush1.msra.mxu0 0.0
    %2109 = vmatprep.subr.mxu0 0.0
    %2110 = vmatpush1.msra.mxu0 0.0
    %2111 = vmatprep.subr.mxu0 0.0
    %2112 = vmatpush1.msra.mxu0 0.0
    %2113 = vmatprep.mubr.f32.mxu0 0.0
    %2114 = vmatmul.mubr.f32.gmra.mrb[0].mxu0 %v1798
    %v2115 = vpop.f32.mrb[0].mxu0
    %v2116 = vadd.f32 0.0, %v2115
    %v2117 = vpop.f32.mrb[0].mxu0
    %2118 = vdwg.mxu0
    %v2119 = vadd.f32 %v1975, %v2045
    %v2120 = vxor.u32 %v2119, 2147483648
    %v2121 = vmul.f32 %v2120, 1.442695
    %v2122 = vpow.pop %v2121
    %v2123 = vadd.f32 %v2122, 1.0
    %v2124 = vrcp.pop %v2123
    %v2125 = vmul.f32 1.0, %v2124
    %v2126 = vadd.f32 %v1976, %v2047
    %v2127 = vxor.u32 %v2126, 2147483648
    %v2128 = vmul.f32 %v2127, 1.442695
    %v2129 = vpow.pop %v2128
    %v2130 = vadd.f32 %v2129, 1.0
    %v2131 = vrcp.pop %v2130
    %v2132 = vmul.f32 1.0, %v2131
    %v2133 = vadd.f32 %v2116, %v1106
    %v2134 = vmul.f32 %v2125, %v2133
    %v2135 = vadd.f32 %v1977, %v2134
    %v2136 = vtanh.pop %v2135
    %v2137 = vsub.f32 1.0, %v2132
    %v2138 = vmul.f32 %v2137, %v2136
    %v2139 = vmul.f32 %v2132, %v1798
    %v2140 = vadd.f32 %v2138, %v2139
    %s2141 = scalar_lea.vmem [#allocation4], 24
    %2142 = vst [vmem:[%s2141] sm:$0xff] %v1971
    %s2143 = scalar_lea.vmem [#allocation5], 32
    %2144 = vst [vmem:[%s2143] sm:$0xff] %v2140
    %s2145 = smul.addr %s1972, 8
    %s2146 = scalar_lea.vmem [#allocation2], %s2145
    %v2147 = vld [vmem:[%s2146] sm:$0xff]
    %v2148 = vld [vmem:[%s2146 + $0x8] sm:$0xff]
    %v2149 = vld [vmem:[%s2146 + $0x10] sm:$0xff]
    %2150 = vmatprep.subr.mxu0 %v669
    %2151 = vmatpush1.msra.mxu0 %v668
    %2152 = vmatprep.subr.mxu0 %v672
    %2153 = vmatpush1.msra.mxu0 %v671
    %2154 = vmatprep.subr.mxu0 %v675
    %2155 = vmatpush1.msra.mxu0 %v674
    %2156 = vmatprep.subr.mxu0 %v678
    %2157 = vmatpush1.msra.mxu0 %v677
    %2158 = vmatprep.subr.mxu0 %v681
    %2159 = vmatpush1.msra.mxu0 %v680
    %2160 = vmatprep.subr.mxu0 %v684
    %2161 = vmatpush1.msra.mxu0 %v683
    %2162 = vmatprep.subr.mxu0 %v687
    %2163 = vmatpush1.msra.mxu0 %v686
    %2164 = vmatprep.subr.mxu0 %v690
    %2165 = vmatpush1.msra.mxu0 %v689
    %2166 = vmatprep.subr.mxu0 %v693
    %2167 = vmatpush1.msra.mxu0 %v692
    %2168 = vmatprep.subr.mxu0 %v696
    %2169 = vmatpush1.msra.mxu0 %v695
    %2170 = vmatprep.subr.mxu0 %v699
    %2171 = vmatpush1.msra.mxu0 %v698
    %2172 = vmatprep.subr.mxu0 %v702
    %2173 = vmatpush1.msra.mxu0 %v701
    %2174 = vmatprep.subr.mxu0 %v705
    %2175 = vmatpush1.msra.mxu0 %v704
    %2176 = vmatprep.subr.mxu0 %v708
    %2177 = vmatpush1.msra.mxu0 %v707
    %2178 = vmatprep.subr.mxu0 %v711
    %2179 = vmatpush1.msra.mxu0 %v710
    %2180 = vmatprep.subr.mxu0 %v714
    %2181 = vmatpush1.msra.mxu0 %v713
    %2182 = vmatprep.subr.mxu0 0.0
    %2183 = vmatpush1.msra.mxu0 0.0
    %2184 = vmatprep.subr.mxu0 0.0
    %2185 = vmatpush1.msra.mxu0 0.0
    %2186 = vmatprep.subr.mxu0 0.0
    %2187 = vmatpush1.msra.mxu0 0.0
    %2188 = vmatprep.subr.mxu0 0.0
    %2189 = vmatpush1.msra.mxu0 0.0
    %2190 = vmatprep.subr.mxu0 0.0
    %2191 = vmatpush1.msra.mxu0 0.0
    %2192 = vmatprep.subr.mxu0 0.0
    %2193 = vmatpush1.msra.mxu0 0.0
    %2194 = vmatprep.subr.mxu0 0.0
    %2195 = vmatpush1.msra.mxu0 0.0
    %2196 = vmatprep.subr.mxu0 0.0
    %2197 = vmatpush1.msra.mxu0 0.0
    %2198 = vmatprep.subr.mxu0 0.0
    %2199 = vmatpush1.msra.mxu0 0.0
    %2200 = vmatprep.subr.mxu0 0.0
    %2201 = vmatpush1.msra.mxu0 0.0
    %2202 = vmatprep.subr.mxu0 0.0
    %2203 = vmatpush1.msra.mxu0 0.0
    %2204 = vmatprep.subr.mxu0 0.0
    %2205 = vmatpush1.msra.mxu0 0.0
    %2206 = vmatprep.subr.mxu0 0.0
    %2207 = vmatpush1.msra.mxu0 0.0
    %2208 = vmatprep.subr.mxu0 0.0
    %2209 = vmatpush1.msra.mxu0 0.0
    %2210 = vmatprep.subr.mxu0 0.0
    %2211 = vmatpush1.msra.mxu0 0.0
    %2212 = vmatprep.subr.mxu0 0.0
    %2213 = vmatpush1.msra.mxu0 0.0
    %2214 = vmatprep.mubr.f32.mxu0 0.0
    %2215 = vmatmul.mubr.f32.gmra.mrb[0].mxu0 %v1971
    %v2216 = vpop.f32.mrb[0].mxu0
    %v2217 = vadd.f32 0.0, %v2216
    %v2218 = vpop.f32.mrb[0].mxu0
    %v2219 = vadd.f32 0.0, %v2218
    %2220 = vdwg.mxu0
    %2221 = vmatprep.subr.mxu0 0.0
    %2222 = vmatpush1.msra.mxu0 %v670
    %2223 = vmatprep.subr.mxu0 0.0
    %2224 = vmatpush1.msra.mxu0 %v673
    %2225 = vmatprep.subr.mxu0 0.0
    %2226 = vmatpush1.msra.mxu0 %v676
    %2227 = vmatprep.subr.mxu0 0.0
    %2228 = vmatpush1.msra.mxu0 %v679
    %2229 = vmatprep.subr.mxu0 0.0
    %2230 = vmatpush1.msra.mxu0 %v682
    %2231 = vmatprep.subr.mxu0 0.0
    %2232 = vmatpush1.msra.mxu0 %v685
    %2233 = vmatprep.subr.mxu0 0.0
    %2234 = vmatpush1.msra.mxu0 %v688
    %2235 = vmatprep.subr.mxu0 0.0
    %2236 = vmatpush1.msra.mxu0 %v691
    %2237 = vmatprep.subr.mxu0 0.0
    %2238 = vmatpush1.msra.mxu0 %v694
    %2239 = vmatprep.subr.mxu0 0.0
    %2240 = vmatpush1.msra.mxu0 %v697
    %2241 = vmatprep.subr.mxu0 0.0
    %2242 = vmatpush1.msra.mxu0 %v700
    %2243 = vmatprep.subr.mxu0 0.0
    %2244 = vmatpush1.msra.mxu0 %v703
    %2245 = vmatprep.subr.mxu0 0.0
    %2246 = vmatpush1.msra.mxu0 %v706
    %2247 = vmatprep.subr.mxu0 0.0
    %2248 = vmatpush1.msra.mxu0 %v709
    %2249 = vmatprep.subr.mxu0 0.0
    %2250 = vmatpush1.msra.mxu0 %v712
    %2251 = vmatprep.subr.mxu0 0.0
    %2252 = vmatpush1.msra.mxu0 %v715
    %2253 = vmatprep.subr.mxu0 0.0
    %2254 = vmatpush1.msra.mxu0 0.0
    %2255 = vmatprep.subr.mxu0 0.0
    %2256 = vmatpush1.msra.mxu0 0.0
    %2257 = vmatprep.subr.mxu0 0.0
    %2258 = vmatpush1.msra.mxu0 0.0
    %2259 = vmatprep.subr.mxu0 0.0
    %2260 = vmatpush1.msra.mxu0 0.0
    %2261 = vmatprep.subr.mxu0 0.0
    %2262 = vmatpush1.msra.mxu0 0.0
    %2263 = vmatprep.subr.mxu0 0.0
    %2264 = vmatpush1.msra.mxu0 0.0
    %2265 = vmatprep.subr.mxu0 0.0
    %2266 = vmatpush1.msra.mxu0 0.0
    %2267 = vmatprep.subr.mxu0 0.0
    %2268 = vmatpush1.msra.mxu0 0.0
    %2269 = vmatprep.subr.mxu0 0.0
    %2270 = vmatpush1.msra.mxu0 0.0
    %2271 = vmatprep.subr.mxu0 0.0
    %2272 = vmatpush1.msra.mxu0 0.0
    %2273 = vmatprep.subr.mxu0 0.0
    %2274 = vmatpush1.msra.mxu0 0.0
    %2275 = vmatprep.subr.mxu0 0.0
    %2276 = vmatpush1.msra.mxu0 0.0
    %2277 = vmatprep.subr.mxu0 0.0
    %2278 = vmatpush1.msra.mxu0 0.0
    %2279 = vmatprep.subr.mxu0 0.0
    %2280 = vmatpush1.msra.mxu0 0.0
    %2281 = vmatprep.subr.mxu0 0.0
    %2282 = vmatpush1.msra.mxu0 0.0
    %2283 = vmatprep.subr.mxu0 0.0
    %2284 = vmatpush1.msra.mxu0 0.0
    %2285 = vmatprep.mubr.f32.mxu0 0.0
    %2286 = vmatmul.mubr.f32.gmra.mrb[0].mxu0 %v1971
    %v2287 = vpop.f32.mrb[0].mxu0
    %v2288 = vadd.f32 0.0, %v2287
    %v2289 = vpop.f32.mrb[0].mxu0
    %2290 = vdwg.mxu0
    %v2291 = vadd.f32 %v2147, %v2217
    %v2292 = vxor.u32 %v2291, 2147483648
    %v2293 = vmul.f32 %v2292, 1.442695
    %v2294 = vpow.pop %v2293
    %v2295 = vadd.f32 %v2294, 1.0
    %v2296 = vrcp.pop %v2295
    %v2297 = vmul.f32 1.0, %v2296
    %v2298 = vadd.f32 %v2148, %v2219
    %v2299 = vxor.u32 %v2298, 2147483648
    %v2300 = vmul.f32 %v2299, 1.442695
    %v2301 = vpow.pop %v2300
    %v2302 = vadd.f32 %v2301, 1.0
    %v2303 = vrcp.pop %v2302
    %v2304 = vmul.f32 1.0, %v2303
    %v2305 = vadd.f32 %v2288, %v931
    %v2306 = vmul.f32 %v2297, %v2305
    %v2307 = vadd.f32 %v2149, %v2306
    %v2308 = vtanh.pop %v2307
    %v2309 = vsub.f32 1.0, %v2304
    %v2310 = vmul.f32 %v2309, %v2308
    %v2311 = vmul.f32 %v2304, %v1971
    %v2312 = vadd.f32 %v2310, %v2311
    %s2313 = smul.addr %s1803, 8
    %s2314 = scalar_lea.vmem [#allocation3], %s2313
    %v2315 = vld [vmem:[%s2314] sm:$0xff]
    %v2316 = vld [vmem:[%s2314 + $0x8] sm:$0xff]
    %v2317 = vld [vmem:[%s2314 + $0x10] sm:$0xff]
    %2318 = vmatprep.subr.mxu0 %v717
    %2319 = vmatpush1.msra.mxu0 %v716
    %2320 = vmatprep.subr.mxu0 %v720
    %2321 = vmatpush1.msra.mxu0 %v719
    %2322 = vmatprep.subr.mxu0 %v723
    %2323 = vmatpush1.msra.mxu0 %v722
    %2324 = vmatprep.subr.mxu0 %v726
    %2325 = vmatpush1.msra.mxu0 %v725
    %2326 = vmatprep.subr.mxu0 %v729
    %2327 = vmatpush1.msra.mxu0 %v728
    %2328 = vmatprep.subr.mxu0 %v732
    %2329 = vmatpush1.msra.mxu0 %v731
    %2330 = vmatprep.subr.mxu0 %v735
    %2331 = vmatpush1.msra.mxu0 %v734
    %2332 = vmatprep.subr.mxu0 %v738
    %2333 = vmatpush1.msra.mxu0 %v737
    %2334 = vmatprep.subr.mxu0 %v741
    %2335 = vmatpush1.msra.mxu0 %v740
    %2336 = vmatprep.subr.mxu0 %v744
    %2337 = vmatpush1.msra.mxu0 %v743
    %2338 = vmatprep.subr.mxu0 %v747
    %2339 = vmatpush1.msra.mxu0 %v746
    %2340 = vmatprep.subr.mxu0 %v750
    %2341 = vmatpush1.msra.mxu0 %v749
    %2342 = vmatprep.subr.mxu0 %v753
    %2343 = vmatpush1.msra.mxu0 %v752
    %2344 = vmatprep.subr.mxu0 %v756
    %2345 = vmatpush1.msra.mxu0 %v755
    %2346 = vmatprep.subr.mxu0 %v759
    %2347 = vmatpush1.msra.mxu0 %v758
    %2348 = vmatprep.subr.mxu0 %v762
    %2349 = vmatpush1.msra.mxu0 %v761
    %2350 = vmatprep.subr.mxu0 0.0
    %2351 = vmatpush1.msra.mxu0 0.0
    %2352 = vmatprep.subr.mxu0 0.0
    %2353 = vmatpush1.msra.mxu0 0.0
    %2354 = vmatprep.subr.mxu0 0.0
    %2355 = vmatpush1.msra.mxu0 0.0
    %2356 = vmatprep.subr.mxu0 0.0
    %2357 = vmatpush1.msra.mxu0 0.0
    %2358 = vmatprep.subr.mxu0 0.0
    %2359 = vmatpush1.msra.mxu0 0.0
    %2360 = vmatprep.subr.mxu0 0.0
    %2361 = vmatpush1.msra.mxu0 0.0
    %2362 = vmatprep.subr.mxu0 0.0
    %2363 = vmatpush1.msra.mxu0 0.0
    %2364 = vmatprep.subr.mxu0 0.0
    %2365 = vmatpush1.msra.mxu0 0.0
    %2366 = vmatprep.subr.mxu0 0.0
    %2367 = vmatpush1.msra.mxu0 0.0
    %2368 = vmatprep.subr.mxu0 0.0
    %2369 = vmatpush1.msra.mxu0 0.0
    %2370 = vmatprep.subr.mxu0 0.0
    %2371 = vmatpush1.msra.mxu0 0.0
    %2372 = vmatprep.subr.mxu0 0.0
    %2373 = vmatpush1.msra.mxu0 0.0
    %2374 = vmatprep.subr.mxu0 0.0
    %2375 = vmatpush1.msra.mxu0 0.0
    %2376 = vmatprep.subr.mxu0 0.0
    %2377 = vmatpush1.msra.mxu0 0.0
    %2378 = vmatprep.subr.mxu0 0.0
    %2379 = vmatpush1.msra.mxu0 0.0
    %2380 = vmatprep.subr.mxu0 0.0
    %2381 = vmatpush1.msra.mxu0 0.0
    %2382 = vmatprep.mubr.f32.mxu0 0.0
    %2383 = vmatmul.mubr.f32.gmra.mrb[0].mxu0 %v2140
    %v2384 = vpop.f32.mrb[0].mxu0
    %v2385 = vadd.f32 0.0, %v2384
    %v2386 = vpop.f32.mrb[0].mxu0
    %v2387 = vadd.f32 0.0, %v2386
    %2388 = vdwg.mxu0
    %2389 = vmatprep.subr.mxu0 0.0
    %2390 = vmatpush1.msra.mxu0 %v718
    %2391 = vmatprep.subr.mxu0 0.0
    %2392 = vmatpush1.msra.mxu0 %v721
    %2393 = vmatprep.subr.mxu0 0.0
    %2394 = vmatpush1.msra.mxu0 %v724
    %2395 = vmatprep.subr.mxu0 0.0
    %2396 = vmatpush1.msra.mxu0 %v727
    %2397 = vmatprep.subr.mxu0 0.0
    %2398 = vmatpush1.msra.mxu0 %v730
    %2399 = vmatprep.subr.mxu0 0.0
    %2400 = vmatpush1.msra.mxu0 %v733
    %2401 = vmatprep.subr.mxu0 0.0
    %2402 = vmatpush1.msra.mxu0 %v736
    %2403 = vmatprep.subr.mxu0 0.0
    %2404 = vmatpush1.msra.mxu0 %v739
    %2405 = vmatprep.subr.mxu0 0.0
    %2406 = vmatpush1.msra.mxu0 %v742
    %2407 = vmatprep.subr.mxu0 0.0
    %2408 = vmatpush1.msra.mxu0 %v745
    %2409 = vmatprep.subr.mxu0 0.0
    %2410 = vmatpush1.msra.mxu0 %v748
    %2411 = vmatprep.subr.mxu0 0.0
    %2412 = vmatpush1.msra.mxu0 %v751
    %2413 = vmatprep.subr.mxu0 0.0
    %2414 = vmatpush1.msra.mxu0 %v754
    %2415 = vmatprep.subr.mxu0 0.0
    %2416 = vmatpush1.msra.mxu0 %v757
    %2417 = vmatprep.subr.mxu0 0.0
    %2418 = vmatpush1.msra.mxu0 %v760
    %2419 = vmatprep.subr.mxu0 0.0
    %2420 = vmatpush1.msra.mxu0 %v763
    %2421 = vmatprep.subr.mxu0 0.0
    %2422 = vmatpush1.msra.mxu0 0.0
    %2423 = vmatprep.subr.mxu0 0.0
    %2424 = vmatpush1.msra.mxu0 0.0
    %2425 = vmatprep.subr.mxu0 0.0
    %2426 = vmatpush1.msra.mxu0 0.0
    %2427 = vmatprep.subr.mxu0 0.0
    %2428 = vmatpush1.msra.mxu0 0.0
    %2429 = vmatprep.subr.mxu0 0.0
    %2430 = vmatpush1.msra.mxu0 0.0
    %2431 = vmatprep.subr.mxu0 0.0
    %2432 = vmatpush1.msra.mxu0 0.0
    %2433 = vmatprep.subr.mxu0 0.0
    %2434 = vmatpush1.msra.mxu0 0.0
    %2435 = vmatprep.subr.mxu0 0.0
    %2436 = vmatpush1.msra.mxu0 0.0
    %2437 = vmatprep.subr.mxu0 0.0
    %2438 = vmatpush1.msra.mxu0 0.0
    %2439 = vmatprep.subr.mxu0 0.0
    %2440 = vmatpush1.msra.mxu0 0.0
    %2441 = vmatprep.subr.mxu0 0.0
    %2442 = vmatpush1.msra.mxu0 0.0
    %2443 = vmatprep.subr.mxu0 0.0
    %2444 = vmatpush1.msra.mxu0 0.0
    %2445 = vmatprep.subr.mxu0 0.0
    %2446 = vmatpush1.msra.mxu0 0.0
    %2447 = vmatprep.subr.mxu0 0.0
    %2448 = vmatpush1.msra.mxu0 0.0
    %2449 = vmatprep.subr.mxu0 0.0
    %2450 = vmatpush1.msra.mxu0 0.0
    %2451 = vmatprep.subr.mxu0 0.0
    %2452 = vmatpush1.msra.mxu0 0.0
    %2453 = vmatprep.mubr.f32.mxu0 0.0
    %2454 = vmatmul.mubr.f32.gmra.mrb[0].mxu0 %v2140
    %v2455 = vpop.f32.mrb[0].mxu0
    %v2456 = vadd.f32 0.0, %v2455
    %v2457 = vpop.f32.mrb[0].mxu0
    %2458 = vdwg.mxu0
    %v2459 = vadd.f32 %v2315, %v2385
    %v2460 = vxor.u32 %v2459, 2147483648
    %v2461 = vmul.f32 %v2460, 1.442695
    %v2462 = vpow.pop %v2461
    %v2463 = vadd.f32 %v2462, 1.0
    %v2464 = vrcp.pop %v2463
    %v2465 = vmul.f32 1.0, %v2464
    %v2466 = vadd.f32 %v2316, %v2387
    %v2467 = vxor.u32 %v2466, 2147483648
    %v2468 = vmul.f32 %v2467, 1.442695
    %v2469 = vpow.pop %v2468
    %v2470 = vadd.f32 %v2469, 1.0
    %v2471 = vrcp.pop %v2470
    %v2472 = vmul.f32 1.0, %v2471
    %v2473 = vadd.f32 %v2456, %v1106
    %v2474 = vmul.f32 %v2465, %v2473
    %v2475 = vadd.f32 %v2317, %v2474
    %v2476 = vtanh.pop %v2475
    %v2477 = vsub.f32 1.0, %v2472
    %v2478 = vmul.f32 %v2477, %v2476
    %v2479 = vmul.f32 %v2472, %v2140
    %v2480 = vadd.f32 %v2478, %v2479
    %s2481 = scalar_lea.vmem [#allocation4], 32
    %2482 = vst [vmem:[%s2481] sm:$0xff] %v2312
    %s2483 = scalar_lea.vmem [#allocation5], 24
    %2484 = vst [vmem:[%s2483] sm:$0xff] %v2480
    %s2485 = smul.addr %s1630, 8
    %s2486 = scalar_lea.vmem [#allocation2], %s2485
    %v2487 = vld [vmem:[%s2486] sm:$0xff]
    %v2488 = vld [vmem:[%s2486 + $0x8] sm:$0xff]
    %v2489 = vld [vmem:[%s2486 + $0x10] sm:$0xff]
    %2490 = vmatprep.subr.mxu0 %v669
    %2491 = vmatpush1.msra.mxu0 %v668
    %2492 = vmatprep.subr.mxu0 %v672
    %2493 = vmatpush1.msra.mxu0 %v671
    %2494 = vmatprep.subr.mxu0 %v675
    %2495 = vmatpush1.msra.mxu0 %v674
    %2496 = vmatprep.subr.mxu0 %v678
    %2497 = vmatpush1.msra.mxu0 %v677
    %2498 = vmatprep.subr.mxu0 %v681
    %2499 = vmatpush1.msra.mxu0 %v680
    %2500 = vmatprep.subr.mxu0 %v684
    %2501 = vmatpush1.msra.mxu0 %v683
    %2502 = vmatprep.subr.mxu0 %v687
    %2503 = vmatpush1.msra.mxu0 %v686
    %2504 = vmatprep.subr.mxu0 %v690
    %2505 = vmatpush1.msra.mxu0 %v689
    %2506 = vmatprep.subr.mxu0 %v693
    %2507 = vmatpush1.msra.mxu0 %v692
    %2508 = vmatprep.subr.mxu0 %v696
    %2509 = vmatpush1.msra.mxu0 %v695
    %2510 = vmatprep.subr.mxu0 %v699
    %2511 = vmatpush1.msra.mxu0 %v698
    %2512 = vmatprep.subr.mxu0 %v702
    %2513 = vmatpush1.msra.mxu0 %v701
    %2514 = vmatprep.subr.mxu0 %v705
    %2515 = vmatpush1.msra.mxu0 %v704
    %2516 = vmatprep.subr.mxu0 %v708
    %2517 = vmatpush1.msra.mxu0 %v707
    %2518 = vmatprep.subr.mxu0 %v711
    %2519 = vmatpush1.msra.mxu0 %v710
    %2520 = vmatprep.subr.mxu0 %v714
    %2521 = vmatpush1.msra.mxu0 %v713
    %2522 = vmatprep.subr.mxu0 0.0
    %2523 = vmatpush1.msra.mxu0 0.0
    %2524 = vmatprep.subr.mxu0 0.0
    %2525 = vmatpush1.msra.mxu0 0.0
    %2526 = vmatprep.subr.mxu0 0.0
    %2527 = vmatpush1.msra.mxu0 0.0
    %2528 = vmatprep.subr.mxu0 0.0
    %2529 = vmatpush1.msra.mxu0 0.0
    %2530 = vmatprep.subr.mxu0 0.0
    %2531 = vmatpush1.msra.mxu0 0.0
    %2532 = vmatprep.subr.mxu0 0.0
    %2533 = vmatpush1.msra.mxu0 0.0
    %2534 = vmatprep.subr.mxu0 0.0
    %2535 = vmatpush1.msra.mxu0 0.0
    %2536 = vmatprep.subr.mxu0 0.0
    %2537 = vmatpush1.msra.mxu0 0.0
    %2538 = vmatprep.subr.mxu0 0.0
    %2539 = vmatpush1.msra.mxu0 0.0
    %2540 = vmatprep.subr.mxu0 0.0
    %2541 = vmatpush1.msra.mxu0 0.0
    %2542 = vmatprep.subr.mxu0 0.0
    %2543 = vmatpush1.msra.mxu0 0.0
    %2544 = vmatprep.subr.mxu0 0.0
    %2545 = vmatpush1.msra.mxu0 0.0
    %2546 = vmatprep.subr.mxu0 0.0
    %2547 = vmatpush1.msra.mxu0 0.0
    %2548 = vmatprep.subr.mxu0 0.0
    %2549 = vmatpush1.msra.mxu0 0.0
    %2550 = vmatprep.subr.mxu0 0.0
    %2551 = vmatpush1.msra.mxu0 0.0
    %2552 = vmatprep.subr.mxu0 0.0
    %2553 = vmatpush1.msra.mxu0 0.0
    %2554 = vmatprep.mubr.f32.mxu0 0.0
    %2555 = vmatmul.mubr.f32.gmra.mrb[0].mxu0 %v2312
    %v2556 = vpop.f32.mrb[0].mxu0
    %v2557 = vadd.f32 0.0, %v2556
    %v2558 = vpop.f32.mrb[0].mxu0
    %v2559 = vadd.f32 0.0, %v2558
    %2560 = vdwg.mxu0
    %2561 = vmatprep.subr.mxu0 0.0
    %2562 = vmatpush1.msra.mxu0 %v670
    %2563 = vmatprep.subr.mxu0 0.0
    %2564 = vmatpush1.msra.mxu0 %v673
    %2565 = vmatprep.subr.mxu0 0.0
    %2566 = vmatpush1.msra.mxu0 %v676
    %2567 = vmatprep.subr.mxu0 0.0
    %2568 = vmatpush1.msra.mxu0 %v679
    %2569 = vmatprep.subr.mxu0 0.0
    %2570 = vmatpush1.msra.mxu0 %v682
    %2571 = vmatprep.subr.mxu0 0.0
    %2572 = vmatpush1.msra.mxu0 %v685
    %2573 = vmatprep.subr.mxu0 0.0
    %2574 = vmatpush1.msra.mxu0 %v688
    %2575 = vmatprep.subr.mxu0 0.0
    %2576 = vmatpush1.msra.mxu0 %v691
    %2577 = vmatprep.subr.mxu0 0.0
    %2578 = vmatpush1.msra.mxu0 %v694
    %2579 = vmatprep.subr.mxu0 0.0
    %2580 = vmatpush1.msra.mxu0 %v697
    %2581 = vmatprep.subr.mxu0 0.0
    %2582 = vmatpush1.msra.mxu0 %v700
    %2583 = vmatprep.subr.mxu0 0.0
    %2584 = vmatpush1.msra.mxu0 %v703
    %2585 = vmatprep.subr.mxu0 0.0
    %2586 = vmatpush1.msra.mxu0 %v706
    %2587 = vmatprep.subr.mxu0 0.0
    %2588 = vmatpush1.msra.mxu0 %v709
    %2589 = vmatprep.subr.mxu0 0.0
    %2590 = vmatpush1.msra.mxu0 %v712
    %2591 = vmatprep.subr.mxu0 0.0
    %2592 = vmatpush1.msra.mxu0 %v715
    %2593 = vmatprep.subr.mxu0 0.0
    %2594 = vmatpush1.msra.mxu0 0.0
    %2595 = vmatprep.subr.mxu0 0.0
    %2596 = vmatpush1.msra.mxu0 0.0
    %2597 = vmatprep.subr.mxu0 0.0
    %2598 = vmatpush1.msra.mxu0 0.0
    %2599 = vmatprep.subr.mxu0 0.0
    %2600 = vmatpush1.msra.mxu0 0.0
    %2601 = vmatprep.subr.mxu0 0.0
    %2602 = vmatpush1.msra.mxu0 0.0
    %2603 = vmatprep.subr.mxu0 0.0
    %2604 = vmatpush1.msra.mxu0 0.0
    %2605 = vmatprep.subr.mxu0 0.0
    %2606 = vmatpush1.msra.mxu0 0.0
    %2607 = vmatprep.subr.mxu0 0.0
    %2608 = vmatpush1.msra.mxu0 0.0
    %2609 = vmatprep.subr.mxu0 0.0
    %2610 = vmatpush1.msra.mxu0 0.0
    %2611 = vmatprep.subr.mxu0 0.0
    %2612 = vmatpush1.msra.mxu0 0.0
    %2613 = vmatprep.subr.mxu0 0.0
    %2614 = vmatpush1.msra.mxu0 0.0
    %2615 = vmatprep.subr.mxu0 0.0
    %2616 = vmatpush1.msra.mxu0 0.0
    %2617 = vmatprep.subr.mxu0 0.0
    %2618 = vmatpush1.msra.mxu0 0.0
    %2619 = vmatprep.subr.mxu0 0.0
    %2620 = vmatpush1.msra.mxu0 0.0
    %2621 = vmatprep.subr.mxu0 0.0
    %2622 = vmatpush1.msra.mxu0 0.0
    %2623 = vmatprep.subr.mxu0 0.0
    %2624 = vmatpush1.msra.mxu0 0.0
    %2625 = vmatprep.mubr.f32.mxu0 0.0
    %2626 = vmatmul.mubr.f32.gmra.mrb[0].mxu0 %v2312
    %v2627 = vpop.f32.mrb[0].mxu0
    %v2628 = vadd.f32 0.0, %v2627
    %v2629 = vpop.f32.mrb[0].mxu0
    %2630 = vdwg.mxu0
    %v2631 = vadd.f32 %v2487, %v2557
    %v2632 = vxor.u32 %v2631, 2147483648
    %v2633 = vmul.f32 %v2632, 1.442695
    %v2634 = vpow.pop %v2633
    %v2635 = vadd.f32 %v2634, 1.0
    %v2636 = vrcp.pop %v2635
    %v2637 = vmul.f32 1.0, %v2636
    %v2638 = vadd.f32 %v2488, %v2559
    %v2639 = vxor.u32 %v2638, 2147483648
    %v2640 = vmul.f32 %v2639, 1.442695
    %v2641 = vpow.pop %v2640
    %v2642 = vadd.f32 %v2641, 1.0
    %v2643 = vrcp.pop %v2642
    %v2644 = vmul.f32 1.0, %v2643
    %v2645 = vadd.f32 %v2628, %v931
    %v2646 = vmul.f32 %v2637, %v2645
    %v2647 = vadd.f32 %v2489, %v2646
    %v2648 = vtanh.pop %v2647
    %v2649 = vsub.f32 1.0, %v2644
    %v2650 = vmul.f32 %v2649, %v2648
    %v2651 = vmul.f32 %v2644, %v2312
    %v2652 = vadd.f32 %v2650, %v2651
    %s2653 = smul.addr %s1461, 8
    %s2654 = scalar_lea.vmem [#allocation3], %s2653
    %v2655 = vld [vmem:[%s2654] sm:$0xff]
    %v2656 = vld [vmem:[%s2654 + $0x8] sm:$0xff]
    %v2657 = vld [vmem:[%s2654 + $0x10] sm:$0xff]
    %2658 = vmatprep.subr.mxu0 %v717
    %2659 = vmatpush1.msra.mxu0 %v716
    %2660 = vmatprep.subr.mxu0 %v720
    %2661 = vmatpush1.msra.mxu0 %v719
    %2662 = vmatprep.subr.mxu0 %v723
    %2663 = vmatpush1.msra.mxu0 %v722
    %2664 = vmatprep.subr.mxu0 %v726
    %2665 = vmatpush1.msra.mxu0 %v725
    %2666 = vmatprep.subr.mxu0 %v729
    %2667 = vmatpush1.msra.mxu0 %v728
    %2668 = vmatprep.subr.mxu0 %v732
    %2669 = vmatpush1.msra.mxu0 %v731
    %2670 = vmatprep.subr.mxu0 %v735
    %2671 = vmatpush1.msra.mxu0 %v734
    %2672 = vmatprep.subr.mxu0 %v738
    %2673 = vmatpush1.msra.mxu0 %v737
    %2674 = vmatprep.subr.mxu0 %v741
    %2675 = vmatpush1.msra.mxu0 %v740
    %2676 = vmatprep.subr.mxu0 %v744
    %2677 = vmatpush1.msra.mxu0 %v743
    %2678 = vmatprep.subr.mxu0 %v747
    %2679 = vmatpush1.msra.mxu0 %v746
    %2680 = vmatprep.subr.mxu0 %v750
    %2681 = vmatpush1.msra.mxu0 %v749
    %2682 = vmatprep.subr.mxu0 %v753
    %2683 = vmatpush1.msra.mxu0 %v752
    %2684 = vmatprep.subr.mxu0 %v756
    %2685 = vmatpush1.msra.mxu0 %v755
    %2686 = vmatprep.subr.mxu0 %v759
    %2687 = vmatpush1.msra.mxu0 %v758
    %2688 = vmatprep.subr.mxu0 %v762
    %2689 = vmatpush1.msra.mxu0 %v761
    %2690 = vmatprep.subr.mxu0 0.0
    %2691 = vmatpush1.msra.mxu0 0.0
    %2692 = vmatprep.subr.mxu0 0.0
    %2693 = vmatpush1.msra.mxu0 0.0
    %2694 = vmatprep.subr.mxu0 0.0
    %2695 = vmatpush1.msra.mxu0 0.0
    %2696 = vmatprep.subr.mxu0 0.0
    %2697 = vmatpush1.msra.mxu0 0.0
    %2698 = vmatprep.subr.mxu0 0.0
    %2699 = vmatpush1.msra.mxu0 0.0
    %2700 = vmatprep.subr.mxu0 0.0
    %2701 = vmatpush1.msra.mxu0 0.0
    %2702 = vmatprep.subr.mxu0 0.0
    %2703 = vmatpush1.msra.mxu0 0.0
    %2704 = vmatprep.subr.mxu0 0.0
    %2705 = vmatpush1.msra.mxu0 0.0
    %2706 = vmatprep.subr.mxu0 0.0
    %2707 = vmatpush1.msra.mxu0 0.0
    %2708 = vmatprep.subr.mxu0 0.0
    %2709 = vmatpush1.msra.mxu0 0.0
    %2710 = vmatprep.subr.mxu0 0.0
    %2711 = vmatpush1.msra.mxu0 0.0
    %2712 = vmatprep.subr.mxu0 0.0
    %2713 = vmatpush1.msra.mxu0 0.0
    %2714 = vmatprep.subr.mxu0 0.0
    %2715 = vmatpush1.msra.mxu0 0.0
    %2716 = vmatprep.subr.mxu0 0.0
    %2717 = vmatpush1.msra.mxu0 0.0
    %2718 = vmatprep.subr.mxu0 0.0
    %2719 = vmatpush1.msra.mxu0 0.0
    %2720 = vmatprep.subr.mxu0 0.0
    %2721 = vmatpush1.msra.mxu0 0.0
    %2722 = vmatprep.mubr.f32.mxu0 0.0
    %2723 = vmatmul.mubr.f32.gmra.mrb[0].mxu0 %v2480
    %v2724 = vpop.f32.mrb[0].mxu0
    %v2725 = vadd.f32 0.0, %v2724
    %v2726 = vpop.f32.mrb[0].mxu0
    %v2727 = vadd.f32 0.0, %v2726
    %2728 = vdwg.mxu0
    %2729 = vmatprep.subr.mxu0 0.0
    %2730 = vmatpush1.msra.mxu0 %v718
    %2731 = vmatprep.subr.mxu0 0.0
    %2732 = vmatpush1.msra.mxu0 %v721
    %2733 = vmatprep.subr.mxu0 0.0
    %2734 = vmatpush1.msra.mxu0 %v724
    %2735 = vmatprep.subr.mxu0 0.0
    %2736 = vmatpush1.msra.mxu0 %v727
    %2737 = vmatprep.subr.mxu0 0.0
    %2738 = vmatpush1.msra.mxu0 %v730
    %2739 = vmatprep.subr.mxu0 0.0
    %2740 = vmatpush1.msra.mxu0 %v733
    %2741 = vmatprep.subr.mxu0 0.0
    %2742 = vmatpush1.msra.mxu0 %v736
    %2743 = vmatprep.subr.mxu0 0.0
    %2744 = vmatpush1.msra.mxu0 %v739
    %2745 = vmatprep.subr.mxu0 0.0
    %2746 = vmatpush1.msra.mxu0 %v742
    %2747 = vmatprep.subr.mxu0 0.0
    %2748 = vmatpush1.msra.mxu0 %v745
    %2749 = vmatprep.subr.mxu0 0.0
    %2750 = vmatpush1.msra.mxu0 %v748
    %2751 = vmatprep.subr.mxu0 0.0
    %2752 = vmatpush1.msra.mxu0 %v751
    %2753 = vmatprep.subr.mxu0 0.0
    %2754 = vmatpush1.msra.mxu0 %v754
    %2755 = vmatprep.subr.mxu0 0.0
    %2756 = vmatpush1.msra.mxu0 %v757
    %2757 = vmatprep.subr.mxu0 0.0
    %2758 = vmatpush1.msra.mxu0 %v760
    %2759 = vmatprep.subr.mxu0 0.0
    %2760 = vmatpush1.msra.mxu0 %v763
    %2761 = vmatprep.subr.mxu0 0.0
    %2762 = vmatpush1.msra.mxu0 0.0
    %2763 = vmatprep.subr.mxu0 0.0
    %2764 = vmatpush1.msra.mxu0 0.0
    %2765 = vmatprep.subr.mxu0 0.0
    %2766 = vmatpush1.msra.mxu0 0.0
    %2767 = vmatprep.subr.mxu0 0.0
    %2768 = vmatpush1.msra.mxu0 0.0
    %2769 = vmatprep.subr.mxu0 0.0
    %2770 = vmatpush1.msra.mxu0 0.0
    %2771 = vmatprep.subr.mxu0 0.0
    %2772 = vmatpush1.msra.mxu0 0.0
    %2773 = vmatprep.subr.mxu0 0.0
    %2774 = vmatpush1.msra.mxu0 0.0
    %2775 = vmatprep.subr.mxu0 0.0
    %2776 = vmatpush1.msra.mxu0 0.0
    %2777 = vmatprep.subr.mxu0 0.0
    %2778 = vmatpush1.msra.mxu0 0.0
    %2779 = vmatprep.subr.mxu0 0.0
    %2780 = vmatpush1.msra.mxu0 0.0
    %2781 = vmatprep.subr.mxu0 0.0
    %2782 = vmatpush1.msra.mxu0 0.0
    %2783 = vmatprep.subr.mxu0 0.0
    %2784 = vmatpush1.msra.mxu0 0.0
    %2785 = vmatprep.subr.mxu0 0.0
    %2786 = vmatpush1.msra.mxu0 0.0
    %2787 = vmatprep.subr.mxu0 0.0
    %2788 = vmatpush1.msra.mxu0 0.0
    %2789 = vmatprep.subr.mxu0 0.0
    %2790 = vmatpush1.msra.mxu0 0.0
    %2791 = vmatprep.subr.mxu0 0.0
    %2792 = vmatpush1.msra.mxu0 0.0
    %2793 = vmatprep.mubr.f32.mxu0 0.0
    %2794 = vmatmul.mubr.f32.gmra.mrb[0].mxu0 %v2480
    %v2795 = vpop.f32.mrb[0].mxu0
    %v2796 = vadd.f32 0.0, %v2795
    %v2797 = vpop.f32.mrb[0].mxu0
    %2798 = vdwg.mxu0
    %v2799 = vadd.f32 %v2655, %v2725
    %v2800 = vxor.u32 %v2799, 2147483648
    %v2801 = vmul.f32 %v2800, 1.442695
    %v2802 = vpow.pop %v2801
    %v2803 = vadd.f32 %v2802, 1.0
    %v2804 = vrcp.pop %v2803
    %v2805 = vmul.f32 1.0, %v2804
    %v2806 = vadd.f32 %v2656, %v2727
    %v2807 = vxor.u32 %v2806, 2147483648
    %v2808 = vmul.f32 %v2807, 1.442695
    %v2809 = vpow.pop %v2808
    %v2810 = vadd.f32 %v2809, 1.0
    %v2811 = vrcp.pop %v2810
    %v2812 = vmul.f32 1.0, %v2811
    %v2813 = vadd.f32 %v2796, %v1106
    %v2814 = vmul.f32 %v2805, %v2813
    %v2815 = vadd.f32 %v2657, %v2814
    %v2816 = vtanh.pop %v2815
    %v2817 = vsub.f32 1.0, %v2812
    %v2818 = vmul.f32 %v2817, %v2816
    %v2819 = vmul.f32 %v2812, %v2480
    %v2820 = vadd.f32 %v2818, %v2819
    %s2821 = scalar_lea.vmem [#allocation4], 40
    %2822 = vst [vmem:[%s2821] sm:$0xff] %v2652
    %s2823 = scalar_lea.vmem [#allocation5], 16
    %2824 = vst [vmem:[%s2823] sm:$0xff] %v2820
    %s2825 = smul.addr %s1288, 8
    %s2826 = scalar_lea.vmem [#allocation2], %s2825
    %v2827 = vld [vmem:[%s2826] sm:$0xff]
    %v2828 = vld [vmem:[%s2826 + $0x8] sm:$0xff]
    %v2829 = vld [vmem:[%s2826 + $0x10] sm:$0xff]
    %2830 = vmatprep.subr.mxu0 %v669
    %2831 = vmatpush1.msra.mxu0 %v668
    %2832 = vmatprep.subr.mxu0 %v672
    %2833 = vmatpush1.msra.mxu0 %v671
    %2834 = vmatprep.subr.mxu0 %v675
    %2835 = vmatpush1.msra.mxu0 %v674
    %2836 = vmatprep.subr.mxu0 %v678
    %2837 = vmatpush1.msra.mxu0 %v677
    %2838 = vmatprep.subr.mxu0 %v681
    %2839 = vmatpush1.msra.mxu0 %v680
    %2840 = vmatprep.subr.mxu0 %v684
    %2841 = vmatpush1.msra.mxu0 %v683
    %2842 = vmatprep.subr.mxu0 %v687
    %2843 = vmatpush1.msra.mxu0 %v686
    %2844 = vmatprep.subr.mxu0 %v690
    %2845 = vmatpush1.msra.mxu0 %v689
    %2846 = vmatprep.subr.mxu0 %v693
    %2847 = vmatpush1.msra.mxu0 %v692
    %2848 = vmatprep.subr.mxu0 %v696
    %2849 = vmatpush1.msra.mxu0 %v695
    %2850 = vmatprep.subr.mxu0 %v699
    %2851 = vmatpush1.msra.mxu0 %v698
    %2852 = vmatprep.subr.mxu0 %v702
    %2853 = vmatpush1.msra.mxu0 %v701
    %2854 = vmatprep.subr.mxu0 %v705
    %2855 = vmatpush1.msra.mxu0 %v704
    %2856 = vmatprep.subr.mxu0 %v708
    %2857 = vmatpush1.msra.mxu0 %v707
    %2858 = vmatprep.subr.mxu0 %v711
    %2859 = vmatpush1.msra.mxu0 %v710
    %2860 = vmatprep.subr.mxu0 %v714
    %2861 = vmatpush1.msra.mxu0 %v713
    %2862 = vmatprep.subr.mxu0 0.0
    %2863 = vmatpush1.msra.mxu0 0.0
    %2864 = vmatprep.subr.mxu0 0.0
    %2865 = vmatpush1.msra.mxu0 0.0
    %2866 = vmatprep.subr.mxu0 0.0
    %2867 = vmatpush1.msra.mxu0 0.0
    %2868 = vmatprep.subr.mxu0 0.0
    %2869 = vmatpush1.msra.mxu0 0.0
    %2870 = vmatprep.subr.mxu0 0.0
    %2871 = vmatpush1.msra.mxu0 0.0
    %2872 = vmatprep.subr.mxu0 0.0
    %2873 = vmatpush1.msra.mxu0 0.0
    %2874 = vmatprep.subr.mxu0 0.0
    %2875 = vmatpush1.msra.mxu0 0.0
    %2876 = vmatprep.subr.mxu0 0.0
    %2877 = vmatpush1.msra.mxu0 0.0
    %2878 = vmatprep.subr.mxu0 0.0
    %2879 = vmatpush1.msra.mxu0 0.0
    %2880 = vmatprep.subr.mxu0 0.0
    %2881 = vmatpush1.msra.mxu0 0.0
    %2882 = vmatprep.subr.mxu0 0.0
    %2883 = vmatpush1.msra.mxu0 0.0
    %2884 = vmatprep.subr.mxu0 0.0
    %2885 = vmatpush1.msra.mxu0 0.0
    %2886 = vmatprep.subr.mxu0 0.0
    %2887 = vmatpush1.msra.mxu0 0.0
    %2888 = vmatprep.subr.mxu0 0.0
    %2889 = vmatpush1.msra.mxu0 0.0
    %2890 = vmatprep.subr.mxu0 0.0
    %2891 = vmatpush1.msra.mxu0 0.0
    %2892 = vmatprep.subr.mxu0 0.0
    %2893 = vmatpush1.msra.mxu0 0.0
    %2894 = vmatprep.mubr.f32.mxu0 0.0
    %2895 = vmatmul.mubr.f32.gmra.mrb[0].mxu0 %v2652
    %v2896 = vpop.f32.mrb[0].mxu0
    %v2897 = vadd.f32 0.0, %v2896
    %v2898 = vpop.f32.mrb[0].mxu0
    %v2899 = vadd.f32 0.0, %v2898
    %2900 = vdwg.mxu0
    %2901 = vmatprep.subr.mxu0 0.0
    %2902 = vmatpush1.msra.mxu0 %v670
    %2903 = vmatprep.subr.mxu0 0.0
    %2904 = vmatpush1.msra.mxu0 %v673
    %2905 = vmatprep.subr.mxu0 0.0
    %2906 = vmatpush1.msra.mxu0 %v676
    %2907 = vmatprep.subr.mxu0 0.0
    %2908 = vmatpush1.msra.mxu0 %v679
    %2909 = vmatprep.subr.mxu0 0.0
    %2910 = vmatpush1.msra.mxu0 %v682
    %2911 = vmatprep.subr.mxu0 0.0
    %2912 = vmatpush1.msra.mxu0 %v685
    %2913 = vmatprep.subr.mxu0 0.0
    %2914 = vmatpush1.msra.mxu0 %v688
    %2915 = vmatprep.subr.mxu0 0.0
    %2916 = vmatpush1.msra.mxu0 %v691
    %2917 = vmatprep.subr.mxu0 0.0
    %2918 = vmatpush1.msra.mxu0 %v694
    %2919 = vmatprep.subr.mxu0 0.0
    %2920 = vmatpush1.msra.mxu0 %v697
    %2921 = vmatprep.subr.mxu0 0.0
    %2922 = vmatpush1.msra.mxu0 %v700
    %2923 = vmatprep.subr.mxu0 0.0
    %2924 = vmatpush1.msra.mxu0 %v703
    %2925 = vmatprep.subr.mxu0 0.0
    %2926 = vmatpush1.msra.mxu0 %v706
    %2927 = vmatprep.subr.mxu0 0.0
    %2928 = vmatpush1.msra.mxu0 %v709
    %2929 = vmatprep.subr.mxu0 0.0
    %2930 = vmatpush1.msra.mxu0 %v712
    %2931 = vmatprep.subr.mxu0 0.0
    %2932 = vmatpush1.msra.mxu0 %v715
    %2933 = vmatprep.subr.mxu0 0.0
    %2934 = vmatpush1.msra.mxu0 0.0
    %2935 = vmatprep.subr.mxu0 0.0
    %2936 = vmatpush1.msra.mxu0 0.0
    %2937 = vmatprep.subr.mxu0 0.0
    %2938 = vmatpush1.msra.mxu0 0.0
    %2939 = vmatprep.subr.mxu0 0.0
    %2940 = vmatpush1.msra.mxu0 0.0
    %2941 = vmatprep.subr.mxu0 0.0
    %2942 = vmatpush1.msra.mxu0 0.0
    %2943 = vmatprep.subr.mxu0 0.0
    %2944 = vmatpush1.msra.mxu0 0.0
    %2945 = vmatprep.subr.mxu0 0.0
    %2946 = vmatpush1.msra.mxu0 0.0
    %2947 = vmatprep.subr.mxu0 0.0
    %2948 = vmatpush1.msra.mxu0 0.0
    %2949 = vmatprep.subr.mxu0 0.0
    %2950 = vmatpush1.msra.mxu0 0.0
    %2951 = vmatprep.subr.mxu0 0.0
    %2952 = vmatpush1.msra.mxu0 0.0
    %2953 = vmatprep.subr.mxu0 0.0
    %2954 = vmatpush1.msra.mxu0 0.0
    %2955 = vmatprep.subr.mxu0 0.0
    %2956 = vmatpush1.msra.mxu0 0.0
    %2957 = vmatprep.subr.mxu0 0.0
    %2958 = vmatpush1.msra.mxu0 0.0
    %2959 = vmatprep.subr.mxu0 0.0
    %2960 = vmatpush1.msra.mxu0 0.0
    %2961 = vmatprep.subr.mxu0 0.0
    %2962 = vmatpush1.msra.mxu0 0.0
    %2963 = vmatprep.subr.mxu0 0.0
    %2964 = vmatpush1.msra.mxu0 0.0
    %2965 = vmatprep.mubr.f32.mxu0 0.0
    %2966 = vmatmul.mubr.f32.gmra.mrb[0].mxu0 %v2652
    %v2967 = vpop.f32.mrb[0].mxu0
    %v2968 = vadd.f32 0.0, %v2967
    %v2969 = vpop.f32.mrb[0].mxu0
    %2970 = vdwg.mxu0
    %v2971 = vadd.f32 %v2827, %v2897
    %v2972 = vxor.u32 %v2971, 2147483648
    %v2973 = vmul.f32 %v2972, 1.442695
    %v2974 = vpow.pop %v2973
    %v2975 = vadd.f32 %v2974, 1.0
    %v2976 = vrcp.pop %v2975
    %v2977 = vmul.f32 1.0, %v2976
    %v2978 = vadd.f32 %v2828, %v2899
    %v2979 = vxor.u32 %v2978, 2147483648
    %v2980 = vmul.f32 %v2979, 1.442695
    %v2981 = vpow.pop %v2980
    %v2982 = vadd.f32 %v2981, 1.0
    %v2983 = vrcp.pop %v2982
    %v2984 = vmul.f32 1.0, %v2983
    %v2985 = vadd.f32 %v2968, %v931
    %v2986 = vmul.f32 %v2977, %v2985
    %v2987 = vadd.f32 %v2829, %v2986
    %v2988 = vtanh.pop %v2987
    %v2989 = vsub.f32 1.0, %v2984
    %v2990 = vmul.f32 %v2989, %v2988
    %v2991 = vmul.f32 %v2984, %v2652
    %v2992 = vadd.f32 %v2990, %v2991
    %s2993 = smul.addr %s1119, 8
    %s2994 = scalar_lea.vmem [#allocation3], %s2993
    %v2995 = vld [vmem:[%s2994] sm:$0xff]
    %v2996 = vld [vmem:[%s2994 + $0x8] sm:$0xff]
    %v2997 = vld [vmem:[%s2994 + $0x10] sm:$0xff]
    %2998 = vmatprep.subr.mxu0 %v717
    %2999 = vmatpush1.msra.mxu0 %v716
    %3000 = vmatprep.subr.mxu0 %v720
    %3001 = vmatpush1.msra.mxu0 %v719
    %3002 = vmatprep.subr.mxu0 %v723
    %3003 = vmatpush1.msra.mxu0 %v722
    %3004 = vmatprep.subr.mxu0 %v726
    %3005 = vmatpush1.msra.mxu0 %v725
    %3006 = vmatprep.subr.mxu0 %v729
    %3007 = vmatpush1.msra.mxu0 %v728
    %3008 = vmatprep.subr.mxu0 %v732
    %3009 = vmatpush1.msra.mxu0 %v731
    %3010 = vmatprep.subr.mxu0 %v735
    %3011 = vmatpush1.msra.mxu0 %v734
    %3012 = vmatprep.subr.mxu0 %v738
    %3013 = vmatpush1.msra.mxu0 %v737
    %3014 = vmatprep.subr.mxu0 %v741
    %3015 = vmatpush1.msra.mxu0 %v740
    %3016 = vmatprep.subr.mxu0 %v744
    %3017 = vmatpush1.msra.mxu0 %v743
    %3018 = vmatprep.subr.mxu0 %v747
    %3019 = vmatpush1.msra.mxu0 %v746
    %3020 = vmatprep.subr.mxu0 %v750
    %3021 = vmatpush1.msra.mxu0 %v749
    %3022 = vmatprep.subr.mxu0 %v753
    %3023 = vmatpush1.msra.mxu0 %v752
    %3024 = vmatprep.subr.mxu0 %v756
    %3025 = vmatpush1.msra.mxu0 %v755
    %3026 = vmatprep.subr.mxu0 %v759
    %3027 = vmatpush1.msra.mxu0 %v758
    %3028 = vmatprep.subr.mxu0 %v762
    %3029 = vmatpush1.msra.mxu0 %v761
    %3030 = vmatprep.subr.mxu0 0.0
    %3031 = vmatpush1.msra.mxu0 0.0
    %3032 = vmatprep.subr.mxu0 0.0
    %3033 = vmatpush1.msra.mxu0 0.0
    %3034 = vmatprep.subr.mxu0 0.0
    %3035 = vmatpush1.msra.mxu0 0.0
    %3036 = vmatprep.subr.mxu0 0.0
    %3037 = vmatpush1.msra.mxu0 0.0
    %3038 = vmatprep.subr.mxu0 0.0
    %3039 = vmatpush1.msra.mxu0 0.0
    %3040 = vmatprep.subr.mxu0 0.0
    %3041 = vmatpush1.msra.mxu0 0.0
    %3042 = vmatprep.subr.mxu0 0.0
    %3043 = vmatpush1.msra.mxu0 0.0
    %3044 = vmatprep.subr.mxu0 0.0
    %3045 = vmatpush1.msra.mxu0 0.0
    %3046 = vmatprep.subr.mxu0 0.0
    %3047 = vmatpush1.msra.mxu0 0.0
    %3048 = vmatprep.subr.mxu0 0.0
    %3049 = vmatpush1.msra.mxu0 0.0
    %3050 = vmatprep.subr.mxu0 0.0
    %3051 = vmatpush1.msra.mxu0 0.0
    %3052 = vmatprep.subr.mxu0 0.0
    %3053 = vmatpush1.msra.mxu0 0.0
    %3054 = vmatprep.subr.mxu0 0.0
    %3055 = vmatpush1.msra.mxu0 0.0
    %3056 = vmatprep.subr.mxu0 0.0
    %3057 = vmatpush1.msra.mxu0 0.0
    %3058 = vmatprep.subr.mxu0 0.0
    %3059 = vmatpush1.msra.mxu0 0.0
    %3060 = vmatprep.subr.mxu0 0.0
    %3061 = vmatpush1.msra.mxu0 0.0
    %3062 = vmatprep.mubr.f32.mxu0 0.0
    %3063 = vmatmul.mubr.f32.gmra.mrb[0].mxu0 %v2820
    %v3064 = vpop.f32.mrb[0].mxu0
    %v3065 = vadd.f32 0.0, %v3064
    %v3066 = vpop.f32.mrb[0].mxu0
    %v3067 = vadd.f32 0.0, %v3066
    %3068 = vdwg.mxu0
    %3069 = vmatprep.subr.mxu0 0.0
    %3070 = vmatpush1.msra.mxu0 %v718
    %3071 = vmatprep.subr.mxu0 0.0
    %3072 = vmatpush1.msra.mxu0 %v721
    %3073 = vmatprep.subr.mxu0 0.0
    %3074 = vmatpush1.msra.mxu0 %v724
    %3075 = vmatprep.subr.mxu0 0.0
    %3076 = vmatpush1.msra.mxu0 %v727
    %3077 = vmatprep.subr.mxu0 0.0
    %3078 = vmatpush1.msra.mxu0 %v730
    %3079 = vmatprep.subr.mxu0 0.0
    %3080 = vmatpush1.msra.mxu0 %v733
    %3081 = vmatprep.subr.mxu0 0.0
    %3082 = vmatpush1.msra.mxu0 %v736
    %3083 = vmatprep.subr.mxu0 0.0
    %3084 = vmatpush1.msra.mxu0 %v739
    %3085 = vmatprep.subr.mxu0 0.0
    %3086 = vmatpush1.msra.mxu0 %v742
    %3087 = vmatprep.subr.mxu0 0.0
    %3088 = vmatpush1.msra.mxu0 %v745
    %3089 = vmatprep.subr.mxu0 0.0
    %3090 = vmatpush1.msra.mxu0 %v748
    %3091 = vmatprep.subr.mxu0 0.0
    %3092 = vmatpush1.msra.mxu0 %v751
    %3093 = vmatprep.subr.mxu0 0.0
    %3094 = vmatpush1.msra.mxu0 %v754
    %3095 = vmatprep.subr.mxu0 0.0
    %3096 = vmatpush1.msra.mxu0 %v757
    %3097 = vmatprep.subr.mxu0 0.0
    %3098 = vmatpush1.msra.mxu0 %v760
    %3099 = vmatprep.subr.mxu0 0.0
    %3100 = vmatpush1.msra.mxu0 %v763
    %3101 = vmatprep.subr.mxu0 0.0
    %3102 = vmatpush1.msra.mxu0 0.0
    %3103 = vmatprep.subr.mxu0 0.0
    %3104 = vmatpush1.msra.mxu0 0.0
    %3105 = vmatprep.subr.mxu0 0.0
    %3106 = vmatpush1.msra.mxu0 0.0
    %3107 = vmatprep.subr.mxu0 0.0
    %3108 = vmatpush1.msra.mxu0 0.0
    %3109 = vmatprep.subr.mxu0 0.0
    %3110 = vmatpush1.msra.mxu0 0.0
    %3111 = vmatprep.subr.mxu0 0.0
    %3112 = vmatpush1.msra.mxu0 0.0
    %3113 = vmatprep.subr.mxu0 0.0
    %3114 = vmatpush1.msra.mxu0 0.0
    %3115 = vmatprep.subr.mxu0 0.0
    %3116 = vmatpush1.msra.mxu0 0.0
    %3117 = vmatprep.subr.mxu0 0.0
    %3118 = vmatpush1.msra.mxu0 0.0
    %3119 = vmatprep.subr.mxu0 0.0
    %3120 = vmatpush1.msra.mxu0 0.0
    %3121 = vmatprep.subr.mxu0 0.0
    %3122 = vmatpush1.msra.mxu0 0.0
    %3123 = vmatprep.subr.mxu0 0.0
    %3124 = vmatpush1.msra.mxu0 0.0
    %3125 = vmatprep.subr.mxu0 0.0
    %3126 = vmatpush1.msra.mxu0 0.0
    %3127 = vmatprep.subr.mxu0 0.0
    %3128 = vmatpush1.msra.mxu0 0.0
    %3129 = vmatprep.subr.mxu0 0.0
    %3130 = vmatpush1.msra.mxu0 0.0
    %3131 = vmatprep.subr.mxu0 0.0
    %3132 = vmatpush1.msra.mxu0 0.0
    %3133 = vmatprep.mubr.f32.mxu0 0.0
    %3134 = vmatmul.mubr.f32.gmra.mrb[0].mxu0 %v2820
    %v3135 = vpop.f32.mrb[0].mxu0
    %v3136 = vadd.f32 0.0, %v3135
    %v3137 = vpop.f32.mrb[0].mxu0
    %3138 = vdwg.mxu0
    %v3139 = vadd.f32 %v2995, %v3065
    %v3140 = vxor.u32 %v3139, 2147483648
    %v3141 = vmul.f32 %v3140, 1.442695
    %v3142 = vpow.pop %v3141
    %v3143 = vadd.f32 %v3142, 1.0
    %v3144 = vrcp.pop %v3143
    %v3145 = vmul.f32 1.0, %v3144
    %v3146 = vadd.f32 %v2996, %v3067
    %v3147 = vxor.u32 %v3146, 2147483648
    %v3148 = vmul.f32 %v3147, 1.442695
    %v3149 = vpow.pop %v3148
    %v3150 = vadd.f32 %v3149, 1.0
    %v3151 = vrcp.pop %v3150
    %v3152 = vmul.f32 1.0, %v3151
    %v3153 = vadd.f32 %v3136, %v1106
    %v3154 = vmul.f32 %v3145, %v3153
    %v3155 = vadd.f32 %v2997, %v3154
    %v3156 = vtanh.pop %v3155
    %v3157 = vsub.f32 1.0, %v3152
    %v3158 = vmul.f32 %v3157, %v3156
    %v3159 = vmul.f32 %v3152, %v2820
    %v3160 = vadd.f32 %v3158, %v3159
    %s3161 = scalar_lea.vmem [#allocation4], 48
    %3162 = vst [vmem:[%s3161] sm:$0xff] %v2992
    %s3163 = scalar_lea.vmem [#allocation5], 8
    %3164 = vst [vmem:[%s3163] sm:$0xff] %v3160
    %s3165 = smul.addr %s941, 8
    %s3166 = scalar_lea.vmem [#allocation2], %s3165
    %v3167 = vld [vmem:[%s3166] sm:$0xff]
    %v3168 = vld [vmem:[%s3166 + $0x8] sm:$0xff]
    %v3169 = vld [vmem:[%s3166 + $0x10] sm:$0xff]
    %3170 = vmatprep.subr.mxu0 %v669
    %3171 = vmatpush1.msra.mxu0 %v668
    %3172 = vmatprep.subr.mxu0 %v672
    %3173 = vmatpush1.msra.mxu0 %v671
    %3174 = vmatprep.subr.mxu0 %v675
    %3175 = vmatpush1.msra.mxu0 %v674
    %3176 = vmatprep.subr.mxu0 %v678
    %3177 = vmatpush1.msra.mxu0 %v677
    %3178 = vmatprep.subr.mxu0 %v681
    %3179 = vmatpush1.msra.mxu0 %v680
    %3180 = vmatprep.subr.mxu0 %v684
    %3181 = vmatpush1.msra.mxu0 %v683
    %3182 = vmatprep.subr.mxu0 %v687
    %3183 = vmatpush1.msra.mxu0 %v686
    %3184 = vmatprep.subr.mxu0 %v690
    %3185 = vmatpush1.msra.mxu0 %v689
    %3186 = vmatprep.subr.mxu0 %v693
    %3187 = vmatpush1.msra.mxu0 %v692
    %3188 = vmatprep.subr.mxu0 %v696
    %3189 = vmatpush1.msra.mxu0 %v695
    %3190 = vmatprep.subr.mxu0 %v699
    %3191 = vmatpush1.msra.mxu0 %v698
    %3192 = vmatprep.subr.mxu0 %v702
    %3193 = vmatpush1.msra.mxu0 %v701
    %3194 = vmatprep.subr.mxu0 %v705
    %3195 = vmatpush1.msra.mxu0 %v704
    %3196 = vmatprep.subr.mxu0 %v708
    %3197 = vmatpush1.msra.mxu0 %v707
    %3198 = vmatprep.subr.mxu0 %v711
    %3199 = vmatpush1.msra.mxu0 %v710
    %3200 = vmatprep.subr.mxu0 %v714
    %3201 = vmatpush1.msra.mxu0 %v713
    %3202 = vmatprep.subr.mxu0 0.0
    %3203 = vmatpush1.msra.mxu0 0.0
    %3204 = vmatprep.subr.mxu0 0.0
    %3205 = vmatpush1.msra.mxu0 0.0
    %3206 = vmatprep.subr.mxu0 0.0
    %3207 = vmatpush1.msra.mxu0 0.0
    %3208 = vmatprep.subr.mxu0 0.0
    %3209 = vmatpush1.msra.mxu0 0.0
    %3210 = vmatprep.subr.mxu0 0.0
    %3211 = vmatpush1.msra.mxu0 0.0
    %3212 = vmatprep.subr.mxu0 0.0
    %3213 = vmatpush1.msra.mxu0 0.0
    %3214 = vmatprep.subr.mxu0 0.0
    %3215 = vmatpush1.msra.mxu0 0.0
    %3216 = vmatprep.subr.mxu0 0.0
    %3217 = vmatpush1.msra.mxu0 0.0
    %3218 = vmatprep.subr.mxu0 0.0
    %3219 = vmatpush1.msra.mxu0 0.0
    %3220 = vmatprep.subr.mxu0 0.0
    %3221 = vmatpush1.msra.mxu0 0.0
    %3222 = vmatprep.subr.mxu0 0.0
    %3223 = vmatpush1.msra.mxu0 0.0
    %3224 = vmatprep.subr.mxu0 0.0
    %3225 = vmatpush1.msra.mxu0 0.0
    %3226 = vmatprep.subr.mxu0 0.0
    %3227 = vmatpush1.msra.mxu0 0.0
    %3228 = vmatprep.subr.mxu0 0.0
    %3229 = vmatpush1.msra.mxu0 0.0
    %3230 = vmatprep.subr.mxu0 0.0
    %3231 = vmatpush1.msra.mxu0 0.0
    %3232 = vmatprep.subr.mxu0 0.0
    %3233 = vmatpush1.msra.mxu0 0.0
    %3234 = vmatprep.mubr.f32.mxu0 0.0
    %3235 = vmatmul.mubr.f32.gmra.mrb[0].mxu0 %v2992
    %v3236 = vpop.f32.mrb[0].mxu0
    %v3237 = vadd.f32 0.0, %v3236
    %v3238 = vpop.f32.mrb[0].mxu0
    %v3239 = vadd.f32 0.0, %v3238
    %3240 = vdwg.mxu0
    %3241 = vmatprep.subr.mxu0 0.0
    %3242 = vmatpush1.msra.mxu0 %v670
    %3243 = vmatprep.subr.mxu0 0.0
    %3244 = vmatpush1.msra.mxu0 %v673
    %3245 = vmatprep.subr.mxu0 0.0
    %3246 = vmatpush1.msra.mxu0 %v676
    %3247 = vmatprep.subr.mxu0 0.0
    %3248 = vmatpush1.msra.mxu0 %v679
    %3249 = vmatprep.subr.mxu0 0.0
    %3250 = vmatpush1.msra.mxu0 %v682
    %3251 = vmatprep.subr.mxu0 0.0
    %3252 = vmatpush1.msra.mxu0 %v685
    %3253 = vmatprep.subr.mxu0 0.0
    %3254 = vmatpush1.msra.mxu0 %v688
    %3255 = vmatprep.subr.mxu0 0.0
    %3256 = vmatpush1.msra.mxu0 %v691
    %3257 = vmatprep.subr.mxu0 0.0
    %3258 = vmatpush1.msra.mxu0 %v694
    %3259 = vmatprep.subr.mxu0 0.0
    %3260 = vmatpush1.msra.mxu0 %v697
    %3261 = vmatprep.subr.mxu0 0.0
    %3262 = vmatpush1.msra.mxu0 %v700
    %3263 = vmatprep.subr.mxu0 0.0
    %3264 = vmatpush1.msra.mxu0 %v703
    %3265 = vmatprep.subr.mxu0 0.0
    %3266 = vmatpush1.msra.mxu0 %v706
    %3267 = vmatprep.subr.mxu0 0.0
    %3268 = vmatpush1.msra.mxu0 %v709
    %3269 = vmatprep.subr.mxu0 0.0
    %3270 = vmatpush1.msra.mxu0 %v712
    %3271 = vmatprep.subr.mxu0 0.0
    %3272 = vmatpush1.msra.mxu0 %v715
    %3273 = vmatprep.subr.mxu0 0.0
    %3274 = vmatpush1.msra.mxu0 0.0
    %3275 = vmatprep.subr.mxu0 0.0
    %3276 = vmatpush1.msra.mxu0 0.0
    %3277 = vmatprep.subr.mxu0 0.0
    %3278 = vmatpush1.msra.mxu0 0.0
    %3279 = vmatprep.subr.mxu0 0.0
    %3280 = vmatpush1.msra.mxu0 0.0
    %3281 = vmatprep.subr.mxu0 0.0
    %3282 = vmatpush1.msra.mxu0 0.0
    %3283 = vmatprep.subr.mxu0 0.0
    %3284 = vmatpush1.msra.mxu0 0.0
    %3285 = vmatprep.subr.mxu0 0.0
    %3286 = vmatpush1.msra.mxu0 0.0
    %3287 = vmatprep.subr.mxu0 0.0
    %3288 = vmatpush1.msra.mxu0 0.0
    %3289 = vmatprep.subr.mxu0 0.0
    %3290 = vmatpush1.msra.mxu0 0.0
    %3291 = vmatprep.subr.mxu0 0.0
    %3292 = vmatpush1.msra.mxu0 0.0
    %3293 = vmatprep.subr.mxu0 0.0
    %3294 = vmatpush1.msra.mxu0 0.0
    %3295 = vmatprep.subr.mxu0 0.0
    %3296 = vmatpush1.msra.mxu0 0.0
    %3297 = vmatprep.subr.mxu0 0.0
    %3298 = vmatpush1.msra.mxu0 0.0
    %3299 = vmatprep.subr.mxu0 0.0
    %3300 = vmatpush1.msra.mxu0 0.0
    %3301 = vmatprep.subr.mxu0 0.0
    %3302 = vmatpush1.msra.mxu0 0.0
    %3303 = vmatprep.subr.mxu0 0.0
    %3304 = vmatpush1.msra.mxu0 0.0
    %3305 = vmatprep.mubr.f32.mxu0 0.0
    %3306 = vmatmul.mubr.f32.gmra.mrb[0].mxu0 %v2992
    %v3307 = vpop.f32.mrb[0].mxu0
    %v3308 = vadd.f32 0.0, %v3307
    %v3309 = vpop.f32.mrb[0].mxu0
    %3310 = vdwg.mxu0
    %v3311 = vadd.f32 %v3167, %v3237
    %v3312 = vxor.u32 %v3311, 2147483648
    %v3313 = vmul.f32 %v3312, 1.442695
    %v3314 = vpow.pop %v3313
    %v3315 = vadd.f32 %v3314, 1.0
    %v3316 = vrcp.pop %v3315
    %v3317 = vmul.f32 1.0, %v3316
    %v3318 = vadd.f32 %v3168, %v3239
    %v3319 = vxor.u32 %v3318, 2147483648
    %v3320 = vmul.f32 %v3319, 1.442695
    %v3321 = vpow.pop %v3320
    %v3322 = vadd.f32 %v3321, 1.0
    %v3323 = vrcp.pop %v3322
    %v3324 = vmul.f32 1.0, %v3323
    %v3325 = vadd.f32 %v3308, %v931
    %v3326 = vmul.f32 %v3317, %v3325
    %v3327 = vadd.f32 %v3169, %v3326
    %v3328 = vtanh.pop %v3327
    %v3329 = vsub.f32 1.0, %v3324
    %v3330 = vmul.f32 %v3329, %v3328
    %v3331 = vmul.f32 %v3324, %v2992
    %v3332 = vadd.f32 %v3330, %v3331
    %s3333 = smul.addr %s766, 8
    %s3334 = scalar_lea.vmem [#allocation3], %s3333
    %v3335 = vld [vmem:[%s3334] sm:$0xff]
    %v3336 = vld [vmem:[%s3334 + $0x8] sm:$0xff]
    %v3337 = vld [vmem:[%s3334 + $0x10] sm:$0xff]
    %3338 = vmatprep.subr.mxu0 %v717
    %3339 = vmatpush1.msra.mxu0 %v716
    %3340 = vmatprep.subr.mxu0 %v720
    %3341 = vmatpush1.msra.mxu0 %v719
    %3342 = vmatprep.subr.mxu0 %v723
    %3343 = vmatpush1.msra.mxu0 %v722
    %3344 = vmatprep.subr.mxu0 %v726
    %3345 = vmatpush1.msra.mxu0 %v725
    %3346 = vmatprep.subr.mxu0 %v729
    %3347 = vmatpush1.msra.mxu0 %v728
    %3348 = vmatprep.subr.mxu0 %v732
    %3349 = vmatpush1.msra.mxu0 %v731
    %3350 = vmatprep.subr.mxu0 %v735
    %3351 = vmatpush1.msra.mxu0 %v734
    %3352 = vmatprep.subr.mxu0 %v738
    %3353 = vmatpush1.msra.mxu0 %v737
    %3354 = vmatprep.subr.mxu0 %v741
    %3355 = vmatpush1.msra.mxu0 %v740
    %3356 = vmatprep.subr.mxu0 %v744
    %3357 = vmatpush1.msra.mxu0 %v743
    %3358 = vmatprep.subr.mxu0 %v747
    %3359 = vmatpush1.msra.mxu0 %v746
    %3360 = vmatprep.subr.mxu0 %v750
    %3361 = vmatpush1.msra.mxu0 %v749
    %3362 = vmatprep.subr.mxu0 %v753
    %3363 = vmatpush1.msra.mxu0 %v752
    %3364 = vmatprep.subr.mxu0 %v756
    %3365 = vmatpush1.msra.mxu0 %v755
    %3366 = vmatprep.subr.mxu0 %v759
    %3367 = vmatpush1.msra.mxu0 %v758
    %3368 = vmatprep.subr.mxu0 %v762
    %3369 = vmatpush1.msra.mxu0 %v761
    %3370 = vmatprep.subr.mxu0 0.0
    %3371 = vmatpush1.msra.mxu0 0.0
    %3372 = vmatprep.subr.mxu0 0.0
    %3373 = vmatpush1.msra.mxu0 0.0
    %3374 = vmatprep.subr.mxu0 0.0
    %3375 = vmatpush1.msra.mxu0 0.0
    %3376 = vmatprep.subr.mxu0 0.0
    %3377 = vmatpush1.msra.mxu0 0.0
    %3378 = vmatprep.subr.mxu0 0.0
    %3379 = vmatpush1.msra.mxu0 0.0
    %3380 = vmatprep.subr.mxu0 0.0
    %3381 = vmatpush1.msra.mxu0 0.0
    %3382 = vmatprep.subr.mxu0 0.0
    %3383 = vmatpush1.msra.mxu0 0.0
    %3384 = vmatprep.subr.mxu0 0.0
    %3385 = vmatpush1.msra.mxu0 0.0
    %3386 = vmatprep.subr.mxu0 0.0
    %3387 = vmatpush1.msra.mxu0 0.0
    %3388 = vmatprep.subr.mxu0 0.0
    %3389 = vmatpush1.msra.mxu0 0.0
    %3390 = vmatprep.subr.mxu0 0.0
    %3391 = vmatpush1.msra.mxu0 0.0
    %3392 = vmatprep.subr.mxu0 0.0
    %3393 = vmatpush1.msra.mxu0 0.0
    %3394 = vmatprep.subr.mxu0 0.0
    %3395 = vmatpush1.msra.mxu0 0.0
    %3396 = vmatprep.subr.mxu0 0.0
    %3397 = vmatpush1.msra.mxu0 0.0
    %3398 = vmatprep.subr.mxu0 0.0
    %3399 = vmatpush1.msra.mxu0 0.0
    %3400 = vmatprep.subr.mxu0 0.0
    %3401 = vmatpush1.msra.mxu0 0.0
    %3402 = vmatprep.mubr.f32.mxu0 0.0
    %3403 = vmatmul.mubr.f32.gmra.mrb[0].mxu0 %v3160
    %v3404 = vpop.f32.mrb[0].mxu0
    %v3405 = vadd.f32 0.0, %v3404
    %v3406 = vpop.f32.mrb[0].mxu0
    %v3407 = vadd.f32 0.0, %v3406
    %3408 = vdwg.mxu0
    %3409 = vmatprep.subr.mxu0 0.0
    %3410 = vmatpush1.msra.mxu0 %v718
    %3411 = vmatprep.subr.mxu0 0.0
    %3412 = vmatpush1.msra.mxu0 %v721
    %3413 = vmatprep.subr.mxu0 0.0
    %3414 = vmatpush1.msra.mxu0 %v724
    %3415 = vmatprep.subr.mxu0 0.0
    %3416 = vmatpush1.msra.mxu0 %v727
    %3417 = vmatprep.subr.mxu0 0.0
    %3418 = vmatpush1.msra.mxu0 %v730
    %3419 = vmatprep.subr.mxu0 0.0
    %3420 = vmatpush1.msra.mxu0 %v733
    %3421 = vmatprep.subr.mxu0 0.0
    %3422 = vmatpush1.msra.mxu0 %v736
    %3423 = vmatprep.subr.mxu0 0.0
    %3424 = vmatpush1.msra.mxu0 %v739
    %3425 = vmatprep.subr.mxu0 0.0
    %3426 = vmatpush1.msra.mxu0 %v742
    %3427 = vmatprep.subr.mxu0 0.0
    %3428 = vmatpush1.msra.mxu0 %v745
    %3429 = vmatprep.subr.mxu0 0.0
    %3430 = vmatpush1.msra.mxu0 %v748
    %3431 = vmatprep.subr.mxu0 0.0
    %3432 = vmatpush1.msra.mxu0 %v751
    %3433 = vmatprep.subr.mxu0 0.0
    %3434 = vmatpush1.msra.mxu0 %v754
    %3435 = vmatprep.subr.mxu0 0.0
    %3436 = vmatpush1.msra.mxu0 %v757
    %3437 = vmatprep.subr.mxu0 0.0
    %3438 = vmatpush1.msra.mxu0 %v760
    %3439 = vmatprep.subr.mxu0 0.0
    %3440 = vmatpush1.msra.mxu0 %v763
    %3441 = vmatprep.subr.mxu0 0.0
    %3442 = vmatpush1.msra.mxu0 0.0
    %3443 = vmatprep.subr.mxu0 0.0
    %3444 = vmatpush1.msra.mxu0 0.0
    %3445 = vmatprep.subr.mxu0 0.0
    %3446 = vmatpush1.msra.mxu0 0.0
    %3447 = vmatprep.subr.mxu0 0.0
    %3448 = vmatpush1.msra.mxu0 0.0
    %3449 = vmatprep.subr.mxu0 0.0
    %3450 = vmatpush1.msra.mxu0 0.0
    %3451 = vmatprep.subr.mxu0 0.0
    %3452 = vmatpush1.msra.mxu0 0.0
    %3453 = vmatprep.subr.mxu0 0.0
    %3454 = vmatpush1.msra.mxu0 0.0
    %3455 = vmatprep.subr.mxu0 0.0
    %3456 = vmatpush1.msra.mxu0 0.0
    %3457 = vmatprep.subr.mxu0 0.0
    %3458 = vmatpush1.msra.mxu0 0.0
    %3459 = vmatprep.subr.mxu0 0.0
    %3460 = vmatpush1.msra.mxu0 0.0
    %3461 = vmatprep.subr.mxu0 0.0
    %3462 = vmatpush1.msra.mxu0 0.0
    %3463 = vmatprep.subr.mxu0 0.0
    %3464 = vmatpush1.msra.mxu0 0.0
    %3465 = vmatprep.subr.mxu0 0.0
    %3466 = vmatpush1.msra.mxu0 0.0
    %3467 = vmatprep.subr.mxu0 0.0
    %3468 = vmatpush1.msra.mxu0 0.0
    %3469 = vmatprep.subr.mxu0 0.0
    %3470 = vmatpush1.msra.mxu0 0.0
    %3471 = vmatprep.subr.mxu0 0.0
    %3472 = vmatpush1.msra.mxu0 0.0
    %3473 = vmatprep.mubr.f32.mxu0 0.0
    %3474 = vmatmul.mubr.f32.gmra.mrb[0].mxu0 %v3160
    %v3475 = vpop.f32.mrb[0].mxu0
    %v3476 = vadd.f32 0.0, %v3475
    %v3477 = vpop.f32.mrb[0].mxu0
    %3478 = vdwg.mxu0
    %v3479 = vadd.f32 %v3335, %v3405
    %v3480 = vxor.u32 %v3479, 2147483648
    %v3481 = vmul.f32 %v3480, 1.442695
    %v3482 = vpow.pop %v3481
    %v3483 = vadd.f32 %v3482, 1.0
    %v3484 = vrcp.pop %v3483
    %v3485 = vmul.f32 1.0, %v3484
    %v3486 = vadd.f32 %v3336, %v3407
    %v3487 = vxor.u32 %v3486, 2147483648
    %v3488 = vmul.f32 %v3487, 1.442695
    %v3489 = vpow.pop %v3488
    %v3490 = vadd.f32 %v3489, 1.0
    %v3491 = vrcp.pop %v3490
    %v3492 = vmul.f32 1.0, %v3491
    %v3493 = vadd.f32 %v3476, %v1106
    %v3494 = vmul.f32 %v3485, %v3493
    %v3495 = vadd.f32 %v3337, %v3494
    %v3496 = vtanh.pop %v3495
    %v3497 = vsub.f32 1.0, %v3492
    %v3498 = vmul.f32 %v3497, %v3496
    %v3499 = vmul.f32 %v3492, %v3160
    %v3500 = vadd.f32 %v3498, %v3499
    %s3501 = scalar_lea.vmem [#allocation4], 56
    %3502 = vst [vmem:[%s3501] sm:$0xff] %v3332
    %3503 = vst [vmem:[#allocation5] sm:$0xff] %v3500
    %v3504 = vld [vmem:[#allocation4] sm:$0xff]
    %v3505 = vld [vmem:[#allocation4 + $0x8] sm:$0xff]
    %v3506 = vld [vmem:[#allocation4 + $0x10] sm:$0xff]
    %v3507 = vld [vmem:[#allocation4 + $0x18] sm:$0xff]
    %v3508 = vld [vmem:[#allocation4 + $0x20] sm:$0xff]
    %v3509 = vld [vmem:[#allocation4 + $0x28] sm:$0xff]
    %v3510 = vld [vmem:[#allocation4 + $0x30] sm:$0xff]
    %v3511 = vld [vmem:[#allocation4 + $0x38] sm:$0xff]
    %v3512 = vld [vmem:[%s9] sm:$0xff]
    %v3513 = vld [vmem:[%s9 + $0x8] sm:$0xff]
    %v3514 = vld [vmem:[%s9 + $0x10] sm:$0xff]
    %v3515 = vld [vmem:[%s9 + $0x18] sm:$0xff]
    %v3516 = vld [vmem:[%s9 + $0x20] sm:$0xff]
    %v3517 = vld [vmem:[%s9 + $0x28] sm:$0xff]
    %v3518 = vld [vmem:[%s9 + $0x30] sm:$0xff]
    %v3519 = vld [vmem:[%s9 + $0x38] sm:$0xff]
    %v3520 = vld [vmem:[%s9 + $0x40] sm:$0xff]
    %v3521 = vld [vmem:[%s9 + $0x48] sm:$0xff]
    %v3522 = vld [vmem:[%s9 + $0x50] sm:$0xff]
    %v3523 = vld [vmem:[%s9 + $0x58] sm:$0xff]
    %v3524 = vld [vmem:[%s9 + $0x60] sm:$0xff]
    %v3525 = vld [vmem:[%s9 + $0x68] sm:$0xff]
    %v3526 = vld [vmem:[%s9 + $0x70] sm:$0xff]
    %v3527 = vld [vmem:[%s9 + $0x78] sm:$0xff]
    %v3528 = vld [vmem:[#allocation5] sm:$0xff]
    %v3529 = vld [vmem:[#allocation5 + $0x8] sm:$0xff]
    %v3530 = vld [vmem:[#allocation5 + $0x10] sm:$0xff]
    %v3531 = vld [vmem:[#allocation5 + $0x18] sm:$0xff]
    %v3532 = vld [vmem:[#allocation5 + $0x20] sm:$0xff]
    %v3533 = vld [vmem:[#allocation5 + $0x28] sm:$0xff]
    %v3534 = vld [vmem:[#allocation5 + $0x30] sm:$0xff]
    %v3535 = vld [vmem:[#allocation5 + $0x38] sm:$0xff]
    %v3536 = vld [vmem:[%s10] sm:$0xff]
    %v3537 = vld [vmem:[%s10 + $0x8] sm:$0xff]
    %v3538 = vld [vmem:[%s10 + $0x10] sm:$0xff]
    %v3539 = vld [vmem:[%s10 + $0x18] sm:$0xff]
    %v3540 = vld [vmem:[%s10 + $0x20] sm:$0xff]
    %v3541 = vld [vmem:[%s10 + $0x28] sm:$0xff]
    %v3542 = vld [vmem:[%s10 + $0x30] sm:$0xff]
    %v3543 = vld [vmem:[%s10 + $0x38] sm:$0xff]
    %v3544 = vld [vmem:[%s10 + $0x40] sm:$0xff]
    %v3545 = vld [vmem:[%s10 + $0x48] sm:$0xff]
    %v3546 = vld [vmem:[%s10 + $0x50] sm:$0xff]
    %v3547 = vld [vmem:[%s10 + $0x58] sm:$0xff]
    %v3548 = vld [vmem:[%s10 + $0x60] sm:$0xff]
    %v3549 = vld [vmem:[%s10 + $0x68] sm:$0xff]
    %v3550 = vld [vmem:[%s10 + $0x70] sm:$0xff]
    %v3551 = vld [vmem:[%s10 + $0x78] sm:$0xff]
    %3552 = vmatprep.subr.mxu0 0.0
    %3553 = vmatpush1.msra.mxu0 %v3536
    %3554 = vmatprep.subr.mxu0 0.0
    %3555 = vmatpush1.msra.mxu0 %v3537
    %3556 = vmatprep.subr.mxu0 0.0
    %3557 = vmatpush1.msra.mxu0 %v3538
    %3558 = vmatprep.subr.mxu0 0.0
    %3559 = vmatpush1.msra.mxu0 %v3539
    %3560 = vmatprep.subr.mxu0 0.0
    %3561 = vmatpush1.msra.mxu0 %v3540
    %3562 = vmatprep.subr.mxu0 0.0
    %3563 = vmatpush1.msra.mxu0 %v3541
    %3564 = vmatprep.subr.mxu0 0.0
    %3565 = vmatpush1.msra.mxu0 %v3542
    %3566 = vmatprep.subr.mxu0 0.0
    %3567 = vmatpush1.msra.mxu0 %v3543
    %3568 = vmatprep.subr.mxu0 0.0
    %3569 = vmatpush1.msra.mxu0 %v3544
    %3570 = vmatprep.subr.mxu0 0.0
    %3571 = vmatpush1.msra.mxu0 %v3545
    %3572 = vmatprep.subr.mxu0 0.0
    %3573 = vmatpush1.msra.mxu0 %v3546
    %3574 = vmatprep.subr.mxu0 0.0
    %3575 = vmatpush1.msra.mxu0 %v3547
    %3576 = vmatprep.subr.mxu0 0.0
    %3577 = vmatpush1.msra.mxu0 %v3548
    %3578 = vmatprep.subr.mxu0 0.0
    %3579 = vmatpush1.msra.mxu0 %v3549
    %3580 = vmatprep.subr.mxu0 0.0
    %3581 = vmatpush1.msra.mxu0 %v3550
    %3582 = vmatprep.subr.mxu0 0.0
    %3583 = vmatpush1.msra.mxu0 %v3551
    %3584 = vmatprep.subr.mxu0 0.0
    %3585 = vmatpush1.msra.mxu0 0.0
    %3586 = vmatprep.subr.mxu0 0.0
    %3587 = vmatpush1.msra.mxu0 0.0
    %3588 = vmatprep.subr.mxu0 0.0
    %3589 = vmatpush1.msra.mxu0 0.0
    %3590 = vmatprep.subr.mxu0 0.0
    %3591 = vmatpush1.msra.mxu0 0.0
    %3592 = vmatprep.subr.mxu0 0.0
    %3593 = vmatpush1.msra.mxu0 0.0
    %3594 = vmatprep.subr.mxu0 0.0
    %3595 = vmatpush1.msra.mxu0 0.0
    %3596 = vmatprep.subr.mxu0 0.0
    %3597 = vmatpush1.msra.mxu0 0.0
    %3598 = vmatprep.subr.mxu0 0.0
    %3599 = vmatpush1.msra.mxu0 0.0
    %3600 = vmatprep.subr.mxu0 0.0
    %3601 = vmatpush1.msra.mxu0 0.0
    %3602 = vmatprep.subr.mxu0 0.0
    %3603 = vmatpush1.msra.mxu0 0.0
    %3604 = vmatprep.subr.mxu0 0.0
    %3605 = vmatpush1.msra.mxu0 0.0
    %3606 = vmatprep.subr.mxu0 0.0
    %3607 = vmatpush1.msra.mxu0 0.0
    %3608 = vmatprep.subr.mxu0 0.0
    %3609 = vmatpush1.msra.mxu0 0.0
    %3610 = vmatprep.subr.mxu0 0.0
    %3611 = vmatpush1.msra.mxu0 0.0
    %3612 = vmatprep.subr.mxu0 0.0
    %3613 = vmatpush1.msra.mxu0 0.0
    %3614 = vmatprep.subr.mxu0 0.0
    %3615 = vmatpush1.msra.mxu0 0.0
    %3616 = vmatprep.mubr.f32.mxu0 0.0
    %3617 = vmatmul.mubr.f32.gmra.mrb[0].mxu0 %v3528
    %v3618 = vpop.f32.mrb[0].mxu0
    %v3619 = vadd.f32 0.0, %v3618
    %v3620 = vpop.f32.mrb[0].mxu0
    %3621 = vmatprep.mubr.f32.mxu0 0.0
    %3622 = vmatmul.mubr.f32.gmra.mrb[0].mxu0 %v3529
    %v3623 = vpop.f32.mrb[0].mxu0
    %v3624 = vadd.f32 0.0, %v3623
    %v3625 = vpop.f32.mrb[0].mxu0
    %3626 = vmatprep.mubr.f32.mxu0 0.0
    %3627 = vmatmul.mubr.f32.gmra.mrb[0].mxu0 %v3530
    %v3628 = vpop.f32.mrb[0].mxu0
    %v3629 = vadd.f32 0.0, %v3628
    %v3630 = vpop.f32.mrb[0].mxu0
    %3631 = vmatprep.mubr.f32.mxu0 0.0
    %3632 = vmatmul.mubr.f32.gmra.mrb[0].mxu0 %v3531
    %v3633 = vpop.f32.mrb[0].mxu0
    %v3634 = vadd.f32 0.0, %v3633
    %v3635 = vpop.f32.mrb[0].mxu0
    %3636 = vmatprep.mubr.f32.mxu0 0.0
    %3637 = vmatmul.mubr.f32.gmra.mrb[0].mxu0 %v3532
    %v3638 = vpop.f32.mrb[0].mxu0
    %v3639 = vadd.f32 0.0, %v3638
    %v3640 = vpop.f32.mrb[0].mxu0
    %3641 = vmatprep.mubr.f32.mxu0 0.0
    %3642 = vmatmul.mubr.f32.gmra.mrb[0].mxu0 %v3533
    %v3643 = vpop.f32.mrb[0].mxu0
    %v3644 = vadd.f32 0.0, %v3643
    %v3645 = vpop.f32.mrb[0].mxu0
    %3646 = vmatprep.mubr.f32.mxu0 0.0
    %3647 = vmatmul.mubr.f32.gmra.mrb[0].mxu0 %v3534
    %v3648 = vpop.f32.mrb[0].mxu0
    %v3649 = vadd.f32 0.0, %v3648
    %v3650 = vpop.f32.mrb[0].mxu0
    %3651 = vmatprep.mubr.f32.mxu0 0.0
    %3652 = vmatmul.mubr.f32.gmra.mrb[0].mxu0 %v3535
    %v3653 = vpop.f32.mrb[0].mxu0
    %v3654 = vadd.f32 0.0, %v3653
    %v3655 = vpop.f32.mrb[0].mxu0
    %3656 = vdwg.mxu0
    %3657 = vmatprep.subr.mxu0 0.0
    %3658 = vmatpush1.msra.mxu0 %v3512
    %3659 = vmatprep.subr.mxu0 0.0
    %3660 = vmatpush1.msra.mxu0 %v3513
    %3661 = vmatprep.subr.mxu0 0.0
    %3662 = vmatpush1.msra.mxu0 %v3514
    %3663 = vmatprep.subr.mxu0 0.0
    %3664 = vmatpush1.msra.mxu0 %v3515
    %3665 = vmatprep.subr.mxu0 0.0
    %3666 = vmatpush1.msra.mxu0 %v3516
    %3667 = vmatprep.subr.mxu0 0.0
    %3668 = vmatpush1.msra.mxu0 %v3517
    %3669 = vmatprep.subr.mxu0 0.0
    %3670 = vmatpush1.msra.mxu0 %v3518
    %3671 = vmatprep.subr.mxu0 0.0
    %3672 = vmatpush1.msra.mxu0 %v3519
    %3673 = vmatprep.subr.mxu0 0.0
    %3674 = vmatpush1.msra.mxu0 %v3520
    %3675 = vmatprep.subr.mxu0 0.0
    %3676 = vmatpush1.msra.mxu0 %v3521
    %3677 = vmatprep.subr.mxu0 0.0
    %3678 = vmatpush1.msra.mxu0 %v3522
    %3679 = vmatprep.subr.mxu0 0.0
    %3680 = vmatpush1.msra.mxu0 %v3523
    %3681 = vmatprep.subr.mxu0 0.0
    %3682 = vmatpush1.msra.mxu0 %v3524
    %3683 = vmatprep.subr.mxu0 0.0
    %3684 = vmatpush1.msra.mxu0 %v3525
    %3685 = vmatprep.subr.mxu0 0.0
    %3686 = vmatpush1.msra.mxu0 %v3526
    %3687 = vmatprep.subr.mxu0 0.0
    %3688 = vmatpush1.msra.mxu0 %v3527
    %3689 = vmatprep.subr.mxu0 0.0
    %3690 = vmatpush1.msra.mxu0 0.0
    %3691 = vmatprep.subr.mxu0 0.0
    %3692 = vmatpush1.msra.mxu0 0.0
    %3693 = vmatprep.subr.mxu0 0.0
    %3694 = vmatpush1.msra.mxu0 0.0
    %3695 = vmatprep.subr.mxu0 0.0
    %3696 = vmatpush1.msra.mxu0 0.0
    %3697 = vmatprep.subr.mxu0 0.0
    %3698 = vmatpush1.msra.mxu0 0.0
    %3699 = vmatprep.subr.mxu0 0.0
    %3700 = vmatpush1.msra.mxu0 0.0
    %3701 = vmatprep.subr.mxu0 0.0
    %3702 = vmatpush1.msra.mxu0 0.0
    %3703 = vmatprep.subr.mxu0 0.0
    %3704 = vmatpush1.msra.mxu0 0.0
    %3705 = vmatprep.subr.mxu0 0.0
    %3706 = vmatpush1.msra.mxu0 0.0
    %3707 = vmatprep.subr.mxu0 0.0
    %3708 = vmatpush1.msra.mxu0 0.0
    %3709 = vmatprep.subr.mxu0 0.0
    %3710 = vmatpush1.msra.mxu0 0.0
    %3711 = vmatprep.subr.mxu0 0.0
    %3712 = vmatpush1.msra.mxu0 0.0
    %3713 = vmatprep.subr.mxu0 0.0
    %3714 = vmatpush1.msra.mxu0 0.0
    %3715 = vmatprep.subr.mxu0 0.0
    %3716 = vmatpush1.msra.mxu0 0.0
    %3717 = vmatprep.subr.mxu0 0.0
    %3718 = vmatpush1.msra.mxu0 0.0
    %3719 = vmatprep.subr.mxu0 0.0
    %3720 = vmatpush1.msra.mxu0 0.0
    %3721 = vmatprep.mubr.f32.mxu0 0.0
    %3722 = vmatmul.mubr.f32.gmra.mrb[0].mxu0 %v3504
    %v3723 = vpop.f32.mrb[0].mxu0
    %v3724 = vadd.f32 %v3619, %v3723
    %v3725 = vpop.f32.mrb[0].mxu0
    %3726 = vmatprep.mubr.f32.mxu0 0.0
    %3727 = vmatmul.mubr.f32.gmra.mrb[0].mxu0 %v3505
    %v3728 = vpop.f32.mrb[0].mxu0
    %v3729 = vadd.f32 %v3624, %v3728
    %v3730 = vpop.f32.mrb[0].mxu0
    %3731 = vmatprep.mubr.f32.mxu0 0.0
    %3732 = vmatmul.mubr.f32.gmra.mrb[0].mxu0 %v3506
    %v3733 = vpop.f32.mrb[0].mxu0
    %v3734 = vadd.f32 %v3629, %v3733
    %v3735 = vpop.f32.mrb[0].mxu0
    %3736 = vmatprep.mubr.f32.mxu0 0.0
    %3737 = vmatmul.mubr.f32.gmra.mrb[0].mxu0 %v3507
    %v3738 = vpop.f32.mrb[0].mxu0
    %v3739 = vadd.f32 %v3634, %v3738
    %v3740 = vpop.f32.mrb[0].mxu0
    %3741 = vmatprep.mubr.f32.mxu0 0.0
    %3742 = vmatmul.mubr.f32.gmra.mrb[0].mxu0 %v3508
    %v3743 = vpop.f32.mrb[0].mxu0
    %v3744 = vadd.f32 %v3639, %v3743
    %v3745 = vpop.f32.mrb[0].mxu0
    %3746 = vmatprep.mubr.f32.mxu0 0.0
    %3747 = vmatmul.mubr.f32.gmra.mrb[0].mxu0 %v3509
    %v3748 = vpop.f32.mrb[0].mxu0
    %v3749 = vadd.f32 %v3644, %v3748
    %v3750 = vpop.f32.mrb[0].mxu0
    %3751 = vmatprep.mubr.f32.mxu0 0.0
    %3752 = vmatmul.mubr.f32.gmra.mrb[0].mxu0 %v3510
    %v3753 = vpop.f32.mrb[0].mxu0
    %v3754 = vadd.f32 %v3649, %v3753
    %v3755 = vpop.f32.mrb[0].mxu0
    %3756 = vmatprep.mubr.f32.mxu0 0.0
    %3757 = vmatmul.mubr.f32.gmra.mrb[0].mxu0 %v3511
    %v3758 = vpop.f32.mrb[0].mxu0
    %v3759 = vadd.f32 %v3654, %v3758
    %v3760 = vpop.f32.mrb[0].mxu0
    %3761 = vdwg.mxu0
    %v3762 = vld [vmem:[%s11] sm:$0x1]
    %v3764 = vlaneseq
    %v3765 = vshrl.u32 %v3764, 7
    %v3766 = vsub.s32 0, %v3765
    %v3767 = vrot.slane %v3762, %v3766
    %v3769 = vadd.f32 %v3724, %v3767
    %v3770 = vadd.f32 %v3729, %v3767
    %v3771 = vadd.f32 %v3734, %v3767
    %v3772 = vadd.f32 %v3739, %v3767
    %v3773 = vadd.f32 %v3744, %v3767
    %v3774 = vadd.f32 %v3749, %v3767
    %v3775 = vadd.f32 %v3754, %v3767
    %v3776 = vadd.f32 %v3759, %v3767
    %3777 = vst.msk [vmem:[%s12] sm:$0xff] %vm136, %v3769
    %3778 = vst.msk [vmem:[%s12 + $0x8] sm:$0xff] %vm136, %v3770
    %3779 = vst.msk [vmem:[%s12 + $0x10] sm:$0xff] %vm136, %v3771
    %3780 = vst.msk [vmem:[%s12 + $0x18] sm:$0xff] %vm136, %v3772
    %3781 = vst.msk [vmem:[%s12 + $0x20] sm:$0xff] %vm136, %v3773
    %3782 = vst.msk [vmem:[%s12 + $0x28] sm:$0xff] %vm136, %v3774
    %3783 = vst.msk [vmem:[%s12 + $0x30] sm:$0xff] %vm136, %v3775
    %3784 = vst.msk [vmem:[%s12 + $0x38] sm:$0xff] %vm136, %v3776
    // Predicated region
    $region70: #{tpu_custom_call.1} parent=1 // pred_check
      _
    $region71: #{tpu_custom_call.1} parent=1 // pred_check_branch
      %3786 = sbr.rel (0) target = $region73
    $region72: #{tpu_custom_call.1} parent=1 // pred_region
      _
    $region73: #{tpu_custom_call.1} parent=1 // pred_fallthru
      _
    // Predicated region
    $region74: #{tpu_custom_call.1} parent=1 // pred_check
      _
    $region75: #{tpu_custom_call.1} parent=1 // pred_check_branch
      %3788 = sbr.rel (0) target = $region77
    $region76: #{tpu_custom_call.1} parent=1 // pred_region
      _
    $region77: #{tpu_custom_call.1} parent=1 // pred_fallthru
      _
    %3789 = vsyncpa [#allocation7], 1
    %3790 = vsyncpa [#allocation9], 1
    %3791 = vsyncpa [#allocation12], 1

</llo_original>
